<compile_context>
chip_gen: v5e
topology: v5e:2x2
jax: 0.10.0
libtpu: 0.0.40
codegen_flags: <defaults>
</compile_context>

<pallas_src>
import numpy as np
import jax
import jax.numpy as jnp
from jax import lax
from jax.experimental import pallas as pl
from jax.experimental.pallas import tpu as pltpu

EPS = 1e-5  # nn.BatchNorm3d default eps


def _round_up(n, m):
    return ((n + m - 1) // m) * m


def _tap_masks(D, H, W):
    # (27, P) f32 validity masks for the 27 conv taps (precomputed constant).
    P = D * H * W
    p = np.arange(P)
    d = p // (H * W)
    h = (p // W) % H
    w = p % W
    rows = []
    for kd in range(3):
        for kh in range(3):
            for kw in range(3):
                dd, dh, dw = kd - 1, kh - 1, kw - 1
                ok = ((d + dd >= 0) & (d + dd < D) &
                      (h + dh >= 0) & (h + dh < H) &
                      (w + dw >= 0) & (w + dw < W))
                rows.append(ok.astype(np.float32))
    return np.stack(rows, axis=0)


def _bn(y, gamma, beta):
    # Training-mode BatchNorm over the lane axis (= batch*spatial) per channel
    # row.  Two-pass (centered) variance for stability; the normalize is a
    # single fused multiply-add over the big tensor.
    cnt = float(y.shape[1])
    mean = jnp.sum(y, axis=1, keepdims=True) * (1.0 / cnt)
    d = y - mean
    var = jnp.sum(d * d, axis=1, keepdims=True) * (1.0 / cnt)
    return d * (lax.rsqrt(var + EPS) * gamma) + beta


def _im2col(xp, masks, D, H, W):
    # xp: (Cp, L) f32 channel-padded activations (L = N*P); masks: (27, L) f32.
    # Returns the (27*Cp, L) im2col matrix, tap-major rows.  Spatial shifts are
    # flat-index lane rolls; out-of-range (and cross-sample / wrap-around)
    # positions are zeroed by the masks, so the batched roll is exact.
    L = xp.shape[1]
    pieces = []
    t = 0
    for dd in (-1, 0, 1):
        for dh in (-1, 0, 1):
            for dw in (-1, 0, 1):
                off = dd * H * W + dh * W + dw
                if off == 0:
                    pieces.append(xp)                       # centre tap: always valid
                else:
                    rolled = pltpu.roll(xp, (-off) % L, axis=1)
                    pieces.append(rolled * masks[t:t + 1, :])
                t += 1
    return jnp.concatenate(pieces, axis=0)                  # (27*Cp, L)


def _make_block_kernel(D, H, W, Cout, has_ds):
    def kernel(x_ref, m_ref, w1_ref, g1_ref, b1_ref, w2_ref, g2_ref, b2_ref,
               fc1_ref, fc2_ref, pool_ref, sel_ref, out_ref):
        x32 = x_ref[...]          # (C1p, L) f32
        masks = m_ref[...]        # (27, L) f32

        # --- conv1 (+ fused 1x1x1 downsample rows) -> fused BN ----------------
        a1 = _im2col(x32, masks, D, H, W).astype(jnp.bfloat16)       # (27*C1p, L)
        y1 = jnp.dot(w1_ref[...], a1, preferred_element_type=jnp.float32)
        y1 = _bn(y1, g1_ref[...], b1_ref[...])                       # (M1, L)
        if has_ds:
            out1 = jnp.maximum(y1[:Cout], 0.0)                       # conv1+bn1+relu
            res = y1[Cout:]                                          # downsample+bn
        else:
            out1 = jnp.maximum(y1, 0.0)
            res = x32[:Cout]                                         # identity residual

        # --- conv2 -> bn2 ------------------------------------------------------
        C2p = w2_ref.shape[1] // 27
        if C2p != Cout:           # pad channels to the aligned K-block size
            out1 = jnp.concatenate(
                [out1, jnp.zeros((C2p - Cout, out1.shape[1]), out1.dtype)], axis=0)
        a2 = _im2col(out1, masks, D, H, W).astype(jnp.bfloat16)      # (27*C2p, L)
        y2 = jnp.dot(w2_ref[...], a2, preferred_element_type=jnp.float32)
        y2 = _bn(y2, g2_ref[...], b2_ref[...])                       # (Cout, L)

        # --- SE: pool -> FC -> ReLU -> FC -> sigmoid (selector matmuls) --------
        yc = jnp.dot(y2, pool_ref[...], preferred_element_type=jnp.float32)   # (Cout, N)
        hid = jnp.maximum(
            jnp.dot(fc1_ref[...], yc, preferred_element_type=jnp.float32), 0.0)
        z = jnp.dot(fc2_ref[...], hid, preferred_element_type=jnp.float32)    # (Cout, N)
        gate = 1.0 / (1.0 + jnp.exp(-z))
        gate_full = jnp.dot(gate, sel_ref[...],
                            preferred_element_type=jnp.float32)               # (Cout, L)

        # --- channel gate, residual add, final ReLU: one lane-dense store ------
        out_ref[...] = jnp.maximum(y2 * gate_full + res, 0.0)

    return kernel


def cifar_se_basic_block(x_ncdhw, params):
    N, Cin, D, H, W = x_ncdhw.shape
    Cout = params["g1"].shape[0]
    P = D * H * W
    L = N * P
    has_ds = "w_ds" in params
    C1p = _round_up(Cin, 8)
    C2p = _round_up(Cout, 8)

    # Activations: NCDHW -> (C, N*P) with channels zero-padded to 8-sublane blocks.
    x = jnp.transpose(x_ncdhw.astype(jnp.float32).reshape(N, Cin, P),
                      (1, 0, 2)).reshape(Cin, L)
    if C1p != Cin:
        x = jnp.concatenate([x, jnp.zeros((C1p - Cin, L), jnp.float32)], axis=0)

    # Constant inputs: tap validity masks (tiled over batch) + SE selectors.
    masks = jnp.asarray(np.tile(_tap_masks(D, H, W), (1, N)))         # (27, L)
    sel_np = np.zeros((N, L), np.float32)
    for n in range(N):
        sel_np[n, n * P:(n + 1) * P] = 1.0
    sel = jnp.asarray(sel_np)                                          # (N, L): gate bcast
    pool = jnp.asarray(sel_np.T / float(P))                            # (L, N): avg pool

    def pack_conv3(w, cpad):
        # (Co, Ci, 3, 3, 3) -> (Co, 27*cpad): tap-major K, channel zero-padded.
        co, ci = w.shape[0], w.shape[1]
        wt = jnp.transpose(w.astype(jnp.float32), (0, 2, 3, 4, 1)).reshape(co, 27, ci)
        if cpad != ci:
            wt = jnp.concatenate([wt, jnp.zeros((co, 27, cpad - ci), jnp.float32)],
                                 axis=2)
        return wt.reshape(co, 27 * cpad)

    def bn_p(v):
        return v.reshape(-1, 1).astype(jnp.float32)

    w1 = pack_conv3(params["w1"], C1p)                                 # (Cout, 27*C1p)
    if has_ds:
        # Fuse the 1x1x1 downsample as extra output rows of conv1's matmul:
        # its weight occupies only the centre-tap (t=13) channel columns.
        wds = jnp.zeros((Cout, 27, C1p), jnp.float32)
        wds = wds.at[:, 13, :Cin].set(
            params["w_ds"].reshape(Cout, Cin).astype(jnp.float32))
        w1 = jnp.concatenate([w1, wds.reshape(Cout, 27 * C1p)], axis=0)  # (2*Cout, K1)
        g1 = jnp.concatenate([bn_p(params["g1"]), bn_p(params["g_ds"])], axis=0)
        b1 = jnp.concatenate([bn_p(params["b1"]), bn_p(params["b_ds"])], axis=0)
    else:
        g1, b1 = bn_p(params["g1"]), bn_p(params["b1"])
    w1 = w1.astype(jnp.bfloat16)
    w2 = pack_conv3(params["w2"], C2p).astype(jnp.bfloat16)            # (Cout, 27*C2p)

    args = [x, masks, w1, g1, b1, w2, bn_p(params["g2"]), bn_p(params["b2"]),
            params["fc1"].astype(jnp.float32), params["fc2"].astype(jnp.float32),
            pool, sel]

    out = pl.pallas_call(
        _make_block_kernel(D, H, W, Cout, has_ds),
        out_shape=jax.ShapeDtypeStruct((Cout, L), jnp.float32),
        in_specs=[pl.BlockSpec(memory_space=pltpu.MemorySpace.VMEM)] * len(args),
        out_specs=pl.BlockSpec(memory_space=pltpu.MemorySpace.VMEM),
        compiler_params=pltpu.CompilerParams(vmem_limit_bytes=32 * 1024 * 1024),
    )(*args)

    # (Cout, N*P) -> (N, Cout, D, H, W): free reshapes + one tiny XLA transpose.
    return jnp.transpose(out.reshape(Cout, N, P), (1, 0, 2)).reshape(N, Cout, D, H, W)


# ----------------------------------------------------------------------------
# Pure-JAX reference (training-mode BN, f32) for a correctness check.
# ----------------------------------------------------------------------------
def _reference_forward(x, params):
    dn = ("NCDHW", "OIDHW", "NCDHW")

    def conv(inp, w, pad):
        return lax.conv_general_dilated(inp, w, window_strides=(1, 1, 1),
                                        padding=[(pad, pad)] * 3,
                                        dimension_numbers=dn,
                                        precision=lax.Precision.HIGHEST)

    def bn(y, g, b):
        mean = jnp.mean(y, axis=(0, 2, 3, 4), keepdims=True)
        var = jnp.mean((y - mean) ** 2, axis=(0, 2, 3, 4), keepdims=True)
        return ((y - mean) * lax.rsqrt(var + EPS) * g.reshape(1, -1, 1, 1, 1)
                + b.reshape(1, -1, 1, 1, 1))

    if "w_ds" in params:
        res = bn(conv(x, params["w_ds"], 0), params["g_ds"], params["b_ds"])
    else:
        res = x
    out = jnp.maximum(bn(conv(x, params["w1"], 1), params["g1"], params["b1"]), 0.0)
    out = bn(conv(out, params["w2"], 1), params["g2"], params["b2"])
    y = jnp.mean(out, axis=(2, 3, 4))                                  # (N, C)
    y = jnp.maximum(y @ params["fc1"].T, 0.0) @ params["fc2"].T
    gate = jax.nn.sigmoid(y)[:, :, None, None, None]
    return jnp.maximum(out * gate + res, 0.0)


# ----------------------------------------------------------------------------
# Deterministic synthetic parameters (PyTorch-layout shapes from __init__)
# ----------------------------------------------------------------------------
def init_params(key, inplanes, planes, reduction):
    hidden = planes // reduction
    ks = jax.random.split(key, 11)

    def rnd(k, shape, scale=0.1):
        return scale * jax.random.normal(k, shape, jnp.float32)

    params = {
        "w1": rnd(ks[0], (planes, inplanes, 3, 3, 3)),   # conv3x3 weight (Co,Ci,3,3,3)
        "g1": 1.0 + rnd(ks[1], (planes,)),
        "b1": rnd(ks[2], (planes,)),
        "w2": rnd(ks[3], (planes, planes, 3, 3, 3)),
        "g2": 1.0 + rnd(ks[4], (planes,)),
        "b2": rnd(ks[5], (planes,)),
        "fc1": rnd(ks[6], (hidden, planes), scale=0.3),  # Linear(planes->hidden).weight
        "fc2": rnd(ks[7], (planes, hidden), scale=0.3),  # Linear(hidden->planes).weight
    }
    if inplanes != planes:
        params["w_ds"] = rnd(ks[8], (planes, inplanes, 1, 1, 1))  # 1x1x1 conv weight
        params["g_ds"] = 1.0 + rnd(ks[9], (planes,))
        params["b_ds"] = rnd(ks[10], (planes,))
    return params


if __name__ == "__main__":
    N, Cin, D, H, W = 2, 4, 8, 8, 8
    planes, reduction = 16, 4  # hidden = 4

    key = jax.random.PRNGKey(0)
    kx, kp = jax.random.split(key)
    x = jax.random.normal(kx, (N, Cin, D, H, W), jnp.float32)
    params = init_params(kp, Cin, planes, reduction)

    out = jax.jit(cifar_se_basic_block)(x, params)
    out = jax.block_until_ready(out)

    assert out.shape == (N, planes, D, H, W), out.shape
    assert bool(jnp.all(jnp.isfinite(out)))
    assert bool(jnp.all(out >= 0.0))  # final ReLU

    # Correctness vs. a pure-JAX f32 reference (kernel uses bf16 conv operands,
    # f32 accumulation, so allow a loose absolute tolerance on O(1) outputs).
    ref = _reference_forward(x, params)
    max_err = float(jnp.max(jnp.abs(out - ref)))
    assert max_err < 0.15, f"max abs error vs reference: {max_err}"

    print("KERNEL_OK")
</pallas_src>

<mosaic_0001>
module attributes {stable_mosaic.version = 11 : i64} {
  func.func @kernel(%arg0: memref<8x1024xf32, #tpu.memory_space<vmem>>, %arg1: memref<27x1024xf32, #tpu.memory_space<vmem>>, %arg2: memref<32x216xbf16, #tpu.memory_space<vmem>>, %arg3: memref<32x1xf32, #tpu.memory_space<vmem>>, %arg4: memref<32x1xf32, #tpu.memory_space<vmem>>, %arg5: memref<16x432xbf16, #tpu.memory_space<vmem>>, %arg6: memref<16x1xf32, #tpu.memory_space<vmem>>, %arg7: memref<16x1xf32, #tpu.memory_space<vmem>>, %arg8: memref<4x16xf32, #tpu.memory_space<vmem>>, %arg9: memref<16x4xf32, #tpu.memory_space<vmem>>, %arg10: memref<1024x2xf32, #tpu.memory_space<vmem>>, %arg11: memref<2x1024xf32, #tpu.memory_space<vmem>>, %arg12: memref<16x1024xf32, #tpu.memory_space<vmem>>) attributes {dimension_semantics = [], scalar_prefetch = 0 : i64, scratch_operands = 0 : i64, tpu.core_type = #tpu.core_type<tc>} {
    %c0 = arith.constant 0 : index
    %c0_0 = arith.constant 0 : index
    %0 = vector.load %arg0[%c0, %c0_0] : memref<8x1024xf32, #tpu.memory_space<vmem>>, vector<8x1024xf32>
    %c0_1 = arith.constant 0 : index
    %c0_2 = arith.constant 0 : index
    %1 = vector.load %arg1[%c0_1, %c0_2] : memref<27x1024xf32, #tpu.memory_space<vmem>>, vector<27x1024xf32>
    %c73_i32 = arith.constant 73 : i32
    %2 = tpu.dynamic_rotate %0 by %c73_i32 dim 1 : vector<8x1024xf32>, i32 -> vector<8x1024xf32>
    %3 = vector.extract_strided_slice %1 {offsets = [0, 0], sizes = [1, 1024], strides = [1, 1]} : vector<27x1024xf32> to vector<1x1024xf32>
    %4 = vector.broadcast %3 : vector<1x1024xf32> to vector<8x1024xf32>
    %5 = arith.mulf %2, %4 : vector<8x1024xf32>
    %c72_i32 = arith.constant 72 : i32
    %6 = tpu.dynamic_rotate %0 by %c72_i32 dim 1 : vector<8x1024xf32>, i32 -> vector<8x1024xf32>
    %7 = vector.extract_strided_slice %1 {offsets = [1, 0], sizes = [1, 1024], strides = [1, 1]} : vector<27x1024xf32> to vector<1x1024xf32>
    %8 = vector.broadcast %7 : vector<1x1024xf32> to vector<8x1024xf32>
    %9 = arith.mulf %6, %8 : vector<8x1024xf32>
    %c71_i32 = arith.constant 71 : i32
    %10 = tpu.dynamic_rotate %0 by %c71_i32 dim 1 : vector<8x1024xf32>, i32 -> vector<8x1024xf32>
    %11 = vector.extract_strided_slice %1 {offsets = [2, 0], sizes = [1, 1024], strides = [1, 1]} : vector<27x1024xf32> to vector<1x1024xf32>
    %12 = vector.broadcast %11 : vector<1x1024xf32> to vector<8x1024xf32>
    %13 = arith.mulf %10, %12 : vector<8x1024xf32>
    %c65_i32 = arith.constant 65 : i32
    %14 = tpu.dynamic_rotate %0 by %c65_i32 dim 1 : vector<8x1024xf32>, i32 -> vector<8x1024xf32>
    %15 = vector.extract_strided_slice %1 {offsets = [3, 0], sizes = [1, 1024], strides = [1, 1]} : vector<27x1024xf32> to vector<1x1024xf32>
    %16 = vector.broadcast %15 : vector<1x1024xf32> to vector<8x1024xf32>
    %17 = arith.mulf %14, %16 : vector<8x1024xf32>
    %c64_i32 = arith.constant 64 : i32
    %18 = tpu.dynamic_rotate %0 by %c64_i32 dim 1 : vector<8x1024xf32>, i32 -> vector<8x1024xf32>
    %19 = vector.extract_strided_slice %1 {offsets = [4, 0], sizes = [1, 1024], strides = [1, 1]} : vector<27x1024xf32> to vector<1x1024xf32>
    %20 = vector.broadcast %19 : vector<1x1024xf32> to vector<8x1024xf32>
    %21 = arith.mulf %18, %20 : vector<8x1024xf32>
    %c63_i32 = arith.constant 63 : i32
    %22 = tpu.dynamic_rotate %0 by %c63_i32 dim 1 : vector<8x1024xf32>, i32 -> vector<8x1024xf32>
    %23 = vector.extract_strided_slice %1 {offsets = [5, 0], sizes = [1, 1024], strides = [1, 1]} : vector<27x1024xf32> to vector<1x1024xf32>
    %24 = vector.broadcast %23 : vector<1x1024xf32> to vector<8x1024xf32>
    %25 = arith.mulf %22, %24 : vector<8x1024xf32>
    %c57_i32 = arith.constant 57 : i32
    %26 = tpu.dynamic_rotate %0 by %c57_i32 dim 1 : vector<8x1024xf32>, i32 -> vector<8x1024xf32>
    %27 = vector.extract_strided_slice %1 {offsets = [6, 0], sizes = [1, 1024], strides = [1, 1]} : vector<27x1024xf32> to vector<1x1024xf32>
    %28 = vector.broadcast %27 : vector<1x1024xf32> to vector<8x1024xf32>
    %29 = arith.mulf %26, %28 : vector<8x1024xf32>
    %c56_i32 = arith.constant 56 : i32
    %30 = tpu.dynamic_rotate %0 by %c56_i32 dim 1 : vector<8x1024xf32>, i32 -> vector<8x1024xf32>
    %31 = vector.extract_strided_slice %1 {offsets = [7, 0], sizes = [1, 1024], strides = [1, 1]} : vector<27x1024xf32> to vector<1x1024xf32>
    %32 = vector.broadcast %31 : vector<1x1024xf32> to vector<8x1024xf32>
    %33 = arith.mulf %30, %32 : vector<8x1024xf32>
    %c55_i32 = arith.constant 55 : i32
    %34 = tpu.dynamic_rotate %0 by %c55_i32 dim 1 : vector<8x1024xf32>, i32 -> vector<8x1024xf32>
    %35 = vector.extract_strided_slice %1 {offsets = [8, 0], sizes = [1, 1024], strides = [1, 1]} : vector<27x1024xf32> to vector<1x1024xf32>
    %36 = vector.broadcast %35 : vector<1x1024xf32> to vector<8x1024xf32>
    %37 = arith.mulf %34, %36 : vector<8x1024xf32>
    %c9_i32 = arith.constant 9 : i32
    %38 = tpu.dynamic_rotate %0 by %c9_i32 dim 1 : vector<8x1024xf32>, i32 -> vector<8x1024xf32>
    %39 = vector.extract_strided_slice %1 {offsets = [9, 0], sizes = [1, 1024], strides = [1, 1]} : vector<27x1024xf32> to vector<1x1024xf32>
    %40 = vector.broadcast %39 : vector<1x1024xf32> to vector<8x1024xf32>
    %41 = arith.mulf %38, %40 : vector<8x1024xf32>
    %c8_i32 = arith.constant 8 : i32
    %42 = tpu.dynamic_rotate %0 by %c8_i32 dim 1 : vector<8x1024xf32>, i32 -> vector<8x1024xf32>
    %43 = vector.extract_strided_slice %1 {offsets = [10, 0], sizes = [1, 1024], strides = [1, 1]} : vector<27x1024xf32> to vector<1x1024xf32>
    %44 = vector.broadcast %43 : vector<1x1024xf32> to vector<8x1024xf32>
    %45 = arith.mulf %42, %44 : vector<8x1024xf32>
    %c7_i32 = arith.constant 7 : i32
    %46 = tpu.dynamic_rotate %0 by %c7_i32 dim 1 : vector<8x1024xf32>, i32 -> vector<8x1024xf32>
    %47 = vector.extract_strided_slice %1 {offsets = [11, 0], sizes = [1, 1024], strides = [1, 1]} : vector<27x1024xf32> to vector<1x1024xf32>
    %48 = vector.broadcast %47 : vector<1x1024xf32> to vector<8x1024xf32>
    %49 = arith.mulf %46, %48 : vector<8x1024xf32>
    %c1_i32 = arith.constant 1 : i32
    %50 = tpu.dynamic_rotate %0 by %c1_i32 dim 1 : vector<8x1024xf32>, i32 -> vector<8x1024xf32>
    %51 = vector.extract_strided_slice %1 {offsets = [12, 0], sizes = [1, 1024], strides = [1, 1]} : vector<27x1024xf32> to vector<1x1024xf32>
    %52 = vector.broadcast %51 : vector<1x1024xf32> to vector<8x1024xf32>
    %53 = arith.mulf %50, %52 : vector<8x1024xf32>
    %c1023_i32 = arith.constant 1023 : i32
    %54 = tpu.dynamic_rotate %0 by %c1023_i32 dim 1 : vector<8x1024xf32>, i32 -> vector<8x1024xf32>
    %55 = vector.extract_strided_slice %1 {offsets = [14, 0], sizes = [1, 1024], strides = [1, 1]} : vector<27x1024xf32> to vector<1x1024xf32>
    %56 = vector.broadcast %55 : vector<1x1024xf32> to vector<8x1024xf32>
    %57 = arith.mulf %54, %56 : vector<8x1024xf32>
    %c1017_i32 = arith.constant 1017 : i32
    %58 = tpu.dynamic_rotate %0 by %c1017_i32 dim 1 : vector<8x1024xf32>, i32 -> vector<8x1024xf32>
    %59 = vector.extract_strided_slice %1 {offsets = [15, 0], sizes = [1, 1024], strides = [1, 1]} : vector<27x1024xf32> to vector<1x1024xf32>
    %60 = vector.broadcast %59 : vector<1x1024xf32> to vector<8x1024xf32>
    %61 = arith.mulf %58, %60 : vector<8x1024xf32>
    %c1016_i32 = arith.constant 1016 : i32
    %62 = tpu.dynamic_rotate %0 by %c1016_i32 dim 1 : vector<8x1024xf32>, i32 -> vector<8x1024xf32>
    %63 = vector.extract_strided_slice %1 {offsets = [16, 0], sizes = [1, 1024], strides = [1, 1]} : vector<27x1024xf32> to vector<1x1024xf32>
    %64 = vector.broadcast %63 : vector<1x1024xf32> to vector<8x1024xf32>
    %65 = arith.mulf %62, %64 : vector<8x1024xf32>
    %c1015_i32 = arith.constant 1015 : i32
    %66 = tpu.dynamic_rotate %0 by %c1015_i32 dim 1 : vector<8x1024xf32>, i32 -> vector<8x1024xf32>
    %67 = vector.extract_strided_slice %1 {offsets = [17, 0], sizes = [1, 1024], strides = [1, 1]} : vector<27x1024xf32> to vector<1x1024xf32>
    %68 = vector.broadcast %67 : vector<1x1024xf32> to vector<8x1024xf32>
    %69 = arith.mulf %66, %68 : vector<8x1024xf32>
    %c969_i32 = arith.constant 969 : i32
    %70 = tpu.dynamic_rotate %0 by %c969_i32 dim 1 : vector<8x1024xf32>, i32 -> vector<8x1024xf32>
    %71 = vector.extract_strided_slice %1 {offsets = [18, 0], sizes = [1, 1024], strides = [1, 1]} : vector<27x1024xf32> to vector<1x1024xf32>
    %72 = vector.broadcast %71 : vector<1x1024xf32> to vector<8x1024xf32>
    %73 = arith.mulf %70, %72 : vector<8x1024xf32>
    %c968_i32 = arith.constant 968 : i32
    %74 = tpu.dynamic_rotate %0 by %c968_i32 dim 1 : vector<8x1024xf32>, i32 -> vector<8x1024xf32>
    %75 = vector.extract_strided_slice %1 {offsets = [19, 0], sizes = [1, 1024], strides = [1, 1]} : vector<27x1024xf32> to vector<1x1024xf32>
    %76 = vector.broadcast %75 : vector<1x1024xf32> to vector<8x1024xf32>
    %77 = arith.mulf %74, %76 : vector<8x1024xf32>
    %c967_i32 = arith.constant 967 : i32
    %78 = tpu.dynamic_rotate %0 by %c967_i32 dim 1 : vector<8x1024xf32>, i32 -> vector<8x1024xf32>
    %79 = vector.extract_strided_slice %1 {offsets = [20, 0], sizes = [1, 1024], strides = [1, 1]} : vector<27x1024xf32> to vector<1x1024xf32>
    %80 = vector.broadcast %79 : vector<1x1024xf32> to vector<8x1024xf32>
    %81 = arith.mulf %78, %80 : vector<8x1024xf32>
    %c961_i32 = arith.constant 961 : i32
    %82 = tpu.dynamic_rotate %0 by %c961_i32 dim 1 : vector<8x1024xf32>, i32 -> vector<8x1024xf32>
    %83 = vector.extract_strided_slice %1 {offsets = [21, 0], sizes = [1, 1024], strides = [1, 1]} : vector<27x1024xf32> to vector<1x1024xf32>
    %84 = vector.broadcast %83 : vector<1x1024xf32> to vector<8x1024xf32>
    %85 = arith.mulf %82, %84 : vector<8x1024xf32>
    %c960_i32 = arith.constant 960 : i32
    %86 = tpu.dynamic_rotate %0 by %c960_i32 dim 1 : vector<8x1024xf32>, i32 -> vector<8x1024xf32>
    %87 = vector.extract_strided_slice %1 {offsets = [22, 0], sizes = [1, 1024], strides = [1, 1]} : vector<27x1024xf32> to vector<1x1024xf32>
    %88 = vector.broadcast %87 : vector<1x1024xf32> to vector<8x1024xf32>
    %89 = arith.mulf %86, %88 : vector<8x1024xf32>
    %c959_i32 = arith.constant 959 : i32
    %90 = tpu.dynamic_rotate %0 by %c959_i32 dim 1 : vector<8x1024xf32>, i32 -> vector<8x1024xf32>
    %91 = vector.extract_strided_slice %1 {offsets = [23, 0], sizes = [1, 1024], strides = [1, 1]} : vector<27x1024xf32> to vector<1x1024xf32>
    %92 = vector.broadcast %91 : vector<1x1024xf32> to vector<8x1024xf32>
    %93 = arith.mulf %90, %92 : vector<8x1024xf32>
    %c953_i32 = arith.constant 953 : i32
    %94 = tpu.dynamic_rotate %0 by %c953_i32 dim 1 : vector<8x1024xf32>, i32 -> vector<8x1024xf32>
    %95 = vector.extract_strided_slice %1 {offsets = [24, 0], sizes = [1, 1024], strides = [1, 1]} : vector<27x1024xf32> to vector<1x1024xf32>
    %96 = vector.broadcast %95 : vector<1x1024xf32> to vector<8x1024xf32>
    %97 = arith.mulf %94, %96 : vector<8x1024xf32>
    %c952_i32 = arith.constant 952 : i32
    %98 = tpu.dynamic_rotate %0 by %c952_i32 dim 1 : vector<8x1024xf32>, i32 -> vector<8x1024xf32>
    %99 = vector.extract_strided_slice %1 {offsets = [25, 0], sizes = [1, 1024], strides = [1, 1]} : vector<27x1024xf32> to vector<1x1024xf32>
    %100 = vector.broadcast %99 : vector<1x1024xf32> to vector<8x1024xf32>
    %101 = arith.mulf %98, %100 : vector<8x1024xf32>
    %c951_i32 = arith.constant 951 : i32
    %102 = tpu.dynamic_rotate %0 by %c951_i32 dim 1 : vector<8x1024xf32>, i32 -> vector<8x1024xf32>
    %103 = vector.extract_strided_slice %1 {offsets = [26, 0], sizes = [1, 1024], strides = [1, 1]} : vector<27x1024xf32> to vector<1x1024xf32>
    %104 = vector.broadcast %103 : vector<1x1024xf32> to vector<8x1024xf32>
    %105 = arith.mulf %102, %104 : vector<8x1024xf32>
    %106 = tpu.concatenate %5, %9, %13, %17, %21, %25, %29, %33, %37, %41, %45, %49, %53, %0, %57, %61 in 0 : vector<8x1024xf32>, vector<8x1024xf32>, vector<8x1024xf32>, vector<8x1024xf32>, vector<8x1024xf32>, vector<8x1024xf32>, vector<8x1024xf32>, vector<8x1024xf32>, vector<8x1024xf32>, vector<8x1024xf32>, vector<8x1024xf32>, vector<8x1024xf32>, vector<8x1024xf32>, vector<8x1024xf32>, vector<8x1024xf32>, vector<8x1024xf32> -> vector<128x1024xf32>
    %107 = tpu.concatenate %65, %69, %73, %77, %81, %85, %89, %93, %97, %101, %105 in 0 : vector<8x1024xf32>, vector<8x1024xf32>, vector<8x1024xf32>, vector<8x1024xf32>, vector<8x1024xf32>, vector<8x1024xf32>, vector<8x1024xf32>, vector<8x1024xf32>, vector<8x1024xf32>, vector<8x1024xf32>, vector<8x1024xf32> -> vector<88x1024xf32>
    %108 = tpu.concatenate %106, %107 in 0 : vector<128x1024xf32>, vector<88x1024xf32> -> vector<216x1024xf32>
    %109 = arith.truncf %108 : vector<216x1024xf32> to vector<216x1024xbf16>
    %c0_3 = arith.constant 0 : index
    %c0_4 = arith.constant 0 : index
    %110 = vector.load %arg2[%c0_3, %c0_4] : memref<32x216xbf16, #tpu.memory_space<vmem>>, vector<32x216xbf16>
    %cst = arith.constant dense<0.000000e+00> : vector<32x1024xf32>
    %111 = tpu.matmul %110, %109, %cst {dimension_numbers = #tpu.dot_dimension_numbers<[1], [0], [0], [1], [0, 0, 1, 1], [], []>} : vector<32x216xbf16>, vector<216x1024xbf16>, vector<32x1024xf32> -> vector<32x1024xf32>
    %c0_5 = arith.constant 0 : index
    %c0_6 = arith.constant 0 : index
    %112 = vector.load %arg3[%c0_5, %c0_6] : memref<32x1xf32, #tpu.memory_space<vmem>>, vector<32x1xf32>
    %c0_7 = arith.constant 0 : index
    %c0_8 = arith.constant 0 : index
    %113 = vector.load %arg4[%c0_7, %c0_8] : memref<32x1xf32, #tpu.memory_space<vmem>>, vector<32x1xf32>
    %cst_9 = arith.constant dense<0.000000e+00> : vector<32xf32>
    %114 = vector.multi_reduction <add>, %111, %cst_9 [1] : vector<32x1024xf32> to vector<32xf32>
    %115 = vector.shape_cast %114 : vector<32xf32> to vector<32x1xf32>
    %cst_10 = arith.constant 9.765625E-4 : f32
    %116 = vector.broadcast %cst_10 : f32 to vector<32x1xf32>
    %117 = arith.mulf %115, %116 : vector<32x1xf32>
    %118 = vector.broadcast %117 : vector<32x1xf32> to vector<32x1024xf32>
    %119 = arith.subf %111, %118 : vector<32x1024xf32>
    %120 = arith.mulf %119, %119 : vector<32x1024xf32>
    %cst_11 = arith.constant dense<0.000000e+00> : vector<32xf32>
    %121 = vector.multi_reduction <add>, %120, %cst_11 [1] : vector<32x1024xf32> to vector<32xf32>
    %122 = vector.shape_cast %121 : vector<32xf32> to vector<32x1xf32>
    %cst_12 = arith.constant 9.765625E-4 : f32
    %123 = vector.broadcast %cst_12 : f32 to vector<32x1xf32>
    %124 = arith.mulf %122, %123 : vector<32x1xf32>
    %cst_13 = arith.constant 9.99999974E-6 : f32
    %125 = vector.broadcast %cst_13 : f32 to vector<32x1xf32>
    %126 = arith.addf %124, %125 : vector<32x1xf32>
    %127 = math.rsqrt %126 : vector<32x1xf32>
    %128 = arith.mulf %127, %112 : vector<32x1xf32>
    %129 = vector.broadcast %128 : vector<32x1xf32> to vector<32x1024xf32>
    %130 = arith.mulf %119, %129 : vector<32x1024xf32>
    %131 = vector.broadcast %113 : vector<32x1xf32> to vector<32x1024xf32>
    %132 = arith.addf %130, %131 : vector<32x1024xf32>
    %133 = vector.extract_strided_slice %132 {offsets = [0, 0], sizes = [16, 1024], strides = [1, 1]} : vector<32x1024xf32> to vector<16x1024xf32>
    %cst_14 = arith.constant 0.000000e+00 : f32
    %134 = vector.broadcast %cst_14 : f32 to vector<16x1024xf32>
    %135 = arith.maximumf %133, %134 : vector<16x1024xf32>
    %136 = vector.extract_strided_slice %132 {offsets = [16, 0], sizes = [16, 1024], strides = [1, 1]} : vector<32x1024xf32> to vector<16x1024xf32>
    %c73_i32_15 = arith.constant 73 : i32
    %137 = tpu.dynamic_rotate %135 by %c73_i32_15 dim 1 : vector<16x1024xf32>, i32 -> vector<16x1024xf32>
    %138 = vector.extract_strided_slice %1 {offsets = [0, 0], sizes = [1, 1024], strides = [1, 1]} : vector<27x1024xf32> to vector<1x1024xf32>
    %139 = vector.broadcast %138 : vector<1x1024xf32> to vector<16x1024xf32>
    %140 = arith.mulf %137, %139 : vector<16x1024xf32>
    %c72_i32_16 = arith.constant 72 : i32
    %141 = tpu.dynamic_rotate %135 by %c72_i32_16 dim 1 : vector<16x1024xf32>, i32 -> vector<16x1024xf32>
    %142 = vector.extract_strided_slice %1 {offsets = [1, 0], sizes = [1, 1024], strides = [1, 1]} : vector<27x1024xf32> to vector<1x1024xf32>
    %143 = vector.broadcast %142 : vector<1x1024xf32> to vector<16x1024xf32>
    %144 = arith.mulf %141, %143 : vector<16x1024xf32>
    %c71_i32_17 = arith.constant 71 : i32
    %145 = tpu.dynamic_rotate %135 by %c71_i32_17 dim 1 : vector<16x1024xf32>, i32 -> vector<16x1024xf32>
    %146 = vector.extract_strided_slice %1 {offsets = [2, 0], sizes = [1, 1024], strides = [1, 1]} : vector<27x1024xf32> to vector<1x1024xf32>
    %147 = vector.broadcast %146 : vector<1x1024xf32> to vector<16x1024xf32>
    %148 = arith.mulf %145, %147 : vector<16x1024xf32>
    %c65_i32_18 = arith.constant 65 : i32
    %149 = tpu.dynamic_rotate %135 by %c65_i32_18 dim 1 : vector<16x1024xf32>, i32 -> vector<16x1024xf32>
    %150 = vector.extract_strided_slice %1 {offsets = [3, 0], sizes = [1, 1024], strides = [1, 1]} : vector<27x1024xf32> to vector<1x1024xf32>
    %151 = vector.broadcast %150 : vector<1x1024xf32> to vector<16x1024xf32>
    %152 = arith.mulf %149, %151 : vector<16x1024xf32>
    %c64_i32_19 = arith.constant 64 : i32
    %153 = tpu.dynamic_rotate %135 by %c64_i32_19 dim 1 : vector<16x1024xf32>, i32 -> vector<16x1024xf32>
    %154 = vector.extract_strided_slice %1 {offsets = [4, 0], sizes = [1, 1024], strides = [1, 1]} : vector<27x1024xf32> to vector<1x1024xf32>
    %155 = vector.broadcast %154 : vector<1x1024xf32> to vector<16x1024xf32>
    %156 = arith.mulf %153, %155 : vector<16x1024xf32>
    %c63_i32_20 = arith.constant 63 : i32
    %157 = tpu.dynamic_rotate %135 by %c63_i32_20 dim 1 : vector<16x1024xf32>, i32 -> vector<16x1024xf32>
    %158 = vector.extract_strided_slice %1 {offsets = [5, 0], sizes = [1, 1024], strides = [1, 1]} : vector<27x1024xf32> to vector<1x1024xf32>
    %159 = vector.broadcast %158 : vector<1x1024xf32> to vector<16x1024xf32>
    %160 = arith.mulf %157, %159 : vector<16x1024xf32>
    %c57_i32_21 = arith.constant 57 : i32
    %161 = tpu.dynamic_rotate %135 by %c57_i32_21 dim 1 : vector<16x1024xf32>, i32 -> vector<16x1024xf32>
    %162 = vector.extract_strided_slice %1 {offsets = [6, 0], sizes = [1, 1024], strides = [1, 1]} : vector<27x1024xf32> to vector<1x1024xf32>
    %163 = vector.broadcast %162 : vector<1x1024xf32> to vector<16x1024xf32>
    %164 = arith.mulf %161, %163 : vector<16x1024xf32>
    %c56_i32_22 = arith.constant 56 : i32
    %165 = tpu.dynamic_rotate %135 by %c56_i32_22 dim 1 : vector<16x1024xf32>, i32 -> vector<16x1024xf32>
    %166 = vector.extract_strided_slice %1 {offsets = [7, 0], sizes = [1, 1024], strides = [1, 1]} : vector<27x1024xf32> to vector<1x1024xf32>
    %167 = vector.broadcast %166 : vector<1x1024xf32> to vector<16x1024xf32>
    %168 = arith.mulf %165, %167 : vector<16x1024xf32>
    %c55_i32_23 = arith.constant 55 : i32
    %169 = tpu.dynamic_rotate %135 by %c55_i32_23 dim 1 : vector<16x1024xf32>, i32 -> vector<16x1024xf32>
    %170 = vector.extract_strided_slice %1 {offsets = [8, 0], sizes = [1, 1024], strides = [1, 1]} : vector<27x1024xf32> to vector<1x1024xf32>
    %171 = vector.broadcast %170 : vector<1x1024xf32> to vector<16x1024xf32>
    %172 = arith.mulf %169, %171 : vector<16x1024xf32>
    %c9_i32_24 = arith.constant 9 : i32
    %173 = tpu.dynamic_rotate %135 by %c9_i32_24 dim 1 : vector<16x1024xf32>, i32 -> vector<16x1024xf32>
    %174 = vector.extract_strided_slice %1 {offsets = [9, 0], sizes = [1, 1024], strides = [1, 1]} : vector<27x1024xf32> to vector<1x1024xf32>
    %175 = vector.broadcast %174 : vector<1x1024xf32> to vector<16x1024xf32>
    %176 = arith.mulf %173, %175 : vector<16x1024xf32>
    %c8_i32_25 = arith.constant 8 : i32
    %177 = tpu.dynamic_rotate %135 by %c8_i32_25 dim 1 : vector<16x1024xf32>, i32 -> vector<16x1024xf32>
    %178 = vector.extract_strided_slice %1 {offsets = [10, 0], sizes = [1, 1024], strides = [1, 1]} : vector<27x1024xf32> to vector<1x1024xf32>
    %179 = vector.broadcast %178 : vector<1x1024xf32> to vector<16x1024xf32>
    %180 = arith.mulf %177, %179 : vector<16x1024xf32>
    %c7_i32_26 = arith.constant 7 : i32
    %181 = tpu.dynamic_rotate %135 by %c7_i32_26 dim 1 : vector<16x1024xf32>, i32 -> vector<16x1024xf32>
    %182 = vector.extract_strided_slice %1 {offsets = [11, 0], sizes = [1, 1024], strides = [1, 1]} : vector<27x1024xf32> to vector<1x1024xf32>
    %183 = vector.broadcast %182 : vector<1x1024xf32> to vector<16x1024xf32>
    %184 = arith.mulf %181, %183 : vector<16x1024xf32>
    %c1_i32_27 = arith.constant 1 : i32
    %185 = tpu.dynamic_rotate %135 by %c1_i32_27 dim 1 : vector<16x1024xf32>, i32 -> vector<16x1024xf32>
    %186 = vector.extract_strided_slice %1 {offsets = [12, 0], sizes = [1, 1024], strides = [1, 1]} : vector<27x1024xf32> to vector<1x1024xf32>
    %187 = vector.broadcast %186 : vector<1x1024xf32> to vector<16x1024xf32>
    %188 = arith.mulf %185, %187 : vector<16x1024xf32>
    %c1023_i32_28 = arith.constant 1023 : i32
    %189 = tpu.dynamic_rotate %135 by %c1023_i32_28 dim 1 : vector<16x1024xf32>, i32 -> vector<16x1024xf32>
    %190 = vector.extract_strided_slice %1 {offsets = [14, 0], sizes = [1, 1024], strides = [1, 1]} : vector<27x1024xf32> to vector<1x1024xf32>
    %191 = vector.broadcast %190 : vector<1x1024xf32> to vector<16x1024xf32>
    %192 = arith.mulf %189, %191 : vector<16x1024xf32>
    %c1017_i32_29 = arith.constant 1017 : i32
    %193 = tpu.dynamic_rotate %135 by %c1017_i32_29 dim 1 : vector<16x1024xf32>, i32 -> vector<16x1024xf32>
    %194 = vector.extract_strided_slice %1 {offsets = [15, 0], sizes = [1, 1024], strides = [1, 1]} : vector<27x1024xf32> to vector<1x1024xf32>
    %195 = vector.broadcast %194 : vector<1x1024xf32> to vector<16x1024xf32>
    %196 = arith.mulf %193, %195 : vector<16x1024xf32>
    %c1016_i32_30 = arith.constant 1016 : i32
    %197 = tpu.dynamic_rotate %135 by %c1016_i32_30 dim 1 : vector<16x1024xf32>, i32 -> vector<16x1024xf32>
    %198 = vector.extract_strided_slice %1 {offsets = [16, 0], sizes = [1, 1024], strides = [1, 1]} : vector<27x1024xf32> to vector<1x1024xf32>
    %199 = vector.broadcast %198 : vector<1x1024xf32> to vector<16x1024xf32>
    %200 = arith.mulf %197, %199 : vector<16x1024xf32>
    %c1015_i32_31 = arith.constant 1015 : i32
    %201 = tpu.dynamic_rotate %135 by %c1015_i32_31 dim 1 : vector<16x1024xf32>, i32 -> vector<16x1024xf32>
    %202 = vector.extract_strided_slice %1 {offsets = [17, 0], sizes = [1, 1024], strides = [1, 1]} : vector<27x1024xf32> to vector<1x1024xf32>
    %203 = vector.broadcast %202 : vector<1x1024xf32> to vector<16x1024xf32>
    %204 = arith.mulf %201, %203 : vector<16x1024xf32>
    %c969_i32_32 = arith.constant 969 : i32
    %205 = tpu.dynamic_rotate %135 by %c969_i32_32 dim 1 : vector<16x1024xf32>, i32 -> vector<16x1024xf32>
    %206 = vector.extract_strided_slice %1 {offsets = [18, 0], sizes = [1, 1024], strides = [1, 1]} : vector<27x1024xf32> to vector<1x1024xf32>
    %207 = vector.broadcast %206 : vector<1x1024xf32> to vector<16x1024xf32>
    %208 = arith.mulf %205, %207 : vector<16x1024xf32>
    %c968_i32_33 = arith.constant 968 : i32
    %209 = tpu.dynamic_rotate %135 by %c968_i32_33 dim 1 : vector<16x1024xf32>, i32 -> vector<16x1024xf32>
    %210 = vector.extract_strided_slice %1 {offsets = [19, 0], sizes = [1, 1024], strides = [1, 1]} : vector<27x1024xf32> to vector<1x1024xf32>
    %211 = vector.broadcast %210 : vector<1x1024xf32> to vector<16x1024xf32>
    %212 = arith.mulf %209, %211 : vector<16x1024xf32>
    %c967_i32_34 = arith.constant 967 : i32
    %213 = tpu.dynamic_rotate %135 by %c967_i32_34 dim 1 : vector<16x1024xf32>, i32 -> vector<16x1024xf32>
    %214 = vector.extract_strided_slice %1 {offsets = [20, 0], sizes = [1, 1024], strides = [1, 1]} : vector<27x1024xf32> to vector<1x1024xf32>
    %215 = vector.broadcast %214 : vector<1x1024xf32> to vector<16x1024xf32>
    %216 = arith.mulf %213, %215 : vector<16x1024xf32>
    %c961_i32_35 = arith.constant 961 : i32
    %217 = tpu.dynamic_rotate %135 by %c961_i32_35 dim 1 : vector<16x1024xf32>, i32 -> vector<16x1024xf32>
    %218 = vector.extract_strided_slice %1 {offsets = [21, 0], sizes = [1, 1024], strides = [1, 1]} : vector<27x1024xf32> to vector<1x1024xf32>
    %219 = vector.broadcast %218 : vector<1x1024xf32> to vector<16x1024xf32>
    %220 = arith.mulf %217, %219 : vector<16x1024xf32>
    %c960_i32_36 = arith.constant 960 : i32
    %221 = tpu.dynamic_rotate %135 by %c960_i32_36 dim 1 : vector<16x1024xf32>, i32 -> vector<16x1024xf32>
    %222 = vector.extract_strided_slice %1 {offsets = [22, 0], sizes = [1, 1024], strides = [1, 1]} : vector<27x1024xf32> to vector<1x1024xf32>
    %223 = vector.broadcast %222 : vector<1x1024xf32> to vector<16x1024xf32>
    %224 = arith.mulf %221, %223 : vector<16x1024xf32>
    %c959_i32_37 = arith.constant 959 : i32
    %225 = tpu.dynamic_rotate %135 by %c959_i32_37 dim 1 : vector<16x1024xf32>, i32 -> vector<16x1024xf32>
    %226 = vector.extract_strided_slice %1 {offsets = [23, 0], sizes = [1, 1024], strides = [1, 1]} : vector<27x1024xf32> to vector<1x1024xf32>
    %227 = vector.broadcast %226 : vector<1x1024xf32> to vector<16x1024xf32>
    %228 = arith.mulf %225, %227 : vector<16x1024xf32>
    %c953_i32_38 = arith.constant 953 : i32
    %229 = tpu.dynamic_rotate %135 by %c953_i32_38 dim 1 : vector<16x1024xf32>, i32 -> vector<16x1024xf32>
    %230 = vector.extract_strided_slice %1 {offsets = [24, 0], sizes = [1, 1024], strides = [1, 1]} : vector<27x1024xf32> to vector<1x1024xf32>
    %231 = vector.broadcast %230 : vector<1x1024xf32> to vector<16x1024xf32>
    %232 = arith.mulf %229, %231 : vector<16x1024xf32>
    %c952_i32_39 = arith.constant 952 : i32
    %233 = tpu.dynamic_rotate %135 by %c952_i32_39 dim 1 : vector<16x1024xf32>, i32 -> vector<16x1024xf32>
    %234 = vector.extract_strided_slice %1 {offsets = [25, 0], sizes = [1, 1024], strides = [1, 1]} : vector<27x1024xf32> to vector<1x1024xf32>
    %235 = vector.broadcast %234 : vector<1x1024xf32> to vector<16x1024xf32>
    %236 = arith.mulf %233, %235 : vector<16x1024xf32>
    %c951_i32_40 = arith.constant 951 : i32
    %237 = tpu.dynamic_rotate %135 by %c951_i32_40 dim 1 : vector<16x1024xf32>, i32 -> vector<16x1024xf32>
    %238 = vector.extract_strided_slice %1 {offsets = [26, 0], sizes = [1, 1024], strides = [1, 1]} : vector<27x1024xf32> to vector<1x1024xf32>
    %239 = vector.broadcast %238 : vector<1x1024xf32> to vector<16x1024xf32>
    %240 = arith.mulf %237, %239 : vector<16x1024xf32>
    %241 = tpu.concatenate %140, %144, %148, %152, %156, %160, %164, %168, %172, %176, %180, %184, %188, %135, %192, %196 in 0 : vector<16x1024xf32>, vector<16x1024xf32>, vector<16x1024xf32>, vector<16x1024xf32>, vector<16x1024xf32>, vector<16x1024xf32>, vector<16x1024xf32>, vector<16x1024xf32>, vector<16x1024xf32>, vector<16x1024xf32>, vector<16x1024xf32>, vector<16x1024xf32>, vector<16x1024xf32>, vector<16x1024xf32>, vector<16x1024xf32>, vector<16x1024xf32> -> vector<256x1024xf32>
    %242 = tpu.concatenate %200, %204, %208, %212, %216, %220, %224, %228, %232, %236, %240 in 0 : vector<16x1024xf32>, vector<16x1024xf32>, vector<16x1024xf32>, vector<16x1024xf32>, vector<16x1024xf32>, vector<16x1024xf32>, vector<16x1024xf32>, vector<16x1024xf32>, vector<16x1024xf32>, vector<16x1024xf32>, vector<16x1024xf32> -> vector<176x1024xf32>
    %243 = tpu.concatenate %241, %242 in 0 : vector<256x1024xf32>, vector<176x1024xf32> -> vector<432x1024xf32>
    %244 = arith.truncf %243 : vector<432x1024xf32> to vector<432x1024xbf16>
    %c0_41 = arith.constant 0 : index
    %c0_42 = arith.constant 0 : index
    %245 = vector.load %arg5[%c0_41, %c0_42] : memref<16x432xbf16, #tpu.memory_space<vmem>>, vector<16x432xbf16>
    %cst_43 = arith.constant dense<0.000000e+00> : vector<16x1024xf32>
    %246 = tpu.matmul %245, %244, %cst_43 {dimension_numbers = #tpu.dot_dimension_numbers<[1], [0], [0], [1], [0, 0, 1, 1], [], []>} : vector<16x432xbf16>, vector<432x1024xbf16>, vector<16x1024xf32> -> vector<16x1024xf32>
    %c0_44 = arith.constant 0 : index
    %c0_45 = arith.constant 0 : index
    %247 = vector.load %arg6[%c0_44, %c0_45] : memref<16x1xf32, #tpu.memory_space<vmem>>, vector<16x1xf32>
    %c0_46 = arith.constant 0 : index
    %c0_47 = arith.constant 0 : index
    %248 = vector.load %arg7[%c0_46, %c0_47] : memref<16x1xf32, #tpu.memory_space<vmem>>, vector<16x1xf32>
    %cst_48 = arith.constant dense<0.000000e+00> : vector<16xf32>
    %249 = vector.multi_reduction <add>, %246, %cst_48 [1] : vector<16x1024xf32> to vector<16xf32>
    %250 = vector.shape_cast %249 : vector<16xf32> to vector<16x1xf32>
    %cst_49 = arith.constant 9.765625E-4 : f32
    %251 = vector.broadcast %cst_49 : f32 to vector<16x1xf32>
    %252 = arith.mulf %250, %251 : vector<16x1xf32>
    %253 = vector.broadcast %252 : vector<16x1xf32> to vector<16x1024xf32>
    %254 = arith.subf %246, %253 : vector<16x1024xf32>
    %255 = arith.mulf %254, %254 : vector<16x1024xf32>
    %cst_50 = arith.constant dense<0.000000e+00> : vector<16xf32>
    %256 = vector.multi_reduction <add>, %255, %cst_50 [1] : vector<16x1024xf32> to vector<16xf32>
    %257 = vector.shape_cast %256 : vector<16xf32> to vector<16x1xf32>
    %cst_51 = arith.constant 9.765625E-4 : f32
    %258 = vector.broadcast %cst_51 : f32 to vector<16x1xf32>
    %259 = arith.mulf %257, %258 : vector<16x1xf32>
    %cst_52 = arith.constant 9.99999974E-6 : f32
    %260 = vector.broadcast %cst_52 : f32 to vector<16x1xf32>
    %261 = arith.addf %259, %260 : vector<16x1xf32>
    %262 = math.rsqrt %261 : vector<16x1xf32>
    %263 = arith.mulf %262, %247 : vector<16x1xf32>
    %264 = vector.broadcast %263 : vector<16x1xf32> to vector<16x1024xf32>
    %265 = arith.mulf %254, %264 : vector<16x1024xf32>
    %266 = vector.broadcast %248 : vector<16x1xf32> to vector<16x1024xf32>
    %267 = arith.addf %265, %266 : vector<16x1024xf32>
    %c0_53 = arith.constant 0 : index
    %c0_54 = arith.constant 0 : index
    %268 = vector.load %arg10[%c0_53, %c0_54] : memref<1024x2xf32, #tpu.memory_space<vmem>>, vector<1024x2xf32>
    %cst_55 = arith.constant dense<0.000000e+00> : vector<16x2xf32>
    %269 = tpu.matmul %267, %268, %cst_55 {dimension_numbers = #tpu.dot_dimension_numbers<[1], [0], [0], [1], [0, 0, 1, 1], [], []>} : vector<16x1024xf32>, vector<1024x2xf32>, vector<16x2xf32> -> vector<16x2xf32>
    %c0_56 = arith.constant 0 : index
    %c0_57 = arith.constant 0 : index
    %270 = vector.load %arg8[%c0_56, %c0_57] : memref<4x16xf32, #tpu.memory_space<vmem>>, vector<4x16xf32>
    %cst_58 = arith.constant dense<0.000000e+00> : vector<4x2xf32>
    %271 = tpu.matmul %270, %269, %cst_58 {dimension_numbers = #tpu.dot_dimension_numbers<[1], [0], [0], [1], [0, 0, 1, 1], [], []>} : vector<4x16xf32>, vector<16x2xf32>, vector<4x2xf32> -> vector<4x2xf32>
    %cst_59 = arith.constant 0.000000e+00 : f32
    %272 = vector.broadcast %cst_59 : f32 to vector<4x2xf32>
    %273 = arith.maximumf %271, %272 : vector<4x2xf32>
    %c0_60 = arith.constant 0 : index
    %c0_61 = arith.constant 0 : index
    %274 = vector.load %arg9[%c0_60, %c0_61] : memref<16x4xf32, #tpu.memory_space<vmem>>, vector<16x4xf32>
    %cst_62 = arith.constant dense<0.000000e+00> : vector<16x2xf32>
    %275 = tpu.matmul %274, %273, %cst_62 {dimension_numbers = #tpu.dot_dimension_numbers<[1], [0], [0], [1], [0, 0, 1, 1], [], []>} : vector<16x4xf32>, vector<4x2xf32>, vector<16x2xf32> -> vector<16x2xf32>
    %cst_63 = arith.constant 0.000000e+00 : f32
    %276 = vector.broadcast %cst_63 : f32 to vector<16x2xf32>
    %277 = arith.subf %276, %275 : vector<16x2xf32>
    %278 = math.exp %277 : vector<16x2xf32>
    %cst_64 = arith.constant 1.000000e+00 : f32
    %279 = vector.broadcast %cst_64 : f32 to vector<16x2xf32>
    %280 = arith.addf %279, %278 : vector<16x2xf32>
    %cst_65 = arith.constant 1.000000e+00 : f32
    %281 = vector.broadcast %cst_65 : f32 to vector<16x2xf32>
    %282 = arith.divf %281, %280 : vector<16x2xf32>
    %c0_66 = arith.constant 0 : index
    %c0_67 = arith.constant 0 : index
    %283 = vector.load %arg11[%c0_66, %c0_67] : memref<2x1024xf32, #tpu.memory_space<vmem>>, vector<2x1024xf32>
    %cst_68 = arith.constant dense<0.000000e+00> : vector<16x1024xf32>
    %284 = tpu.matmul %282, %283, %cst_68 {dimension_numbers = #tpu.dot_dimension_numbers<[1], [0], [0], [1], [0, 0, 1, 1], [], []>} : vector<16x2xf32>, vector<2x1024xf32>, vector<16x1024xf32> -> vector<16x1024xf32>
    %285 = arith.mulf %267, %284 : vector<16x1024xf32>
    %286 = arith.addf %285, %136 : vector<16x1024xf32>
    %cst_69 = arith.constant 0.000000e+00 : f32
    %287 = vector.broadcast %cst_69 : f32 to vector<16x1024xf32>
    %288 = arith.maximumf %286, %287 : vector<16x1024xf32>
    %c0_70 = arith.constant 0 : index
    %c0_71 = arith.constant 0 : index
    %289 = vector.load %arg12[%c0_70, %c0_71] : memref<16x1024xf32, #tpu.memory_space<vmem>>, vector<16x1024xf32>
    tpu.vector_store %arg12[%c0_70, %c0_71], %288 {strides = array<i32>} : memref<16x1024xf32, #tpu.memory_space<vmem>>, vector<16x1024xf32>,
    return
  }
}

</mosaic_0001>

<llo_original>
// kernel: cifar_se_basic_block.1
$region0: #{cifar_se_basic_block.1}
  #allocation0 [shape = 'u32[]', space=smem, size = 0x4, offset = 0x4, fixed_abs, tag = 'smem constant byte address 0x4 - core index']
  #allocation1 [shape = 'u32[72,128]{1,0:T(1,128)}', space=vmem, size = 0x9000, scoped, tag = 'internal scratch']
  %s0 = inlined_call_operand.vmem [shape: f32[8,1024], index: 0, kind: input, shape index: {}]
  %s1 = inlined_call_operand.vmem [shape: f32[27,1024], index: 1, kind: input, shape index: {}]
  %s2 = inlined_call_operand.vmem [shape: bf16[32,216], index: 2, kind: input, shape index: {}]
  %s3 = inlined_call_operand.vmem [shape: f32[32,1], index: 3, kind: input, shape index: {}]
  %s4 = inlined_call_operand.vmem [shape: f32[32,1], index: 4, kind: input, shape index: {}]
  %s5 = inlined_call_operand.vmem [shape: bf16[16,432], index: 5, kind: input, shape index: {}]
  %s6 = inlined_call_operand.vmem [shape: f32[16,1], index: 6, kind: input, shape index: {}]
  %s7 = inlined_call_operand.vmem [shape: f32[16,1], index: 7, kind: input, shape index: {}]
  %s8 = inlined_call_operand.vmem [shape: f32[4,16], index: 8, kind: input, shape index: {}]
  %s9 = inlined_call_operand.vmem [shape: f32[16,4], index: 9, kind: input, shape index: {}]
  %s10 = inlined_call_operand.vmem [shape: f32[1024,2], index: 10, kind: input, shape index: {}]
  %s11 = inlined_call_operand.vmem [shape: f32[2,1024], index: 11, kind: input, shape index: {}]
  %s12 = inlined_call_operand.vmem [shape: f32[16,1024], index: 12, kind: output, shape index: {}]
  %s13 = sld [smem:[#allocation0]]
  $region58: #{cifar_se_basic_block.1} parent=0
    _
  %s15 = ssub.s32 1, %s13
  %s16 = scalar_select 0, %s15, %s13
  // Predicated region
  $region2: #{cifar_se_basic_block.1} parent=0 // pred_check
    _
  $region3: #{cifar_se_basic_block.1} parent=0 // pred_check_branch
    %18 = sbr.rel (0) target = $region5
  $region4: #{cifar_se_basic_block.1} parent=0 // pred_region
    _
  $region5: #{cifar_se_basic_block.1} parent=0 // pred_fallthru
    _
  // Predicated region
  $region6: #{cifar_se_basic_block.1} parent=0 // pred_check
    _
  $region7: #{cifar_se_basic_block.1} parent=0 // pred_check_branch
    %20 = sbr.rel (0) target = $region9
  $region8: #{cifar_se_basic_block.1} parent=0 // pred_region
    _
  $region9: #{cifar_se_basic_block.1} parent=0 // pred_fallthru
    _
  // Predicated region
  $region10: #{cifar_se_basic_block.1} parent=0 // pred_check
    _
  $region11: #{cifar_se_basic_block.1} parent=0 // pred_check_branch
    %22 = sbr.rel (0) target = $region13
  $region12: #{cifar_se_basic_block.1} parent=0 // pred_region
    _
  $region13: #{cifar_se_basic_block.1} parent=0 // pred_fallthru
    _
  // Predicated region
  $region14: #{cifar_se_basic_block.1} parent=0 // pred_check
    _
  $region15: #{cifar_se_basic_block.1} parent=0 // pred_check_branch
    %24 = sbr.rel (0) target = $region17
  $region16: #{cifar_se_basic_block.1} parent=0 // pred_region
    _
  $region17: #{cifar_se_basic_block.1} parent=0 // pred_fallthru
    _
  // Predicated region
  $region18: #{cifar_se_basic_block.1} parent=0 // pred_check
    _
  $region19: #{cifar_se_basic_block.1} parent=0 // pred_check_branch
    %26 = sbr.rel (0) target = $region21
  $region20: #{cifar_se_basic_block.1} parent=0 // pred_region
    _
  $region21: #{cifar_se_basic_block.1} parent=0 // pred_fallthru
    _
  // Predicated region
  $region22: #{cifar_se_basic_block.1} parent=0 // pred_check
    _
  $region23: #{cifar_se_basic_block.1} parent=0 // pred_check_branch
    %28 = sbr.rel (0) target = $region25
  $region24: #{cifar_se_basic_block.1} parent=0 // pred_region
    _
  $region25: #{cifar_se_basic_block.1} parent=0 // pred_fallthru
    _
  // Predicated region
  $region26: #{cifar_se_basic_block.1} parent=0 // pred_check
    _
  $region27: #{cifar_se_basic_block.1} parent=0 // pred_check_branch
    %30 = sbr.rel (0) target = $region29
  $region28: #{cifar_se_basic_block.1} parent=0 // pred_region
    _
  $region29: #{cifar_se_basic_block.1} parent=0 // pred_fallthru
    _
  // Predicated region
  $region30: #{cifar_se_basic_block.1} parent=0 // pred_check
    _
  $region31: #{cifar_se_basic_block.1} parent=0 // pred_check_branch
    %32 = sbr.rel (0) target = $region33
  $region32: #{cifar_se_basic_block.1} parent=0 // pred_region
    _
  $region33: #{cifar_se_basic_block.1} parent=0 // pred_fallthru
    _
  // Predicated region
  $region34: #{cifar_se_basic_block.1} parent=0 // pred_check
    _
  $region35: #{cifar_se_basic_block.1} parent=0 // pred_check_branch
    %34 = sbr.rel (0) target = $region37
  $region36: #{cifar_se_basic_block.1} parent=0 // pred_region
    _
  $region37: #{cifar_se_basic_block.1} parent=0 // pred_fallthru
    _
  // Predicated region
  $region38: #{cifar_se_basic_block.1} parent=0 // pred_check
    _
  $region39: #{cifar_se_basic_block.1} parent=0 // pred_check_branch
    %36 = sbr.rel (0) target = $region41
  $region40: #{cifar_se_basic_block.1} parent=0 // pred_region
    _
  $region41: #{cifar_se_basic_block.1} parent=0 // pred_fallthru
    _
  // Predicated region
  $region42: #{cifar_se_basic_block.1} parent=0 // pred_check
    _
  $region43: #{cifar_se_basic_block.1} parent=0 // pred_check_branch
    %38 = sbr.rel (0) target = $region45
  $region44: #{cifar_se_basic_block.1} parent=0 // pred_region
    _
  $region45: #{cifar_se_basic_block.1} parent=0 // pred_fallthru
    _
  // Predicated region
  $region46: #{cifar_se_basic_block.1} parent=0 // pred_check
    _
  $region47: #{cifar_se_basic_block.1} parent=0 // pred_check_branch
    %40 = sbr.rel (0) target = $region49
  $region48: #{cifar_se_basic_block.1} parent=0 // pred_region
    _
  $region49: #{cifar_se_basic_block.1} parent=0 // pred_fallthru
    _
  %v42 = vld [vmem:[%s0] sm:$0xff]
  %v43 = vld [vmem:[%s0 + $0x8] sm:$0xff]
  %v44 = vld [vmem:[%s0 + $0x10] sm:$0xff]
  %v45 = vld [vmem:[%s0 + $0x18] sm:$0xff]
  %v46 = vld [vmem:[%s0 + $0x20] sm:$0xff]
  %v47 = vld [vmem:[%s0 + $0x28] sm:$0xff]
  %v48 = vld [vmem:[%s0 + $0x30] sm:$0xff]
  %v49 = vld [vmem:[%s0 + $0x38] sm:$0xff]
  %v50 = vld [vmem:[%s1] sm:$0xff]
  %v51 = vld [vmem:[%s1 + $0x8] sm:$0xff]
  %v52 = vld [vmem:[%s1 + $0x10] sm:$0xff]
  %v53 = vld [vmem:[%s1 + $0x18] sm:$0xff]
  %v54 = vld [vmem:[%s1 + $0x20] sm:$0xff]
  %v55 = vld [vmem:[%s1 + $0x28] sm:$0xff]
  %v56 = vld [vmem:[%s1 + $0x30] sm:$0xff]
  %v57 = vld [vmem:[%s1 + $0x38] sm:$0xff]
  %v58 = vld [vmem:[%s1 + $0x40] sm:$0xff]
  %v59 = vld [vmem:[%s1 + $0x48] sm:$0xff]
  %v60 = vld [vmem:[%s1 + $0x50] sm:$0xff]
  %v61 = vld [vmem:[%s1 + $0x58] sm:$0xff]
  %v62 = vld [vmem:[%s1 + $0x60] sm:$0xff]
  %v63 = vld [vmem:[%s1 + $0x68] sm:$0xff]
  %v64 = vld [vmem:[%s1 + $0x70] sm:$0xff]
  %v65 = vld [vmem:[%s1 + $0x78] sm:$0xff]
  %v66 = vld [vmem:[%s1 + $0x80] sm:$0xff]
  %v67 = vld [vmem:[%s1 + $0x88] sm:$0xff]
  %v68 = vld [vmem:[%s1 + $0x90] sm:$0xff]
  %v69 = vld [vmem:[%s1 + $0x98] sm:$0xff]
  %v70 = vld [vmem:[%s1 + $0xa0] sm:$0xff]
  %v71 = vld [vmem:[%s1 + $0xa8] sm:$0xff]
  %v72 = vld [vmem:[%s1 + $0xb0] sm:$0xff]
  %v73 = vld [vmem:[%s1 + $0xb8] sm:$0xff]
  %v74 = vld [vmem:[%s1 + $0xc0] sm:$0x7]
  %v75 = vld [vmem:[%s1 + $0xc8] sm:$0x7]
  %v76 = vld [vmem:[%s1 + $0xd0] sm:$0x7]
  %v77 = vld [vmem:[%s1 + $0xd8] sm:$0x7]
  %v78 = vld [vmem:[%s1 + $0xe0] sm:$0x7]
  %v79 = vld [vmem:[%s1 + $0xe8] sm:$0x7]
  %v80 = vld [vmem:[%s1 + $0xf0] sm:$0x7]
  %v81 = vld [vmem:[%s1 + $0xf8] sm:$0x7]
  %82 = vrot.lane.b32.xlu0 %v42, 73
  %v83 = vpop.permute.xlu0 %82
  %84 = vrot.lane.b32.xlu0 %v43, 73
  %v85 = vpop.permute.xlu0 %84
  %86 = vrot.lane.b32.xlu0 %v44, 73
  %v87 = vpop.permute.xlu0 %86
  %88 = vrot.lane.b32.xlu0 %v45, 73
  %v89 = vpop.permute.xlu0 %88
  %90 = vrot.lane.b32.xlu0 %v46, 73
  %v91 = vpop.permute.xlu0 %90
  %92 = vrot.lane.b32.xlu0 %v47, 73
  %v93 = vpop.permute.xlu0 %92
  %94 = vrot.lane.b32.xlu0 %v48, 73
  %v95 = vpop.permute.xlu0 %94
  %96 = vrot.lane.b32.xlu0 %v49, 73
  %v97 = vpop.permute.xlu0 %96
  %v98 = vlaneseq
  %v99 = vand.u32 %v98, 127
  %vm100 = vcmp.lt.s32.totalorder %v99, 73
  %v101 = vsel %vm100, %v95, %v97
  %v102 = vsel %vm100, %v93, %v95
  %v103 = vsel %vm100, %v91, %v93
  %v104 = vsel %vm100, %v89, %v91
  %v105 = vsel %vm100, %v87, %v89
  %v106 = vsel %vm100, %v85, %v87
  %v107 = vsel %vm100, %v83, %v85
  %v108 = vsel %vm100, %v97, %v83
  %v109 = vperm.slane %v50, 0
  %v110 = vperm.slane %v51, 0
  %v111 = vperm.slane %v52, 0
  %v112 = vperm.slane %v53, 0
  %v113 = vperm.slane %v54, 0
  %v114 = vperm.slane %v55, 0
  %v115 = vperm.slane %v56, 0
  %v116 = vperm.slane %v57, 0
  %v117 = vmul.f32 %v108, %v109
  %v118 = vmul.f32 %v107, %v110
  %v119 = vmul.f32 %v106, %v111
  %v120 = vmul.f32 %v105, %v112
  %v121 = vmul.f32 %v104, %v113
  %v122 = vmul.f32 %v103, %v114
  %v123 = vmul.f32 %v102, %v115
  %v124 = vmul.f32 %v101, %v116
  %125 = vrot.lane.b32.xlu0 %v42, 72
  %v126 = vpop.permute.xlu0 %125
  %127 = vrot.lane.b32.xlu0 %v43, 72
  %v128 = vpop.permute.xlu0 %127
  %129 = vrot.lane.b32.xlu0 %v44, 72
  %v130 = vpop.permute.xlu0 %129
  %131 = vrot.lane.b32.xlu0 %v45, 72
  %v132 = vpop.permute.xlu0 %131
  %133 = vrot.lane.b32.xlu0 %v46, 72
  %v134 = vpop.permute.xlu0 %133
  %135 = vrot.lane.b32.xlu0 %v47, 72
  %v136 = vpop.permute.xlu0 %135
  %137 = vrot.lane.b32.xlu0 %v48, 72
  %v138 = vpop.permute.xlu0 %137
  %139 = vrot.lane.b32.xlu0 %v49, 72
  %v140 = vpop.permute.xlu0 %139
  %vm141 = vcmp.lt.s32.totalorder %v99, 72
  %v142 = vsel %vm141, %v138, %v140
  %v143 = vsel %vm141, %v136, %v138
  %v144 = vsel %vm141, %v134, %v136
  %v145 = vsel %vm141, %v132, %v134
  %v146 = vsel %vm141, %v130, %v132
  %v147 = vsel %vm141, %v128, %v130
  %v148 = vsel %vm141, %v126, %v128
  %v149 = vsel %vm141, %v140, %v126
  %v150 = vperm.slane %v50, 1
  %v151 = vperm.slane %v51, 1
  %v152 = vperm.slane %v52, 1
  %v153 = vperm.slane %v53, 1
  %v154 = vperm.slane %v54, 1
  %v155 = vperm.slane %v55, 1
  %v156 = vperm.slane %v56, 1
  %v157 = vperm.slane %v57, 1
  %v158 = vmul.f32 %v149, %v150
  %v159 = vmul.f32 %v148, %v151
  %v160 = vmul.f32 %v147, %v152
  %v161 = vmul.f32 %v146, %v153
  %v162 = vmul.f32 %v145, %v154
  %v163 = vmul.f32 %v144, %v155
  %v164 = vmul.f32 %v143, %v156
  %v165 = vmul.f32 %v142, %v157
  %166 = vrot.lane.b32.xlu0 %v42, 71
  %v167 = vpop.permute.xlu0 %166
  %168 = vrot.lane.b32.xlu0 %v43, 71
  %v169 = vpop.permute.xlu0 %168
  %170 = vrot.lane.b32.xlu0 %v44, 71
  %v171 = vpop.permute.xlu0 %170
  %172 = vrot.lane.b32.xlu0 %v45, 71
  %v173 = vpop.permute.xlu0 %172
  %174 = vrot.lane.b32.xlu0 %v46, 71
  %v175 = vpop.permute.xlu0 %174
  %176 = vrot.lane.b32.xlu0 %v47, 71
  %v177 = vpop.permute.xlu0 %176
  %178 = vrot.lane.b32.xlu0 %v48, 71
  %v179 = vpop.permute.xlu0 %178
  %180 = vrot.lane.b32.xlu0 %v49, 71
  %v181 = vpop.permute.xlu0 %180
  %vm182 = vcmp.lt.s32.totalorder %v99, 71
  %v183 = vsel %vm182, %v179, %v181
  %v184 = vsel %vm182, %v177, %v179
  %v185 = vsel %vm182, %v175, %v177
  %v186 = vsel %vm182, %v173, %v175
  %v187 = vsel %vm182, %v171, %v173
  %v188 = vsel %vm182, %v169, %v171
  %v189 = vsel %vm182, %v167, %v169
  %v190 = vsel %vm182, %v181, %v167
  %v191 = vperm.slane %v50, 2
  %v192 = vperm.slane %v51, 2
  %v193 = vperm.slane %v52, 2
  %v194 = vperm.slane %v53, 2
  %v195 = vperm.slane %v54, 2
  %v196 = vperm.slane %v55, 2
  %v197 = vperm.slane %v56, 2
  %v198 = vperm.slane %v57, 2
  %v199 = vmul.f32 %v190, %v191
  %v200 = vmul.f32 %v189, %v192
  %v201 = vmul.f32 %v188, %v193
  %v202 = vmul.f32 %v187, %v194
  %v203 = vmul.f32 %v186, %v195
  %v204 = vmul.f32 %v185, %v196
  %v205 = vmul.f32 %v184, %v197
  %v206 = vmul.f32 %v183, %v198
  %207 = vrot.lane.b32.xlu0 %v42, 65
  %v208 = vpop.permute.xlu0 %207
  %209 = vrot.lane.b32.xlu0 %v43, 65
  %v210 = vpop.permute.xlu0 %209
  %211 = vrot.lane.b32.xlu0 %v44, 65
  %v212 = vpop.permute.xlu0 %211
  %213 = vrot.lane.b32.xlu0 %v45, 65
  %v214 = vpop.permute.xlu0 %213
  %215 = vrot.lane.b32.xlu0 %v46, 65
  %v216 = vpop.permute.xlu0 %215
  %217 = vrot.lane.b32.xlu0 %v47, 65
  %v218 = vpop.permute.xlu0 %217
  %219 = vrot.lane.b32.xlu0 %v48, 65
  %v220 = vpop.permute.xlu0 %219
  %221 = vrot.lane.b32.xlu0 %v49, 65
  %v222 = vpop.permute.xlu0 %221
  %vm223 = vcmp.lt.s32.totalorder %v99, 65
  %v224 = vsel %vm223, %v220, %v222
  %v225 = vsel %vm223, %v218, %v220
  %v226 = vsel %vm223, %v216, %v218
  %v227 = vsel %vm223, %v214, %v216
  %v228 = vsel %vm223, %v212, %v214
  %v229 = vsel %vm223, %v210, %v212
  %v230 = vsel %vm223, %v208, %v210
  %v231 = vsel %vm223, %v222, %v208
  %v232 = vperm.slane %v50, 3
  %v233 = vperm.slane %v51, 3
  %v234 = vperm.slane %v52, 3
  %v235 = vperm.slane %v53, 3
  %v236 = vperm.slane %v54, 3
  %v237 = vperm.slane %v55, 3
  %v238 = vperm.slane %v56, 3
  %v239 = vperm.slane %v57, 3
  %v240 = vmul.f32 %v231, %v232
  %v241 = vmul.f32 %v230, %v233
  %v242 = vmul.f32 %v229, %v234
  %v243 = vmul.f32 %v228, %v235
  %v244 = vmul.f32 %v227, %v236
  %v245 = vmul.f32 %v226, %v237
  %v246 = vmul.f32 %v225, %v238
  %v247 = vmul.f32 %v224, %v239
  %248 = vrot.lane.b32.xlu0 %v42, 64
  %v249 = vpop.permute.xlu0 %248
  %250 = vrot.lane.b32.xlu0 %v43, 64
  %v251 = vpop.permute.xlu0 %250
  %252 = vrot.lane.b32.xlu0 %v44, 64
  %v253 = vpop.permute.xlu0 %252
  %254 = vrot.lane.b32.xlu0 %v45, 64
  %v255 = vpop.permute.xlu0 %254
  %256 = vrot.lane.b32.xlu0 %v46, 64
  %v257 = vpop.permute.xlu0 %256
  %258 = vrot.lane.b32.xlu0 %v47, 64
  %v259 = vpop.permute.xlu0 %258
  %260 = vrot.lane.b32.xlu0 %v48, 64
  %v261 = vpop.permute.xlu0 %260
  %262 = vrot.lane.b32.xlu0 %v49, 64
  %v263 = vpop.permute.xlu0 %262
  %vm264 = vcmp.lt.s32.totalorder %v99, 64
  %v265 = vsel %vm264, %v261, %v263
  %v266 = vsel %vm264, %v259, %v261
  %v267 = vsel %vm264, %v257, %v259
  %v268 = vsel %vm264, %v255, %v257
  %v269 = vsel %vm264, %v253, %v255
  %v270 = vsel %vm264, %v251, %v253
  %v271 = vsel %vm264, %v249, %v251
  %v272 = vsel %vm264, %v263, %v249
  %v273 = vperm.slane %v50, 4
  %v274 = vperm.slane %v51, 4
  %v275 = vperm.slane %v52, 4
  %v276 = vperm.slane %v53, 4
  %v277 = vperm.slane %v54, 4
  %v278 = vperm.slane %v55, 4
  %v279 = vperm.slane %v56, 4
  %v280 = vperm.slane %v57, 4
  %v281 = vmul.f32 %v272, %v273
  %v282 = vmul.f32 %v271, %v274
  %v283 = vmul.f32 %v270, %v275
  %v284 = vmul.f32 %v269, %v276
  %v285 = vmul.f32 %v268, %v277
  %v286 = vmul.f32 %v267, %v278
  %v287 = vmul.f32 %v266, %v279
  %v288 = vmul.f32 %v265, %v280
  %289 = vrot.lane.b32.xlu0 %v42, 63
  %v290 = vpop.permute.xlu0 %289
  %291 = vrot.lane.b32.xlu0 %v43, 63
  %v292 = vpop.permute.xlu0 %291
  %293 = vrot.lane.b32.xlu0 %v44, 63
  %v294 = vpop.permute.xlu0 %293
  %295 = vrot.lane.b32.xlu0 %v45, 63
  %v296 = vpop.permute.xlu0 %295
  %297 = vrot.lane.b32.xlu0 %v46, 63
  %v298 = vpop.permute.xlu0 %297
  %299 = vrot.lane.b32.xlu0 %v47, 63
  %v300 = vpop.permute.xlu0 %299
  %301 = vrot.lane.b32.xlu0 %v48, 63
  %v302 = vpop.permute.xlu0 %301
  %303 = vrot.lane.b32.xlu0 %v49, 63
  %v304 = vpop.permute.xlu0 %303
  %vm305 = vcmp.lt.s32.totalorder %v99, 63
  %v306 = vsel %vm305, %v302, %v304
  %v307 = vsel %vm305, %v300, %v302
  %v308 = vsel %vm305, %v298, %v300
  %v309 = vsel %vm305, %v296, %v298
  %v310 = vsel %vm305, %v294, %v296
  %v311 = vsel %vm305, %v292, %v294
  %v312 = vsel %vm305, %v290, %v292
  %v313 = vsel %vm305, %v304, %v290
  %v314 = vperm.slane %v50, 5
  %v315 = vperm.slane %v51, 5
  %v316 = vperm.slane %v52, 5
  %v317 = vperm.slane %v53, 5
  %v318 = vperm.slane %v54, 5
  %v319 = vperm.slane %v55, 5
  %v320 = vperm.slane %v56, 5
  %v321 = vperm.slane %v57, 5
  %v322 = vmul.f32 %v313, %v314
  %v323 = vmul.f32 %v312, %v315
  %v324 = vmul.f32 %v311, %v316
  %v325 = vmul.f32 %v310, %v317
  %v326 = vmul.f32 %v309, %v318
  %v327 = vmul.f32 %v308, %v319
  %v328 = vmul.f32 %v307, %v320
  %v329 = vmul.f32 %v306, %v321
  %330 = vrot.lane.b32.xlu0 %v42, 57
  %v331 = vpop.permute.xlu0 %330
  %332 = vrot.lane.b32.xlu0 %v43, 57
  %v333 = vpop.permute.xlu0 %332
  %334 = vrot.lane.b32.xlu0 %v44, 57
  %v335 = vpop.permute.xlu0 %334
  %336 = vrot.lane.b32.xlu0 %v45, 57
  %v337 = vpop.permute.xlu0 %336
  %338 = vrot.lane.b32.xlu0 %v46, 57
  %v339 = vpop.permute.xlu0 %338
  %340 = vrot.lane.b32.xlu0 %v47, 57
  %v341 = vpop.permute.xlu0 %340
  %342 = vrot.lane.b32.xlu0 %v48, 57
  %v343 = vpop.permute.xlu0 %342
  %344 = vrot.lane.b32.xlu0 %v49, 57
  %v345 = vpop.permute.xlu0 %344
  %vm346 = vcmp.lt.s32.totalorder %v99, 57
  %v347 = vsel %vm346, %v343, %v345
  %v348 = vsel %vm346, %v341, %v343
  %v349 = vsel %vm346, %v339, %v341
  %v350 = vsel %vm346, %v337, %v339
  %v351 = vsel %vm346, %v335, %v337
  %v352 = vsel %vm346, %v333, %v335
  %v353 = vsel %vm346, %v331, %v333
  %v354 = vsel %vm346, %v345, %v331
  %v355 = vperm.slane %v50, 6
  %v356 = vperm.slane %v51, 6
  %v357 = vperm.slane %v52, 6
  %v358 = vperm.slane %v53, 6
  %v359 = vperm.slane %v54, 6
  %v360 = vperm.slane %v55, 6
  %v361 = vperm.slane %v56, 6
  %v362 = vperm.slane %v57, 6
  %v363 = vmul.f32 %v354, %v355
  %v364 = vmul.f32 %v353, %v356
  %v365 = vmul.f32 %v352, %v357
  %v366 = vmul.f32 %v351, %v358
  %v367 = vmul.f32 %v350, %v359
  %v368 = vmul.f32 %v349, %v360
  %v369 = vmul.f32 %v348, %v361
  %v370 = vmul.f32 %v347, %v362
  %371 = vrot.lane.b32.xlu0 %v42, 56
  %v372 = vpop.permute.xlu0 %371
  %373 = vrot.lane.b32.xlu0 %v43, 56
  %v374 = vpop.permute.xlu0 %373
  %375 = vrot.lane.b32.xlu0 %v44, 56
  %v376 = vpop.permute.xlu0 %375
  %377 = vrot.lane.b32.xlu0 %v45, 56
  %v378 = vpop.permute.xlu0 %377
  %379 = vrot.lane.b32.xlu0 %v46, 56
  %v380 = vpop.permute.xlu0 %379
  %381 = vrot.lane.b32.xlu0 %v47, 56
  %v382 = vpop.permute.xlu0 %381
  %383 = vrot.lane.b32.xlu0 %v48, 56
  %v384 = vpop.permute.xlu0 %383
  %385 = vrot.lane.b32.xlu0 %v49, 56
  %v386 = vpop.permute.xlu0 %385
  %vm387 = vcmp.lt.s32.totalorder %v99, 56
  %v388 = vsel %vm387, %v384, %v386
  %v389 = vsel %vm387, %v382, %v384
  %v390 = vsel %vm387, %v380, %v382
  %v391 = vsel %vm387, %v378, %v380
  %v392 = vsel %vm387, %v376, %v378
  %v393 = vsel %vm387, %v374, %v376
  %v394 = vsel %vm387, %v372, %v374
  %v395 = vsel %vm387, %v386, %v372
  %v396 = vperm.slane %v50, 7
  %v397 = vperm.slane %v51, 7
  %v398 = vperm.slane %v52, 7
  %v399 = vperm.slane %v53, 7
  %v400 = vperm.slane %v54, 7
  %v401 = vperm.slane %v55, 7
  %v402 = vperm.slane %v56, 7
  %v403 = vperm.slane %v57, 7
  %v404 = vmul.f32 %v395, %v396
  %v405 = vmul.f32 %v394, %v397
  %v406 = vmul.f32 %v393, %v398
  %v407 = vmul.f32 %v392, %v399
  %v408 = vmul.f32 %v391, %v400
  %v409 = vmul.f32 %v390, %v401
  %v410 = vmul.f32 %v389, %v402
  %v411 = vmul.f32 %v388, %v403
  %412 = vrot.lane.b32.xlu0 %v42, 55
  %v413 = vpop.permute.xlu0 %412
  %414 = vrot.lane.b32.xlu0 %v43, 55
  %v415 = vpop.permute.xlu0 %414
  %416 = vrot.lane.b32.xlu0 %v44, 55
  %v417 = vpop.permute.xlu0 %416
  %418 = vrot.lane.b32.xlu0 %v45, 55
  %v419 = vpop.permute.xlu0 %418
  %420 = vrot.lane.b32.xlu0 %v46, 55
  %v421 = vpop.permute.xlu0 %420
  %422 = vrot.lane.b32.xlu0 %v47, 55
  %v423 = vpop.permute.xlu0 %422
  %424 = vrot.lane.b32.xlu0 %v48, 55
  %v425 = vpop.permute.xlu0 %424
  %426 = vrot.lane.b32.xlu0 %v49, 55
  %v427 = vpop.permute.xlu0 %426
  %vm428 = vcmp.lt.s32.totalorder %v99, 55
  %v429 = vsel %vm428, %v425, %v427
  %v430 = vsel %vm428, %v423, %v425
  %v431 = vsel %vm428, %v421, %v423
  %v432 = vsel %vm428, %v419, %v421
  %v433 = vsel %vm428, %v417, %v419
  %v434 = vsel %vm428, %v415, %v417
  %v435 = vsel %vm428, %v413, %v415
  %v436 = vsel %vm428, %v427, %v413
  %v437 = vperm.slane %v58, 0
  %v438 = vperm.slane %v59, 0
  %v439 = vperm.slane %v60, 0
  %v440 = vperm.slane %v61, 0
  %v441 = vperm.slane %v62, 0
  %v442 = vperm.slane %v63, 0
  %v443 = vperm.slane %v64, 0
  %v444 = vperm.slane %v65, 0
  %v445 = vmul.f32 %v436, %v437
  %v446 = vmul.f32 %v435, %v438
  %v447 = vmul.f32 %v434, %v439
  %v448 = vmul.f32 %v433, %v440
  %v449 = vmul.f32 %v432, %v441
  %v450 = vmul.f32 %v431, %v442
  %v451 = vmul.f32 %v430, %v443
  %v452 = vmul.f32 %v429, %v444
  %453 = vrot.lane.b32.xlu0 %v42, 9
  %v454 = vpop.permute.xlu0 %453
  %455 = vrot.lane.b32.xlu0 %v43, 9
  %v456 = vpop.permute.xlu0 %455
  %457 = vrot.lane.b32.xlu0 %v44, 9
  %v458 = vpop.permute.xlu0 %457
  %459 = vrot.lane.b32.xlu0 %v45, 9
  %v460 = vpop.permute.xlu0 %459
  %461 = vrot.lane.b32.xlu0 %v46, 9
  %v462 = vpop.permute.xlu0 %461
  %463 = vrot.lane.b32.xlu0 %v47, 9
  %v464 = vpop.permute.xlu0 %463
  %465 = vrot.lane.b32.xlu0 %v48, 9
  %v466 = vpop.permute.xlu0 %465
  %467 = vrot.lane.b32.xlu0 %v49, 9
  %v468 = vpop.permute.xlu0 %467
  %vm469 = vcmp.lt.s32.totalorder %v99, 9
  %v470 = vsel %vm469, %v466, %v468
  %v471 = vsel %vm469, %v464, %v466
  %v472 = vsel %vm469, %v462, %v464
  %v473 = vsel %vm469, %v460, %v462
  %v474 = vsel %vm469, %v458, %v460
  %v475 = vsel %vm469, %v456, %v458
  %v476 = vsel %vm469, %v454, %v456
  %v477 = vsel %vm469, %v468, %v454
  %v478 = vperm.slane %v58, 1
  %v479 = vperm.slane %v59, 1
  %v480 = vperm.slane %v60, 1
  %v481 = vperm.slane %v61, 1
  %v482 = vperm.slane %v62, 1
  %v483 = vperm.slane %v63, 1
  %v484 = vperm.slane %v64, 1
  %v485 = vperm.slane %v65, 1
  %v486 = vmul.f32 %v477, %v478
  %v487 = vmul.f32 %v476, %v479
  %v488 = vmul.f32 %v475, %v480
  %v489 = vmul.f32 %v474, %v481
  %v490 = vmul.f32 %v473, %v482
  %v491 = vmul.f32 %v472, %v483
  %v492 = vmul.f32 %v471, %v484
  %v493 = vmul.f32 %v470, %v485
  %494 = vrot.lane.b32.xlu0 %v42, 8
  %v495 = vpop.permute.xlu0 %494
  %496 = vrot.lane.b32.xlu0 %v43, 8
  %v497 = vpop.permute.xlu0 %496
  %498 = vrot.lane.b32.xlu0 %v44, 8
  %v499 = vpop.permute.xlu0 %498
  %500 = vrot.lane.b32.xlu0 %v45, 8
  %v501 = vpop.permute.xlu0 %500
  %502 = vrot.lane.b32.xlu0 %v46, 8
  %v503 = vpop.permute.xlu0 %502
  %504 = vrot.lane.b32.xlu0 %v47, 8
  %v505 = vpop.permute.xlu0 %504
  %506 = vrot.lane.b32.xlu0 %v48, 8
  %v507 = vpop.permute.xlu0 %506
  %508 = vrot.lane.b32.xlu0 %v49, 8
  %v509 = vpop.permute.xlu0 %508
  %vm510 = vcmp.lt.s32.totalorder %v99, 8
  %v511 = vsel %vm510, %v507, %v509
  %v512 = vsel %vm510, %v505, %v507
  %v513 = vsel %vm510, %v503, %v505
  %v514 = vsel %vm510, %v501, %v503
  %v515 = vsel %vm510, %v499, %v501
  %v516 = vsel %vm510, %v497, %v499
  %v517 = vsel %vm510, %v495, %v497
  %v518 = vsel %vm510, %v509, %v495
  %v519 = vperm.slane %v58, 2
  %v520 = vperm.slane %v59, 2
  %v521 = vperm.slane %v60, 2
  %v522 = vperm.slane %v61, 2
  %v523 = vperm.slane %v62, 2
  %v524 = vperm.slane %v63, 2
  %v525 = vperm.slane %v64, 2
  %v526 = vperm.slane %v65, 2
  %v527 = vmul.f32 %v518, %v519
  %v528 = vmul.f32 %v517, %v520
  %v529 = vmul.f32 %v516, %v521
  %v530 = vmul.f32 %v515, %v522
  %v531 = vmul.f32 %v514, %v523
  %v532 = vmul.f32 %v513, %v524
  %v533 = vmul.f32 %v512, %v525
  %v534 = vmul.f32 %v511, %v526
  %535 = vrot.lane.b32.xlu0 %v42, 7
  %v536 = vpop.permute.xlu0 %535
  %537 = vrot.lane.b32.xlu0 %v43, 7
  %v538 = vpop.permute.xlu0 %537
  %539 = vrot.lane.b32.xlu0 %v44, 7
  %v540 = vpop.permute.xlu0 %539
  %541 = vrot.lane.b32.xlu0 %v45, 7
  %v542 = vpop.permute.xlu0 %541
  %543 = vrot.lane.b32.xlu0 %v46, 7
  %v544 = vpop.permute.xlu0 %543
  %545 = vrot.lane.b32.xlu0 %v47, 7
  %v546 = vpop.permute.xlu0 %545
  %547 = vrot.lane.b32.xlu0 %v48, 7
  %v548 = vpop.permute.xlu0 %547
  %549 = vrot.lane.b32.xlu0 %v49, 7
  %v550 = vpop.permute.xlu0 %549
  %vm551 = vcmp.lt.s32.totalorder %v99, 7
  %v552 = vsel %vm551, %v548, %v550
  %v553 = vsel %vm551, %v546, %v548
  %v554 = vsel %vm551, %v544, %v546
  %v555 = vsel %vm551, %v542, %v544
  %v556 = vsel %vm551, %v540, %v542
  %v557 = vsel %vm551, %v538, %v540
  %v558 = vsel %vm551, %v536, %v538
  %v559 = vsel %vm551, %v550, %v536
  %v560 = vperm.slane %v58, 3
  %v561 = vperm.slane %v59, 3
  %v562 = vperm.slane %v60, 3
  %v563 = vperm.slane %v61, 3
  %v564 = vperm.slane %v62, 3
  %v565 = vperm.slane %v63, 3
  %v566 = vperm.slane %v64, 3
  %v567 = vperm.slane %v65, 3
  %v568 = vmul.f32 %v559, %v560
  %v569 = vmul.f32 %v558, %v561
  %v570 = vmul.f32 %v557, %v562
  %v571 = vmul.f32 %v556, %v563
  %v572 = vmul.f32 %v555, %v564
  %v573 = vmul.f32 %v554, %v565
  %v574 = vmul.f32 %v553, %v566
  %v575 = vmul.f32 %v552, %v567
  %576 = vrot.lane.b32.xlu0 %v42, 1
  %v577 = vpop.permute.xlu0 %576
  %578 = vrot.lane.b32.xlu0 %v43, 1
  %v579 = vpop.permute.xlu0 %578
  %580 = vrot.lane.b32.xlu0 %v44, 1
  %v581 = vpop.permute.xlu0 %580
  %582 = vrot.lane.b32.xlu0 %v45, 1
  %v583 = vpop.permute.xlu0 %582
  %584 = vrot.lane.b32.xlu0 %v46, 1
  %v585 = vpop.permute.xlu0 %584
  %586 = vrot.lane.b32.xlu0 %v47, 1
  %v587 = vpop.permute.xlu0 %586
  %588 = vrot.lane.b32.xlu0 %v48, 1
  %v589 = vpop.permute.xlu0 %588
  %590 = vrot.lane.b32.xlu0 %v49, 1
  %v591 = vpop.permute.xlu0 %590
  %vm592 = vcmp.lt.s32.totalorder %v99, 1
  %v593 = vsel %vm592, %v589, %v591
  %v594 = vsel %vm592, %v587, %v589
  %v595 = vsel %vm592, %v585, %v587
  %v596 = vsel %vm592, %v583, %v585
  %v597 = vsel %vm592, %v581, %v583
  %v598 = vsel %vm592, %v579, %v581
  %v599 = vsel %vm592, %v577, %v579
  %v600 = vsel %vm592, %v591, %v577
  %v601 = vperm.slane %v58, 4
  %v602 = vperm.slane %v59, 4
  %v603 = vperm.slane %v60, 4
  %v604 = vperm.slane %v61, 4
  %v605 = vperm.slane %v62, 4
  %v606 = vperm.slane %v63, 4
  %v607 = vperm.slane %v64, 4
  %v608 = vperm.slane %v65, 4
  %v609 = vmul.f32 %v600, %v601
  %v610 = vmul.f32 %v599, %v602
  %v611 = vmul.f32 %v598, %v603
  %v612 = vmul.f32 %v597, %v604
  %v613 = vmul.f32 %v596, %v605
  %v614 = vmul.f32 %v595, %v606
  %v615 = vmul.f32 %v594, %v607
  %v616 = vmul.f32 %v593, %v608
  %617 = vrot.lane.b32.xlu0 %v42, 127
  %v618 = vpop.permute.xlu0 %617
  %619 = vrot.lane.b32.xlu0 %v43, 127
  %v620 = vpop.permute.xlu0 %619
  %621 = vrot.lane.b32.xlu0 %v44, 127
  %v622 = vpop.permute.xlu0 %621
  %623 = vrot.lane.b32.xlu0 %v45, 127
  %v624 = vpop.permute.xlu0 %623
  %625 = vrot.lane.b32.xlu0 %v46, 127
  %v626 = vpop.permute.xlu0 %625
  %627 = vrot.lane.b32.xlu0 %v47, 127
  %v628 = vpop.permute.xlu0 %627
  %629 = vrot.lane.b32.xlu0 %v48, 127
  %v630 = vpop.permute.xlu0 %629
  %631 = vrot.lane.b32.xlu0 %v49, 127
  %v632 = vpop.permute.xlu0 %631
  %vm633 = vcmp.lt.s32.totalorder %v99, 127
  %v634 = vsel %vm633, %v630, %v632
  %v635 = vsel %vm633, %v628, %v630
  %v636 = vsel %vm633, %v626, %v628
  %v637 = vsel %vm633, %v624, %v626
  %v638 = vsel %vm633, %v622, %v624
  %v639 = vsel %vm633, %v620, %v622
  %v640 = vsel %vm633, %v618, %v620
  %v641 = vsel %vm633, %v632, %v618
  %v642 = vperm.slane %v58, 6
  %v643 = vperm.slane %v59, 6
  %v644 = vperm.slane %v60, 6
  %v645 = vperm.slane %v61, 6
  %v646 = vperm.slane %v62, 6
  %v647 = vperm.slane %v63, 6
  %v648 = vperm.slane %v64, 6
  %v649 = vperm.slane %v65, 6
  %v650 = vmul.f32 %v640, %v642
  %v651 = vmul.f32 %v639, %v643
  %v652 = vmul.f32 %v638, %v644
  %v653 = vmul.f32 %v637, %v645
  %v654 = vmul.f32 %v636, %v646
  %v655 = vmul.f32 %v635, %v647
  %v656 = vmul.f32 %v634, %v648
  %v657 = vmul.f32 %v641, %v649
  %658 = vrot.lane.b32.xlu0 %v42, 121
  %v659 = vpop.permute.xlu0 %658
  %660 = vrot.lane.b32.xlu0 %v43, 121
  %v661 = vpop.permute.xlu0 %660
  %662 = vrot.lane.b32.xlu0 %v44, 121
  %v663 = vpop.permute.xlu0 %662
  %664 = vrot.lane.b32.xlu0 %v45, 121
  %v665 = vpop.permute.xlu0 %664
  %666 = vrot.lane.b32.xlu0 %v46, 121
  %v667 = vpop.permute.xlu0 %666
  %668 = vrot.lane.b32.xlu0 %v47, 121
  %v669 = vpop.permute.xlu0 %668
  %670 = vrot.lane.b32.xlu0 %v48, 121
  %v671 = vpop.permute.xlu0 %670
  %672 = vrot.lane.b32.xlu0 %v49, 121
  %v673 = vpop.permute.xlu0 %672
  %vm674 = vcmp.lt.s32.totalorder %v99, 121
  %v675 = vsel %vm674, %v671, %v673
  %v676 = vsel %vm674, %v669, %v671
  %v677 = vsel %vm674, %v667, %v669
  %v678 = vsel %vm674, %v665, %v667
  %v679 = vsel %vm674, %v663, %v665
  %v680 = vsel %vm674, %v661, %v663
  %v681 = vsel %vm674, %v659, %v661
  %v682 = vsel %vm674, %v673, %v659
  %v683 = vperm.slane %v58, 7
  %v684 = vperm.slane %v59, 7
  %v685 = vperm.slane %v60, 7
  %v686 = vperm.slane %v61, 7
  %v687 = vperm.slane %v62, 7
  %v688 = vperm.slane %v63, 7
  %v689 = vperm.slane %v64, 7
  %v690 = vperm.slane %v65, 7
  %v691 = vmul.f32 %v681, %v683
  %v692 = vmul.f32 %v680, %v684
  %v693 = vmul.f32 %v679, %v685
  %v694 = vmul.f32 %v678, %v686
  %v695 = vmul.f32 %v677, %v687
  %v696 = vmul.f32 %v676, %v688
  %v697 = vmul.f32 %v675, %v689
  %v698 = vmul.f32 %v682, %v690
  %699 = vrot.lane.b32.xlu0 %v42, 120
  %v700 = vpop.permute.xlu0 %699
  %701 = vrot.lane.b32.xlu0 %v43, 120
  %v702 = vpop.permute.xlu0 %701
  %703 = vrot.lane.b32.xlu0 %v44, 120
  %v704 = vpop.permute.xlu0 %703
  %705 = vrot.lane.b32.xlu0 %v45, 120
  %v706 = vpop.permute.xlu0 %705
  %707 = vrot.lane.b32.xlu0 %v46, 120
  %v708 = vpop.permute.xlu0 %707
  %709 = vrot.lane.b32.xlu0 %v47, 120
  %v710 = vpop.permute.xlu0 %709
  %711 = vrot.lane.b32.xlu0 %v48, 120
  %v712 = vpop.permute.xlu0 %711
  %713 = vrot.lane.b32.xlu0 %v49, 120
  %v714 = vpop.permute.xlu0 %713
  %vm715 = vcmp.lt.s32.totalorder %v99, 120
  %v716 = vsel %vm715, %v712, %v714
  %v717 = vsel %vm715, %v710, %v712
  %v718 = vsel %vm715, %v708, %v710
  %v719 = vsel %vm715, %v706, %v708
  %v720 = vsel %vm715, %v704, %v706
  %v721 = vsel %vm715, %v702, %v704
  %v722 = vsel %vm715, %v700, %v702
  %v723 = vsel %vm715, %v714, %v700
  %v724 = vperm.slane %v66, 0
  %v725 = vperm.slane %v67, 0
  %v726 = vperm.slane %v68, 0
  %v727 = vperm.slane %v69, 0
  %v728 = vperm.slane %v70, 0
  %v729 = vperm.slane %v71, 0
  %v730 = vperm.slane %v72, 0
  %v731 = vperm.slane %v73, 0
  %v732 = vmul.f32 %v722, %v724
  %v733 = vmul.f32 %v721, %v725
  %v734 = vmul.f32 %v720, %v726
  %v735 = vmul.f32 %v719, %v727
  %v736 = vmul.f32 %v718, %v728
  %v737 = vmul.f32 %v717, %v729
  %v738 = vmul.f32 %v716, %v730
  %v739 = vmul.f32 %v723, %v731
  %740 = vrot.lane.b32.xlu0 %v42, 119
  %v741 = vpop.permute.xlu0 %740
  %742 = vrot.lane.b32.xlu0 %v43, 119
  %v743 = vpop.permute.xlu0 %742
  %744 = vrot.lane.b32.xlu0 %v44, 119
  %v745 = vpop.permute.xlu0 %744
  %746 = vrot.lane.b32.xlu0 %v45, 119
  %v747 = vpop.permute.xlu0 %746
  %748 = vrot.lane.b32.xlu0 %v46, 119
  %v749 = vpop.permute.xlu0 %748
  %750 = vrot.lane.b32.xlu0 %v47, 119
  %v751 = vpop.permute.xlu0 %750
  %752 = vrot.lane.b32.xlu0 %v48, 119
  %v753 = vpop.permute.xlu0 %752
  %754 = vrot.lane.b32.xlu0 %v49, 119
  %v755 = vpop.permute.xlu0 %754
  %vm756 = vcmp.lt.s32.totalorder %v99, 119
  %v757 = vsel %vm756, %v753, %v755
  %v758 = vsel %vm756, %v751, %v753
  %v759 = vsel %vm756, %v749, %v751
  %v760 = vsel %vm756, %v747, %v749
  %v761 = vsel %vm756, %v745, %v747
  %v762 = vsel %vm756, %v743, %v745
  %v763 = vsel %vm756, %v741, %v743
  %v764 = vsel %vm756, %v755, %v741
  %v765 = vperm.slane %v66, 1
  %v766 = vperm.slane %v67, 1
  %v767 = vperm.slane %v68, 1
  %v768 = vperm.slane %v69, 1
  %v769 = vperm.slane %v70, 1
  %v770 = vperm.slane %v71, 1
  %v771 = vperm.slane %v72, 1
  %v772 = vperm.slane %v73, 1
  %v773 = vmul.f32 %v763, %v765
  %v774 = vmul.f32 %v762, %v766
  %v775 = vmul.f32 %v761, %v767
  %v776 = vmul.f32 %v760, %v768
  %v777 = vmul.f32 %v759, %v769
  %v778 = vmul.f32 %v758, %v770
  %v779 = vmul.f32 %v757, %v771
  %v780 = vmul.f32 %v764, %v772
  %v781 = vperm.slane %v66, 2
  %v782 = vperm.slane %v67, 2
  %v783 = vperm.slane %v68, 2
  %v784 = vperm.slane %v69, 2
  %v785 = vperm.slane %v70, 2
  %v786 = vperm.slane %v71, 2
  %v787 = vperm.slane %v72, 2
  %v788 = vperm.slane %v73, 2
  %v789 = vmul.f32 %v107, %v781
  %v790 = vmul.f32 %v106, %v782
  %v791 = vmul.f32 %v105, %v783
  %v792 = vmul.f32 %v104, %v784
  %v793 = vmul.f32 %v103, %v785
  %v794 = vmul.f32 %v102, %v786
  %v795 = vmul.f32 %v101, %v787
  %v796 = vmul.f32 %v108, %v788
  %v797 = vperm.slane %v66, 3
  %v798 = vperm.slane %v67, 3
  %v799 = vperm.slane %v68, 3
  %v800 = vperm.slane %v69, 3
  %v801 = vperm.slane %v70, 3
  %v802 = vperm.slane %v71, 3
  %v803 = vperm.slane %v72, 3
  %v804 = vperm.slane %v73, 3
  %v805 = vmul.f32 %v148, %v797
  %v806 = vmul.f32 %v147, %v798
  %v807 = vmul.f32 %v146, %v799
  %v808 = vmul.f32 %v145, %v800
  %v809 = vmul.f32 %v144, %v801
  %v810 = vmul.f32 %v143, %v802
  %v811 = vmul.f32 %v142, %v803
  %v812 = vmul.f32 %v149, %v804
  %v813 = vperm.slane %v66, 4
  %v814 = vperm.slane %v67, 4
  %v815 = vperm.slane %v68, 4
  %v816 = vperm.slane %v69, 4
  %v817 = vperm.slane %v70, 4
  %v818 = vperm.slane %v71, 4
  %v819 = vperm.slane %v72, 4
  %v820 = vperm.slane %v73, 4
  %v821 = vmul.f32 %v189, %v813
  %v822 = vmul.f32 %v188, %v814
  %v823 = vmul.f32 %v187, %v815
  %v824 = vmul.f32 %v186, %v816
  %v825 = vmul.f32 %v185, %v817
  %v826 = vmul.f32 %v184, %v818
  %v827 = vmul.f32 %v183, %v819
  %v828 = vmul.f32 %v190, %v820
  %v829 = vperm.slane %v66, 5
  %v830 = vperm.slane %v67, 5
  %v831 = vperm.slane %v68, 5
  %v832 = vperm.slane %v69, 5
  %v833 = vperm.slane %v70, 5
  %v834 = vperm.slane %v71, 5
  %v835 = vperm.slane %v72, 5
  %v836 = vperm.slane %v73, 5
  %v837 = vmul.f32 %v230, %v829
  %v838 = vmul.f32 %v229, %v830
  %v839 = vmul.f32 %v228, %v831
  %v840 = vmul.f32 %v227, %v832
  %v841 = vmul.f32 %v226, %v833
  %v842 = vmul.f32 %v225, %v834
  %v843 = vmul.f32 %v224, %v835
  %v844 = vmul.f32 %v231, %v836
  %v845 = vperm.slane %v66, 6
  %v846 = vperm.slane %v67, 6
  %v847 = vperm.slane %v68, 6
  %v848 = vperm.slane %v69, 6
  %v849 = vperm.slane %v70, 6
  %v850 = vperm.slane %v71, 6
  %v851 = vperm.slane %v72, 6
  %v852 = vperm.slane %v73, 6
  %v853 = vmul.f32 %v271, %v845
  %v854 = vmul.f32 %v270, %v846
  %v855 = vmul.f32 %v269, %v847
  %v856 = vmul.f32 %v268, %v848
  %v857 = vmul.f32 %v267, %v849
  %v858 = vmul.f32 %v266, %v850
  %v859 = vmul.f32 %v265, %v851
  %v860 = vmul.f32 %v272, %v852
  %v861 = vperm.slane %v66, 7
  %v862 = vperm.slane %v67, 7
  %v863 = vperm.slane %v68, 7
  %v864 = vperm.slane %v69, 7
  %v865 = vperm.slane %v70, 7
  %v866 = vperm.slane %v71, 7
  %v867 = vperm.slane %v72, 7
  %v868 = vperm.slane %v73, 7
  %v869 = vmul.f32 %v312, %v861
  %v870 = vmul.f32 %v311, %v862
  %v871 = vmul.f32 %v310, %v863
  %v872 = vmul.f32 %v309, %v864
  %v873 = vmul.f32 %v308, %v865
  %v874 = vmul.f32 %v307, %v866
  %v875 = vmul.f32 %v306, %v867
  %v876 = vmul.f32 %v313, %v868
  %v877 = vperm.slane %v74, 0
  %v878 = vperm.slane %v75, 0
  %v879 = vperm.slane %v76, 0
  %v880 = vperm.slane %v77, 0
  %v881 = vperm.slane %v78, 0
  %v882 = vperm.slane %v79, 0
  %v883 = vperm.slane %v80, 0
  %v884 = vperm.slane %v81, 0
  %v885 = vmul.f32 %v353, %v877
  %v886 = vmul.f32 %v352, %v878
  %v887 = vmul.f32 %v351, %v879
  %v888 = vmul.f32 %v350, %v880
  %v889 = vmul.f32 %v349, %v881
  %v890 = vmul.f32 %v348, %v882
  %v891 = vmul.f32 %v347, %v883
  %v892 = vmul.f32 %v354, %v884
  %v893 = vperm.slane %v74, 1
  %v894 = vperm.slane %v75, 1
  %v895 = vperm.slane %v76, 1
  %v896 = vperm.slane %v77, 1
  %v897 = vperm.slane %v78, 1
  %v898 = vperm.slane %v79, 1
  %v899 = vperm.slane %v80, 1
  %v900 = vperm.slane %v81, 1
  %v901 = vmul.f32 %v394, %v893
  %v902 = vmul.f32 %v393, %v894
  %v903 = vmul.f32 %v392, %v895
  %v904 = vmul.f32 %v391, %v896
  %v905 = vmul.f32 %v390, %v897
  %v906 = vmul.f32 %v389, %v898
  %v907 = vmul.f32 %v388, %v899
  %v908 = vmul.f32 %v395, %v900
  %v909 = vperm.slane %v74, 2
  %v910 = vperm.slane %v75, 2
  %v911 = vperm.slane %v76, 2
  %v912 = vperm.slane %v77, 2
  %v913 = vperm.slane %v78, 2
  %v914 = vperm.slane %v79, 2
  %v915 = vperm.slane %v80, 2
  %v916 = vperm.slane %v81, 2
  %v917 = vmul.f32 %v435, %v909
  %v918 = vmul.f32 %v434, %v910
  %v919 = vmul.f32 %v433, %v911
  %v920 = vmul.f32 %v432, %v912
  %v921 = vmul.f32 %v431, %v913
  %v922 = vmul.f32 %v430, %v914
  %v923 = vmul.f32 %v429, %v915
  %v924 = vmul.f32 %v436, %v916
  %v925 = vpack.c.bf16 %v158, %v117
  %v926 = vpack.c.bf16 %v159, %v118
  %v927 = vpack.c.bf16 %v160, %v119
  %v928 = vpack.c.bf16 %v161, %v120
  %v929 = vpack.c.bf16 %v162, %v121
  %v930 = vpack.c.bf16 %v163, %v122
  %v931 = vpack.c.bf16 %v164, %v123
  %v932 = vpack.c.bf16 %v165, %v124
  %v933 = vpack.c.bf16 %v240, %v199
  %v934 = vpack.c.bf16 %v241, %v200
  %v935 = vpack.c.bf16 %v242, %v201
  %v936 = vpack.c.bf16 %v243, %v202
  %v937 = vpack.c.bf16 %v244, %v203
  %v938 = vpack.c.bf16 %v245, %v204
  %v939 = vpack.c.bf16 %v246, %v205
  %v940 = vpack.c.bf16 %v247, %v206
  %v941 = vpack.c.bf16 %v322, %v281
  %v942 = vpack.c.bf16 %v323, %v282
  %v943 = vpack.c.bf16 %v324, %v283
  %v944 = vpack.c.bf16 %v325, %v284
  %v945 = vpack.c.bf16 %v326, %v285
  %v946 = vpack.c.bf16 %v327, %v286
  %v947 = vpack.c.bf16 %v328, %v287
  %v948 = vpack.c.bf16 %v329, %v288
  %v949 = vpack.c.bf16 %v404, %v363
  %v950 = vpack.c.bf16 %v405, %v364
  %v951 = vpack.c.bf16 %v406, %v365
  %v952 = vpack.c.bf16 %v407, %v366
  %v953 = vpack.c.bf16 %v408, %v367
  %v954 = vpack.c.bf16 %v409, %v368
  %v955 = vpack.c.bf16 %v410, %v369
  %v956 = vpack.c.bf16 %v411, %v370
  %v957 = vpack.c.bf16 %v486, %v445
  %v958 = vpack.c.bf16 %v487, %v446
  %v959 = vpack.c.bf16 %v488, %v447
  %v960 = vpack.c.bf16 %v489, %v448
  %v961 = vpack.c.bf16 %v490, %v449
  %v962 = vpack.c.bf16 %v491, %v450
  %v963 = vpack.c.bf16 %v492, %v451
  %v964 = vpack.c.bf16 %v493, %v452
  %v965 = vpack.c.bf16 %v568, %v527
  %v966 = vpack.c.bf16 %v569, %v528
  %v967 = vpack.c.bf16 %v570, %v529
  %v968 = vpack.c.bf16 %v571, %v530
  %v969 = vpack.c.bf16 %v572, %v531
  %v970 = vpack.c.bf16 %v573, %v532
  %v971 = vpack.c.bf16 %v574, %v533
  %v972 = vpack.c.bf16 %v575, %v534
  %v973 = vpack.c.bf16 %v42, %v609
  %v974 = vpack.c.bf16 %v43, %v610
  %v975 = vpack.c.bf16 %v44, %v611
  %v976 = vpack.c.bf16 %v45, %v612
  %v977 = vpack.c.bf16 %v46, %v613
  %v978 = vpack.c.bf16 %v47, %v614
  %v979 = vpack.c.bf16 %v48, %v615
  %v980 = vpack.c.bf16 %v49, %v616
  %v981 = vpack.c.bf16 %v691, %v650
  %v982 = vpack.c.bf16 %v692, %v651
  %v983 = vpack.c.bf16 %v693, %v652
  %v984 = vpack.c.bf16 %v694, %v653
  %v985 = vpack.c.bf16 %v695, %v654
  %v986 = vpack.c.bf16 %v696, %v655
  %v987 = vpack.c.bf16 %v697, %v656
  %v988 = vpack.c.bf16 %v698, %v657
  %v989 = vpack.c.bf16 %v773, %v732
  %v990 = vpack.c.bf16 %v774, %v733
  %v991 = vpack.c.bf16 %v775, %v734
  %v992 = vpack.c.bf16 %v776, %v735
  %v993 = vpack.c.bf16 %v777, %v736
  %v994 = vpack.c.bf16 %v778, %v737
  %v995 = vpack.c.bf16 %v779, %v738
  %v996 = vpack.c.bf16 %v780, %v739
  %v997 = vpack.c.bf16 %v805, %v789
  %v998 = vpack.c.bf16 %v806, %v790
  %v999 = vpack.c.bf16 %v807, %v791
  %v1000 = vpack.c.bf16 %v808, %v792
  %v1001 = vpack.c.bf16 %v809, %v793
  %v1002 = vpack.c.bf16 %v810, %v794
  %v1003 = vpack.c.bf16 %v811, %v795
  %v1004 = vpack.c.bf16 %v812, %v796
  %v1005 = vpack.c.bf16 %v837, %v821
  %v1006 = vpack.c.bf16 %v838, %v822
  %v1007 = vpack.c.bf16 %v839, %v823
  %v1008 = vpack.c.bf16 %v840, %v824
  %v1009 = vpack.c.bf16 %v841, %v825
  %v1010 = vpack.c.bf16 %v842, %v826
  %v1011 = vpack.c.bf16 %v843, %v827
  %v1012 = vpack.c.bf16 %v844, %v828
  %v1013 = vpack.c.bf16 %v869, %v853
  %v1014 = vpack.c.bf16 %v870, %v854
  %v1015 = vpack.c.bf16 %v871, %v855
  %v1016 = vpack.c.bf16 %v872, %v856
  %v1017 = vpack.c.bf16 %v873, %v857
  %v1018 = vpack.c.bf16 %v874, %v858
  %v1019 = vpack.c.bf16 %v875, %v859
  %v1020 = vpack.c.bf16 %v876, %v860
  %v1021 = vpack.c.bf16 %v901, %v885
  %v1022 = vpack.c.bf16 %v902, %v886
  %v1023 = vpack.c.bf16 %v903, %v887
  %v1024 = vpack.c.bf16 %v904, %v888
  %v1025 = vpack.c.bf16 %v905, %v889
  %v1026 = vpack.c.bf16 %v906, %v890
  %v1027 = vpack.c.bf16 %v907, %v891
  %v1028 = vpack.c.bf16 %v908, %v892
  %v1029 = vpack.c.bf16 %v917, %v917
  %v1030 = vpack.c.bf16 %v918, %v918
  %v1031 = vpack.c.bf16 %v919, %v919
  %v1032 = vpack.c.bf16 %v920, %v920
  %v1033 = vpack.c.bf16 %v921, %v921
  %v1034 = vpack.c.bf16 %v922, %v922
  %v1035 = vpack.c.bf16 %v923, %v923
  %v1036 = vpack.c.bf16 %v924, %v924
  %v1037 = vld [vmem:[%s2] sm:$0xff]
  %v1038 = vld [vmem:[%s2 + $0x8] sm:$0xff]
  %v1039 = vld [vmem:[%s2 + $0x10] sm:$0xff]
  %v1040 = vld [vmem:[%s2 + $0x18] sm:$0xff]
  %v1045 = vunpack.c.l.b16 %v1037
  %v1046 = vunpack.c.h.b16 %v1037
  %v1047 = vunpack.c.l.b16 %v1038
  %v1048 = vunpack.c.h.b16 %v1038
  %v1049 = vunpack.c.l.b16 %v1039
  %v1050 = vunpack.c.h.b16 %v1039
  %v1051 = vunpack.c.l.b16 %v1040
  %v1052 = vunpack.c.h.b16 %v1040
  %v1053 = vpack.c.b16 %v1047, %v1045
  %v1054 = vpack.c.b16 %v1048, %v1046
  %v1055 = vpack.c.b16 %v1051, %v1049
  %v1056 = vpack.c.b16 %v1052, %v1050
  %vm1059 = vcmask 719872
  %v1061 = vsel %vm1059, %v1054, 0
  %v1064 = vsel %vm1059, %v1056, 0
  %vm1066 = vcmask 1043456
  %v1068 = vsel %vm1066, %v1029, 0
  %v1071 = vsel %vm1066, %v1030, 0
  %v1074 = vsel %vm1066, %v1031, 0
  %v1077 = vsel %vm1066, %v1032, 0
  %v1080 = vsel %vm1066, %v1033, 0
  %v1083 = vsel %vm1066, %v1034, 0
  %v1086 = vsel %vm1066, %v1035, 0
  %v1089 = vsel %vm1066, %v1036, 0
  %1091 = vmatpush.bf16.msra.mxu0 %v981
  %1092 = vmatpush.bf16.msra.mxu0 %v973
  %1093 = vmatpush.bf16.msra.mxu0 %v965
  %1094 = vmatpush.bf16.msra.mxu0 %v957
  %1095 = vmatpush.bf16.msra.mxu0 %v949
  %1096 = vmatpush.bf16.msra.mxu0 %v941
  %1097 = vmatpush.bf16.msra.mxu0 %v933
  %1098 = vmatpush.bf16.msra.mxu0 %v925
  %1099 = vmatmul.bf16.gmra.mxu0 %v1053
  %v1100 = vpop.f32.mrf.mxu0
  %v1101 = vadd.f32 0.0, %v1100
  %v1102 = vpop.f32.mrf.mxu0
  %v1103 = vadd.f32 0.0, %v1102
  %1104 = vmatmul.bf16.gmra.mxu0 %v1055
  %v1105 = vpop.f32.mrf.mxu0
  %v1106 = vadd.f32 0.0, %v1105
  %v1107 = vpop.f32.mrf.mxu0
  %v1108 = vadd.f32 0.0, %v1107
  %1109 = vdwg.mxu0
  %1110 = vmatpush.bf16.msra.mxu0 0
  %1111 = vmatpush.bf16.msra.mxu0 0
  %1112 = vmatpush.bf16.msra.mxu0 %v1068
  %1113 = vmatpush.bf16.msra.mxu0 %v1021
  %1114 = vmatpush.bf16.msra.mxu0 %v1013
  %1115 = vmatpush.bf16.msra.mxu0 %v1005
  %1116 = vmatpush.bf16.msra.mxu0 %v997
  %1117 = vmatpush.bf16.msra.mxu0 %v989
  %1118 = vmatmul.bf16.gmra.mxu0 %v1061
  %v1119 = vpop.f32.mrf.mxu0
  %v1120 = vadd.f32 %v1101, %v1119
  %v1121 = vpop.f32.mrf.mxu0
  %v1122 = vadd.f32 %v1103, %v1121
  %1123 = vmatmul.bf16.gmra.mxu0 %v1064
  %v1124 = vpop.f32.mrf.mxu0
  %v1125 = vadd.f32 %v1106, %v1124
  %v1126 = vpop.f32.mrf.mxu0
  %v1127 = vadd.f32 %v1108, %v1126
  %1128 = vdwg.mxu0
  %1129 = vmatpush.bf16.msra.mxu0 %v982
  %1130 = vmatpush.bf16.msra.mxu0 %v974
  %1131 = vmatpush.bf16.msra.mxu0 %v966
  %1132 = vmatpush.bf16.msra.mxu0 %v958
  %1133 = vmatpush.bf16.msra.mxu0 %v950
  %1134 = vmatpush.bf16.msra.mxu0 %v942
  %1135 = vmatpush.bf16.msra.mxu0 %v934
  %1136 = vmatpush.bf16.msra.mxu0 %v926
  %1137 = vmatmul.bf16.gmra.mxu0 %v1053
  %v1138 = vpop.f32.mrf.mxu0
  %v1139 = vadd.f32 0.0, %v1138
  %v1140 = vpop.f32.mrf.mxu0
  %v1141 = vadd.f32 0.0, %v1140
  %1142 = vmatmul.bf16.gmra.mxu0 %v1055
  %v1143 = vpop.f32.mrf.mxu0
  %v1144 = vadd.f32 0.0, %v1143
  %v1145 = vpop.f32.mrf.mxu0
  %v1146 = vadd.f32 0.0, %v1145
  %1147 = vdwg.mxu0
  %1148 = vmatpush.bf16.msra.mxu0 0
  %1149 = vmatpush.bf16.msra.mxu0 0
  %1150 = vmatpush.bf16.msra.mxu0 %v1071
  %1151 = vmatpush.bf16.msra.mxu0 %v1022
  %1152 = vmatpush.bf16.msra.mxu0 %v1014
  %1153 = vmatpush.bf16.msra.mxu0 %v1006
  %1154 = vmatpush.bf16.msra.mxu0 %v998
  %1155 = vmatpush.bf16.msra.mxu0 %v990
  %1156 = vmatmul.bf16.gmra.mxu0 %v1061
  %v1157 = vpop.f32.mrf.mxu0
  %v1158 = vadd.f32 %v1139, %v1157
  %v1159 = vpop.f32.mrf.mxu0
  %v1160 = vadd.f32 %v1141, %v1159
  %1161 = vmatmul.bf16.gmra.mxu0 %v1064
  %v1162 = vpop.f32.mrf.mxu0
  %v1163 = vadd.f32 %v1144, %v1162
  %v1164 = vpop.f32.mrf.mxu0
  %v1165 = vadd.f32 %v1146, %v1164
  %1166 = vdwg.mxu0
  %1167 = vmatpush.bf16.msra.mxu0 %v983
  %1168 = vmatpush.bf16.msra.mxu0 %v975
  %1169 = vmatpush.bf16.msra.mxu0 %v967
  %1170 = vmatpush.bf16.msra.mxu0 %v959
  %1171 = vmatpush.bf16.msra.mxu0 %v951
  %1172 = vmatpush.bf16.msra.mxu0 %v943
  %1173 = vmatpush.bf16.msra.mxu0 %v935
  %1174 = vmatpush.bf16.msra.mxu0 %v927
  %1175 = vmatmul.bf16.gmra.mxu0 %v1053
  %v1176 = vpop.f32.mrf.mxu0
  %v1177 = vadd.f32 0.0, %v1176
  %v1178 = vpop.f32.mrf.mxu0
  %v1179 = vadd.f32 0.0, %v1178
  %1180 = vmatmul.bf16.gmra.mxu0 %v1055
  %v1181 = vpop.f32.mrf.mxu0
  %v1182 = vadd.f32 0.0, %v1181
  %v1183 = vpop.f32.mrf.mxu0
  %v1184 = vadd.f32 0.0, %v1183
  %1185 = vdwg.mxu0
  %1186 = vmatpush.bf16.msra.mxu0 0
  %1187 = vmatpush.bf16.msra.mxu0 0
  %1188 = vmatpush.bf16.msra.mxu0 %v1074
  %1189 = vmatpush.bf16.msra.mxu0 %v1023
  %1190 = vmatpush.bf16.msra.mxu0 %v1015
  %1191 = vmatpush.bf16.msra.mxu0 %v1007
  %1192 = vmatpush.bf16.msra.mxu0 %v999
  %1193 = vmatpush.bf16.msra.mxu0 %v991
  %1194 = vmatmul.bf16.gmra.mxu0 %v1061
  %v1195 = vpop.f32.mrf.mxu0
  %v1196 = vadd.f32 %v1177, %v1195
  %v1197 = vpop.f32.mrf.mxu0
  %v1198 = vadd.f32 %v1179, %v1197
  %1199 = vmatmul.bf16.gmra.mxu0 %v1064
  %v1200 = vpop.f32.mrf.mxu0
  %v1201 = vadd.f32 %v1182, %v1200
  %v1202 = vpop.f32.mrf.mxu0
  %v1203 = vadd.f32 %v1184, %v1202
  %1204 = vdwg.mxu0
  %1205 = vmatpush.bf16.msra.mxu0 %v984
  %1206 = vmatpush.bf16.msra.mxu0 %v976
  %1207 = vmatpush.bf16.msra.mxu0 %v968
  %1208 = vmatpush.bf16.msra.mxu0 %v960
  %1209 = vmatpush.bf16.msra.mxu0 %v952
  %1210 = vmatpush.bf16.msra.mxu0 %v944
  %1211 = vmatpush.bf16.msra.mxu0 %v936
  %1212 = vmatpush.bf16.msra.mxu0 %v928
  %1213 = vmatmul.bf16.gmra.mxu0 %v1053
  %v1214 = vpop.f32.mrf.mxu0
  %v1215 = vadd.f32 0.0, %v1214
  %v1216 = vpop.f32.mrf.mxu0
  %v1217 = vadd.f32 0.0, %v1216
  %1218 = vmatmul.bf16.gmra.mxu0 %v1055
  %v1219 = vpop.f32.mrf.mxu0
  %v1220 = vadd.f32 0.0, %v1219
  %v1221 = vpop.f32.mrf.mxu0
  %v1222 = vadd.f32 0.0, %v1221
  %1223 = vdwg.mxu0
  %1224 = vmatpush.bf16.msra.mxu0 0
  %1225 = vmatpush.bf16.msra.mxu0 0
  %1226 = vmatpush.bf16.msra.mxu0 %v1077
  %1227 = vmatpush.bf16.msra.mxu0 %v1024
  %1228 = vmatpush.bf16.msra.mxu0 %v1016
  %1229 = vmatpush.bf16.msra.mxu0 %v1008
  %1230 = vmatpush.bf16.msra.mxu0 %v1000
  %1231 = vmatpush.bf16.msra.mxu0 %v992
  %1232 = vmatmul.bf16.gmra.mxu0 %v1061
  %v1233 = vpop.f32.mrf.mxu0
  %v1234 = vadd.f32 %v1215, %v1233
  %v1235 = vpop.f32.mrf.mxu0
  %v1236 = vadd.f32 %v1217, %v1235
  %1237 = vmatmul.bf16.gmra.mxu0 %v1064
  %v1238 = vpop.f32.mrf.mxu0
  %v1239 = vadd.f32 %v1220, %v1238
  %v1240 = vpop.f32.mrf.mxu0
  %v1241 = vadd.f32 %v1222, %v1240
  %1242 = vdwg.mxu0
  %1243 = vmatpush.bf16.msra.mxu0 %v985
  %1244 = vmatpush.bf16.msra.mxu0 %v977
  %1245 = vmatpush.bf16.msra.mxu0 %v969
  %1246 = vmatpush.bf16.msra.mxu0 %v961
  %1247 = vmatpush.bf16.msra.mxu0 %v953
  %1248 = vmatpush.bf16.msra.mxu0 %v945
  %1249 = vmatpush.bf16.msra.mxu0 %v937
  %1250 = vmatpush.bf16.msra.mxu0 %v929
  %1251 = vmatmul.bf16.gmra.mxu0 %v1053
  %v1252 = vpop.f32.mrf.mxu0
  %v1253 = vadd.f32 0.0, %v1252
  %v1254 = vpop.f32.mrf.mxu0
  %v1255 = vadd.f32 0.0, %v1254
  %1256 = vmatmul.bf16.gmra.mxu0 %v1055
  %v1257 = vpop.f32.mrf.mxu0
  %v1258 = vadd.f32 0.0, %v1257
  %v1259 = vpop.f32.mrf.mxu0
  %v1260 = vadd.f32 0.0, %v1259
  %1261 = vdwg.mxu0
  %1262 = vmatpush.bf16.msra.mxu0 0
  %1263 = vmatpush.bf16.msra.mxu0 0
  %1264 = vmatpush.bf16.msra.mxu0 %v1080
  %1265 = vmatpush.bf16.msra.mxu0 %v1025
  %1266 = vmatpush.bf16.msra.mxu0 %v1017
  %1267 = vmatpush.bf16.msra.mxu0 %v1009
  %1268 = vmatpush.bf16.msra.mxu0 %v1001
  %1269 = vmatpush.bf16.msra.mxu0 %v993
  %1270 = vmatmul.bf16.gmra.mxu0 %v1061
  %v1271 = vpop.f32.mrf.mxu0
  %v1272 = vadd.f32 %v1253, %v1271
  %v1273 = vpop.f32.mrf.mxu0
  %v1274 = vadd.f32 %v1255, %v1273
  %1275 = vmatmul.bf16.gmra.mxu0 %v1064
  %v1276 = vpop.f32.mrf.mxu0
  %v1277 = vadd.f32 %v1258, %v1276
  %v1278 = vpop.f32.mrf.mxu0
  %v1279 = vadd.f32 %v1260, %v1278
  %1280 = vdwg.mxu0
  %1281 = vmatpush.bf16.msra.mxu0 %v986
  %1282 = vmatpush.bf16.msra.mxu0 %v978
  %1283 = vmatpush.bf16.msra.mxu0 %v970
  %1284 = vmatpush.bf16.msra.mxu0 %v962
  %1285 = vmatpush.bf16.msra.mxu0 %v954
  %1286 = vmatpush.bf16.msra.mxu0 %v946
  %1287 = vmatpush.bf16.msra.mxu0 %v938
  %1288 = vmatpush.bf16.msra.mxu0 %v930
  %1289 = vmatmul.bf16.gmra.mxu0 %v1053
  %v1290 = vpop.f32.mrf.mxu0
  %v1291 = vadd.f32 0.0, %v1290
  %v1292 = vpop.f32.mrf.mxu0
  %v1293 = vadd.f32 0.0, %v1292
  %1294 = vmatmul.bf16.gmra.mxu0 %v1055
  %v1295 = vpop.f32.mrf.mxu0
  %v1296 = vadd.f32 0.0, %v1295
  %v1297 = vpop.f32.mrf.mxu0
  %v1298 = vadd.f32 0.0, %v1297
  %1299 = vdwg.mxu0
  %1300 = vmatpush.bf16.msra.mxu0 0
  %1301 = vmatpush.bf16.msra.mxu0 0
  %1302 = vmatpush.bf16.msra.mxu0 %v1083
  %1303 = vmatpush.bf16.msra.mxu0 %v1026
  %1304 = vmatpush.bf16.msra.mxu0 %v1018
  %1305 = vmatpush.bf16.msra.mxu0 %v1010
  %1306 = vmatpush.bf16.msra.mxu0 %v1002
  %1307 = vmatpush.bf16.msra.mxu0 %v994
  %1308 = vmatmul.bf16.gmra.mxu0 %v1061
  %v1309 = vpop.f32.mrf.mxu0
  %v1310 = vadd.f32 %v1291, %v1309
  %v1311 = vpop.f32.mrf.mxu0
  %v1312 = vadd.f32 %v1293, %v1311
  %1313 = vmatmul.bf16.gmra.mxu0 %v1064
  %v1314 = vpop.f32.mrf.mxu0
  %v1315 = vadd.f32 %v1296, %v1314
  %v1316 = vpop.f32.mrf.mxu0
  %v1317 = vadd.f32 %v1298, %v1316
  %1318 = vdwg.mxu0
  %1319 = vmatpush.bf16.msra.mxu0 %v987
  %1320 = vmatpush.bf16.msra.mxu0 %v979
  %1321 = vmatpush.bf16.msra.mxu0 %v971
  %1322 = vmatpush.bf16.msra.mxu0 %v963
  %1323 = vmatpush.bf16.msra.mxu0 %v955
  %1324 = vmatpush.bf16.msra.mxu0 %v947
  %1325 = vmatpush.bf16.msra.mxu0 %v939
  %1326 = vmatpush.bf16.msra.mxu0 %v931
  %1327 = vmatmul.bf16.gmra.mxu0 %v1053
  %v1328 = vpop.f32.mrf.mxu0
  %v1329 = vadd.f32 0.0, %v1328
  %v1330 = vpop.f32.mrf.mxu0
  %v1331 = vadd.f32 0.0, %v1330
  %1332 = vmatmul.bf16.gmra.mxu0 %v1055
  %v1333 = vpop.f32.mrf.mxu0
  %v1334 = vadd.f32 0.0, %v1333
  %v1335 = vpop.f32.mrf.mxu0
  %v1336 = vadd.f32 0.0, %v1335
  %1337 = vdwg.mxu0
  %1338 = vmatpush.bf16.msra.mxu0 0
  %1339 = vmatpush.bf16.msra.mxu0 0
  %1340 = vmatpush.bf16.msra.mxu0 %v1086
  %1341 = vmatpush.bf16.msra.mxu0 %v1027
  %1342 = vmatpush.bf16.msra.mxu0 %v1019
  %1343 = vmatpush.bf16.msra.mxu0 %v1011
  %1344 = vmatpush.bf16.msra.mxu0 %v1003
  %1345 = vmatpush.bf16.msra.mxu0 %v995
  %1346 = vmatmul.bf16.gmra.mxu0 %v1061
  %v1347 = vpop.f32.mrf.mxu0
  %v1348 = vadd.f32 %v1329, %v1347
  %v1349 = vpop.f32.mrf.mxu0
  %v1350 = vadd.f32 %v1331, %v1349
  %1351 = vmatmul.bf16.gmra.mxu0 %v1064
  %v1352 = vpop.f32.mrf.mxu0
  %v1353 = vadd.f32 %v1334, %v1352
  %v1354 = vpop.f32.mrf.mxu0
  %v1355 = vadd.f32 %v1336, %v1354
  %1356 = vdwg.mxu0
  %1357 = vmatpush.bf16.msra.mxu0 %v988
  %1358 = vmatpush.bf16.msra.mxu0 %v980
  %1359 = vmatpush.bf16.msra.mxu0 %v972
  %1360 = vmatpush.bf16.msra.mxu0 %v964
  %1361 = vmatpush.bf16.msra.mxu0 %v956
  %1362 = vmatpush.bf16.msra.mxu0 %v948
  %1363 = vmatpush.bf16.msra.mxu0 %v940
  %1364 = vmatpush.bf16.msra.mxu0 %v932
  %1365 = vmatmul.bf16.gmra.mxu0 %v1053
  %v1366 = vpop.f32.mrf.mxu0
  %v1367 = vadd.f32 0.0, %v1366
  %v1368 = vpop.f32.mrf.mxu0
  %v1369 = vadd.f32 0.0, %v1368
  %1370 = vmatmul.bf16.gmra.mxu0 %v1055
  %v1371 = vpop.f32.mrf.mxu0
  %v1372 = vadd.f32 0.0, %v1371
  %v1373 = vpop.f32.mrf.mxu0
  %v1374 = vadd.f32 0.0, %v1373
  %1375 = vdwg.mxu0
  %1376 = vmatpush.bf16.msra.mxu0 0
  %1377 = vmatpush.bf16.msra.mxu0 0
  %1378 = vmatpush.bf16.msra.mxu0 %v1089
  %1379 = vmatpush.bf16.msra.mxu0 %v1028
  %1380 = vmatpush.bf16.msra.mxu0 %v1020
  %1381 = vmatpush.bf16.msra.mxu0 %v1012
  %1382 = vmatpush.bf16.msra.mxu0 %v1004
  %1383 = vmatpush.bf16.msra.mxu0 %v996
  %1384 = vmatmul.bf16.gmra.mxu0 %v1061
  %v1385 = vpop.f32.mrf.mxu0
  %v1386 = vadd.f32 %v1367, %v1385
  %v1387 = vpop.f32.mrf.mxu0
  %v1388 = vadd.f32 %v1369, %v1387
  %1389 = vmatmul.bf16.gmra.mxu0 %v1064
  %v1390 = vpop.f32.mrf.mxu0
  %v1391 = vadd.f32 %v1372, %v1390
  %v1392 = vpop.f32.mrf.mxu0
  %v1393 = vadd.f32 %v1374, %v1392
  %1394 = vdwg.mxu0
  %v1395 = vld [vmem:[%s3] sm:$0xff]
  %v1396 = vld [vmem:[%s3 + $0x8] sm:$0xff]
  %v1397 = vld [vmem:[%s3 + $0x10] sm:$0xff]
  %v1398 = vld [vmem:[%s3 + $0x18] sm:$0xff]
  %v1399 = vld [vmem:[%s4] sm:$0xff]
  %v1400 = vld [vmem:[%s4 + $0x8] sm:$0xff]
  %v1401 = vld [vmem:[%s4 + $0x10] sm:$0xff]
  %v1402 = vld [vmem:[%s4 + $0x18] sm:$0xff]
  %v1403 = vadd.f32 %v1120, %v1158
  %v1404 = vadd.f32 %v1403, %v1196
  %v1405 = vadd.f32 %v1404, %v1234
  %v1406 = vadd.f32 %v1405, %v1272
  %v1407 = vadd.f32 %v1406, %v1310
  %v1408 = vadd.f32 %v1407, %v1348
  %v1409 = vadd.f32 %v1408, %v1386
  %1410 = vadd.xlane.f32.xlu0 %v1409
  %v1411 = vpop.xlane.xlu0 %1410
  %v1412 = vadd.f32 %v1122, %v1160
  %v1413 = vadd.f32 %v1412, %v1198
  %v1414 = vadd.f32 %v1413, %v1236
  %v1415 = vadd.f32 %v1414, %v1274
  %v1416 = vadd.f32 %v1415, %v1312
  %v1417 = vadd.f32 %v1416, %v1350
  %v1418 = vadd.f32 %v1417, %v1388
  %1419 = vadd.xlane.f32.xlu0 %v1418
  %v1420 = vpop.xlane.xlu0 %1419
  %v1421 = vadd.f32 %v1125, %v1163
  %v1422 = vadd.f32 %v1421, %v1201
  %v1423 = vadd.f32 %v1422, %v1239
  %v1424 = vadd.f32 %v1423, %v1277
  %v1425 = vadd.f32 %v1424, %v1315
  %v1426 = vadd.f32 %v1425, %v1353
  %v1427 = vadd.f32 %v1426, %v1391
  %1428 = vadd.xlane.f32.xlu0 %v1427
  %v1429 = vpop.xlane.xlu0 %1428
  %v1430 = vadd.f32 %v1127, %v1165
  %v1431 = vadd.f32 %v1430, %v1203
  %v1432 = vadd.f32 %v1431, %v1241
  %v1433 = vadd.f32 %v1432, %v1279
  %v1434 = vadd.f32 %v1433, %v1317
  %v1435 = vadd.f32 %v1434, %v1355
  %v1436 = vadd.f32 %v1435, %v1393
  %1437 = vadd.xlane.f32.xlu0 %v1436
  %v1438 = vpop.xlane.xlu0 %1437
  %v1439 = vmul.f32 %v1411, 0.0009765625
  %v1440 = vmul.f32 %v1420, 0.0009765625
  %v1441 = vmul.f32 %v1429, 0.0009765625
  %v1442 = vmul.f32 %v1438, 0.0009765625
  %v1443 = vsub.f32 %v1120, %v1439
  %v1444 = vsub.f32 %v1158, %v1439
  %v1445 = vsub.f32 %v1196, %v1439
  %v1446 = vsub.f32 %v1234, %v1439
  %v1447 = vsub.f32 %v1272, %v1439
  %v1448 = vsub.f32 %v1310, %v1439
  %v1449 = vsub.f32 %v1348, %v1439
  %v1450 = vsub.f32 %v1386, %v1439
  %v1451 = vsub.f32 %v1122, %v1440
  %v1452 = vsub.f32 %v1160, %v1440
  %v1453 = vsub.f32 %v1198, %v1440
  %v1454 = vsub.f32 %v1236, %v1440
  %v1455 = vsub.f32 %v1274, %v1440
  %v1456 = vsub.f32 %v1312, %v1440
  %v1457 = vsub.f32 %v1350, %v1440
  %v1458 = vsub.f32 %v1388, %v1440
  %v1459 = vsub.f32 %v1125, %v1441
  %v1460 = vsub.f32 %v1163, %v1441
  %v1461 = vsub.f32 %v1201, %v1441
  %v1462 = vsub.f32 %v1239, %v1441
  %v1463 = vsub.f32 %v1277, %v1441
  %v1464 = vsub.f32 %v1315, %v1441
  %v1465 = vsub.f32 %v1353, %v1441
  %v1466 = vsub.f32 %v1391, %v1441
  %v1467 = vsub.f32 %v1127, %v1442
  %v1468 = vsub.f32 %v1165, %v1442
  %v1469 = vsub.f32 %v1203, %v1442
  %v1470 = vsub.f32 %v1241, %v1442
  %v1471 = vsub.f32 %v1279, %v1442
  %v1472 = vsub.f32 %v1317, %v1442
  %v1473 = vsub.f32 %v1355, %v1442
  %v1474 = vsub.f32 %v1393, %v1442
  %v1475 = vmul.f32 %v1443, %v1443
  %v1476 = vmul.f32 %v1444, %v1444
  %v1477 = vmul.f32 %v1445, %v1445
  %v1478 = vmul.f32 %v1446, %v1446
  %v1479 = vmul.f32 %v1447, %v1447
  %v1480 = vmul.f32 %v1448, %v1448
  %v1481 = vmul.f32 %v1449, %v1449
  %v1482 = vmul.f32 %v1450, %v1450
  %v1483 = vmul.f32 %v1451, %v1451
  %v1484 = vmul.f32 %v1452, %v1452
  %v1485 = vmul.f32 %v1453, %v1453
  %v1486 = vmul.f32 %v1454, %v1454
  %v1487 = vmul.f32 %v1455, %v1455
  %v1488 = vmul.f32 %v1456, %v1456
  %v1489 = vmul.f32 %v1457, %v1457
  %v1490 = vmul.f32 %v1458, %v1458
  %v1491 = vmul.f32 %v1459, %v1459
  %v1492 = vmul.f32 %v1460, %v1460
  %v1493 = vmul.f32 %v1461, %v1461
  %v1494 = vmul.f32 %v1462, %v1462
  %v1495 = vmul.f32 %v1463, %v1463
  %v1496 = vmul.f32 %v1464, %v1464
  %v1497 = vmul.f32 %v1465, %v1465
  %v1498 = vmul.f32 %v1466, %v1466
  %v1499 = vmul.f32 %v1467, %v1467
  %v1500 = vmul.f32 %v1468, %v1468
  %v1501 = vmul.f32 %v1469, %v1469
  %v1502 = vmul.f32 %v1470, %v1470
  %v1503 = vmul.f32 %v1471, %v1471
  %v1504 = vmul.f32 %v1472, %v1472
  %v1505 = vmul.f32 %v1473, %v1473
  %v1506 = vmul.f32 %v1474, %v1474
  %v1507 = vadd.f32 %v1475, %v1476
  %v1508 = vadd.f32 %v1507, %v1477
  %v1509 = vadd.f32 %v1508, %v1478
  %v1510 = vadd.f32 %v1509, %v1479
  %v1511 = vadd.f32 %v1510, %v1480
  %v1512 = vadd.f32 %v1511, %v1481
  %v1513 = vadd.f32 %v1512, %v1482
  %1514 = vadd.xlane.f32.xlu0 %v1513
  %v1515 = vpop.xlane.xlu0 %1514
  %v1516 = vadd.f32 %v1483, %v1484
  %v1517 = vadd.f32 %v1516, %v1485
  %v1518 = vadd.f32 %v1517, %v1486
  %v1519 = vadd.f32 %v1518, %v1487
  %v1520 = vadd.f32 %v1519, %v1488
  %v1521 = vadd.f32 %v1520, %v1489
  %v1522 = vadd.f32 %v1521, %v1490
  %1523 = vadd.xlane.f32.xlu0 %v1522
  %v1524 = vpop.xlane.xlu0 %1523
  %v1525 = vadd.f32 %v1491, %v1492
  %v1526 = vadd.f32 %v1525, %v1493
  %v1527 = vadd.f32 %v1526, %v1494
  %v1528 = vadd.f32 %v1527, %v1495
  %v1529 = vadd.f32 %v1528, %v1496
  %v1530 = vadd.f32 %v1529, %v1497
  %v1531 = vadd.f32 %v1530, %v1498
  %1532 = vadd.xlane.f32.xlu0 %v1531
  %v1533 = vpop.xlane.xlu0 %1532
  %v1534 = vadd.f32 %v1499, %v1500
  %v1535 = vadd.f32 %v1534, %v1501
  %v1536 = vadd.f32 %v1535, %v1502
  %v1537 = vadd.f32 %v1536, %v1503
  %v1538 = vadd.f32 %v1537, %v1504
  %v1539 = vadd.f32 %v1538, %v1505
  %v1540 = vadd.f32 %v1539, %v1506
  %1541 = vadd.xlane.f32.xlu0 %v1540
  %v1542 = vpop.xlane.xlu0 %1541
  %v1543 = vmul.f32 %v1515, 0.0009765625
  %v1544 = vmul.f32 %v1524, 0.0009765625
  %v1545 = vmul.f32 %v1533, 0.0009765625
  %v1546 = vmul.f32 %v1542, 0.0009765625
  %v1547 = vadd.f32 %v1543, 1e-05
  %v1548 = vadd.f32 %v1544, 1e-05
  %v1549 = vadd.f32 %v1545, 1e-05
  %v1550 = vadd.f32 %v1546, 1e-05
  %v1551 = vrsqrt.pop %v1547
  %v1552 = vmul.f32 %v1551, %v1547
  %v1553 = vmul.f32 %v1552, %v1551
  %v1554 = vmul.f32 0.5, %v1553
  %v1555 = vsub.f32 1.5, %v1554
  %v1556 = vmul.f32 %v1551, %v1555
  %vm1557 = vweird.f32 %v1547
  %vm1558 = vweird.f32 %v1551
  %vm1559 = vmor %vm1557, %vm1558
  %v1560 = vsel %vm1559, %v1551, %v1556
  %v1561 = vrsqrt.pop %v1548
  %v1562 = vmul.f32 %v1561, %v1548
  %v1563 = vmul.f32 %v1562, %v1561
  %v1564 = vmul.f32 0.5, %v1563
  %v1565 = vsub.f32 1.5, %v1564
  %v1566 = vmul.f32 %v1561, %v1565
  %vm1567 = vweird.f32 %v1548
  %vm1568 = vweird.f32 %v1561
  %vm1569 = vmor %vm1567, %vm1568
  %v1570 = vsel %vm1569, %v1561, %v1566
  %v1571 = vrsqrt.pop %v1549
  %v1572 = vmul.f32 %v1571, %v1549
  %v1573 = vmul.f32 %v1572, %v1571
  %v1574 = vmul.f32 0.5, %v1573
  %v1575 = vsub.f32 1.5, %v1574
  %v1576 = vmul.f32 %v1571, %v1575
  %vm1577 = vweird.f32 %v1549
  %vm1578 = vweird.f32 %v1571
  %vm1579 = vmor %vm1577, %vm1578
  %v1580 = vsel %vm1579, %v1571, %v1576
  %v1581 = vrsqrt.pop %v1550
  %v1582 = vmul.f32 %v1581, %v1550
  %v1583 = vmul.f32 %v1582, %v1581
  %v1584 = vmul.f32 0.5, %v1583
  %v1585 = vsub.f32 1.5, %v1584
  %v1586 = vmul.f32 %v1581, %v1585
  %vm1587 = vweird.f32 %v1550
  %vm1588 = vweird.f32 %v1581
  %vm1589 = vmor %vm1587, %vm1588
  %v1590 = vsel %vm1589, %v1581, %v1586
  %v1591 = vmul.f32 %v1560, %v1395
  %v1592 = vmul.f32 %v1570, %v1396
  %v1593 = vmul.f32 %v1580, %v1397
  %v1594 = vmul.f32 %v1590, %v1398
  %1596 = vset.pattern.permute.xlu0 0
  %1597 = vperm.xlu0 %1596, %v1591
  %v1598 = vpop.permute.xlu0 %1597
  %1601 = vset.pattern.permute.xlu0 0
  %1602 = vperm.xlu0 %1601, %v1592
  %v1603 = vpop.permute.xlu0 %1602
  %1606 = vset.pattern.permute.xlu0 0
  %1607 = vperm.xlu0 %1606, %v1593
  %v1608 = vpop.permute.xlu0 %1607
  %1611 = vset.pattern.permute.xlu0 0
  %1612 = vperm.xlu0 %1611, %v1594
  %v1613 = vpop.permute.xlu0 %1612
  %v1615 = vmul.f32 %v1443, %v1598
  %v1616 = vmul.f32 %v1444, %v1598
  %v1617 = vmul.f32 %v1445, %v1598
  %v1618 = vmul.f32 %v1446, %v1598
  %v1619 = vmul.f32 %v1447, %v1598
  %v1620 = vmul.f32 %v1448, %v1598
  %v1621 = vmul.f32 %v1449, %v1598
  %v1622 = vmul.f32 %v1450, %v1598
  %v1623 = vmul.f32 %v1451, %v1603
  %v1624 = vmul.f32 %v1452, %v1603
  %v1625 = vmul.f32 %v1453, %v1603
  %v1626 = vmul.f32 %v1454, %v1603
  %v1627 = vmul.f32 %v1455, %v1603
  %v1628 = vmul.f32 %v1456, %v1603
  %v1629 = vmul.f32 %v1457, %v1603
  %v1630 = vmul.f32 %v1458, %v1603
  %v1631 = vmul.f32 %v1459, %v1608
  %v1632 = vmul.f32 %v1460, %v1608
  %v1633 = vmul.f32 %v1461, %v1608
  %v1634 = vmul.f32 %v1462, %v1608
  %v1635 = vmul.f32 %v1463, %v1608
  %v1636 = vmul.f32 %v1464, %v1608
  %v1637 = vmul.f32 %v1465, %v1608
  %v1638 = vmul.f32 %v1466, %v1608
  %v1639 = vmul.f32 %v1467, %v1613
  %v1640 = vmul.f32 %v1468, %v1613
  %v1641 = vmul.f32 %v1469, %v1613
  %v1642 = vmul.f32 %v1470, %v1613
  %v1643 = vmul.f32 %v1471, %v1613
  %v1644 = vmul.f32 %v1472, %v1613
  %v1645 = vmul.f32 %v1473, %v1613
  %v1646 = vmul.f32 %v1474, %v1613
  %1648 = vset.pattern.permute.xlu0 0
  %1649 = vperm.xlu0 %1648, %v1399
  %v1650 = vpop.permute.xlu0 %1649
  %1653 = vset.pattern.permute.xlu0 0
  %1654 = vperm.xlu0 %1653, %v1400
  %v1655 = vpop.permute.xlu0 %1654
  %1658 = vset.pattern.permute.xlu0 0
  %1659 = vperm.xlu0 %1658, %v1401
  %v1660 = vpop.permute.xlu0 %1659
  %1663 = vset.pattern.permute.xlu0 0
  %1664 = vperm.xlu0 %1663, %v1402
  %v1665 = vpop.permute.xlu0 %1664
  %v1667 = vadd.f32 %v1615, %v1650
  %v1668 = vadd.f32 %v1616, %v1650
  %v1669 = vadd.f32 %v1617, %v1650
  %v1670 = vadd.f32 %v1618, %v1650
  %v1671 = vadd.f32 %v1619, %v1650
  %v1672 = vadd.f32 %v1620, %v1650
  %v1673 = vadd.f32 %v1621, %v1650
  %v1674 = vadd.f32 %v1622, %v1650
  %v1675 = vadd.f32 %v1623, %v1655
  %v1676 = vadd.f32 %v1624, %v1655
  %v1677 = vadd.f32 %v1625, %v1655
  %v1678 = vadd.f32 %v1626, %v1655
  %v1679 = vadd.f32 %v1627, %v1655
  %v1680 = vadd.f32 %v1628, %v1655
  %v1681 = vadd.f32 %v1629, %v1655
  %v1682 = vadd.f32 %v1630, %v1655
  %v1683 = vadd.f32 %v1631, %v1660
  %v1684 = vadd.f32 %v1632, %v1660
  %v1685 = vadd.f32 %v1633, %v1660
  %v1686 = vadd.f32 %v1634, %v1660
  %v1687 = vadd.f32 %v1635, %v1660
  %v1688 = vadd.f32 %v1636, %v1660
  %v1689 = vadd.f32 %v1637, %v1660
  %v1690 = vadd.f32 %v1638, %v1660
  %v1691 = vadd.f32 %v1639, %v1665
  %v1692 = vadd.f32 %v1640, %v1665
  %v1693 = vadd.f32 %v1641, %v1665
  %v1694 = vadd.f32 %v1642, %v1665
  %v1695 = vadd.f32 %v1643, %v1665
  %v1696 = vadd.f32 %v1644, %v1665
  %v1697 = vadd.f32 %v1645, %v1665
  %v1698 = vadd.f32 %v1646, %v1665
  %v1699 = vmax.f32 %v1667, 0.0
  %v1700 = vmax.f32 %v1668, 0.0
  %v1701 = vmax.f32 %v1669, 0.0
  %v1702 = vmax.f32 %v1670, 0.0
  %v1703 = vmax.f32 %v1671, 0.0
  %v1704 = vmax.f32 %v1672, 0.0
  %v1705 = vmax.f32 %v1673, 0.0
  %v1706 = vmax.f32 %v1674, 0.0
  %v1707 = vmax.f32 %v1675, 0.0
  %v1708 = vmax.f32 %v1676, 0.0
  %v1709 = vmax.f32 %v1677, 0.0
  %v1710 = vmax.f32 %v1678, 0.0
  %v1711 = vmax.f32 %v1679, 0.0
  %v1712 = vmax.f32 %v1680, 0.0
  %v1713 = vmax.f32 %v1681, 0.0
  %v1714 = vmax.f32 %v1682, 0.0
  %1715 = vrot.lane.b32.xlu0 %v1699, 73
  %v1716 = vpop.permute.xlu0 %1715
  %1717 = vrot.lane.b32.xlu0 %v1707, 73
  %v1718 = vpop.permute.xlu0 %1717
  %1719 = vrot.lane.b32.xlu0 %v1700, 73
  %v1720 = vpop.permute.xlu0 %1719
  %1721 = vrot.lane.b32.xlu0 %v1708, 73
  %v1722 = vpop.permute.xlu0 %1721
  %1723 = vrot.lane.b32.xlu0 %v1701, 73
  %v1724 = vpop.permute.xlu0 %1723
  %1725 = vrot.lane.b32.xlu0 %v1709, 73
  %v1726 = vpop.permute.xlu0 %1725
  %1727 = vrot.lane.b32.xlu0 %v1702, 73
  %v1728 = vpop.permute.xlu0 %1727
  %1729 = vrot.lane.b32.xlu0 %v1710, 73
  %v1730 = vpop.permute.xlu0 %1729
  %1731 = vrot.lane.b32.xlu0 %v1703, 73
  %v1732 = vpop.permute.xlu0 %1731
  %1733 = vrot.lane.b32.xlu0 %v1711, 73
  %v1734 = vpop.permute.xlu0 %1733
  %1735 = vrot.lane.b32.xlu0 %v1704, 73
  %v1736 = vpop.permute.xlu0 %1735
  %1737 = vrot.lane.b32.xlu0 %v1712, 73
  %v1738 = vpop.permute.xlu0 %1737
  %1739 = vrot.lane.b32.xlu0 %v1705, 73
  %v1740 = vpop.permute.xlu0 %1739
  %1741 = vrot.lane.b32.xlu0 %v1713, 73
  %v1742 = vpop.permute.xlu0 %1741
  %1743 = vrot.lane.b32.xlu0 %v1706, 73
  %v1744 = vpop.permute.xlu0 %1743
  %1745 = vrot.lane.b32.xlu0 %v1714, 73
  %v1746 = vpop.permute.xlu0 %1745
  %v1747 = vsel %vm100, %v1740, %v1744
  %v1748 = vsel %vm100, %v1742, %v1746
  %v1749 = vsel %vm100, %v1736, %v1740
  %v1750 = vsel %vm100, %v1738, %v1742
  %v1751 = vsel %vm100, %v1732, %v1736
  %v1752 = vsel %vm100, %v1734, %v1738
  %v1753 = vsel %vm100, %v1728, %v1732
  %v1754 = vsel %vm100, %v1730, %v1734
  %v1755 = vsel %vm100, %v1724, %v1728
  %v1756 = vsel %vm100, %v1726, %v1730
  %v1757 = vsel %vm100, %v1720, %v1724
  %v1758 = vsel %vm100, %v1722, %v1726
  %v1759 = vsel %vm100, %v1716, %v1720
  %v1760 = vsel %vm100, %v1718, %v1722
  %v1761 = vsel %vm100, %v1744, %v1716
  %v1762 = vsel %vm100, %v1746, %v1718
  %v1763 = vmul.f32 %v1761, %v109
  %v1764 = vmul.f32 %v1759, %v110
  %v1765 = vmul.f32 %v1757, %v111
  %v1766 = vmul.f32 %v1755, %v112
  %v1767 = vmul.f32 %v1753, %v113
  %v1768 = vmul.f32 %v1751, %v114
  %v1769 = vmul.f32 %v1749, %v115
  %v1770 = vmul.f32 %v1747, %v116
  %v1771 = vmul.f32 %v1762, %v109
  %v1772 = vmul.f32 %v1760, %v110
  %v1773 = vmul.f32 %v1758, %v111
  %v1774 = vmul.f32 %v1756, %v112
  %v1775 = vmul.f32 %v1754, %v113
  %v1776 = vmul.f32 %v1752, %v114
  %v1777 = vmul.f32 %v1750, %v115
  %v1778 = vmul.f32 %v1748, %v116
  %1779 = vrot.lane.b32.xlu0 %v1699, 72
  %v1780 = vpop.permute.xlu0 %1779
  %1781 = vrot.lane.b32.xlu0 %v1707, 72
  %v1782 = vpop.permute.xlu0 %1781
  %1783 = vrot.lane.b32.xlu0 %v1700, 72
  %v1784 = vpop.permute.xlu0 %1783
  %1785 = vrot.lane.b32.xlu0 %v1708, 72
  %v1786 = vpop.permute.xlu0 %1785
  %1787 = vrot.lane.b32.xlu0 %v1701, 72
  %v1788 = vpop.permute.xlu0 %1787
  %1789 = vrot.lane.b32.xlu0 %v1709, 72
  %v1790 = vpop.permute.xlu0 %1789
  %1791 = vrot.lane.b32.xlu0 %v1702, 72
  %v1792 = vpop.permute.xlu0 %1791
  %1793 = vrot.lane.b32.xlu0 %v1710, 72
  %v1794 = vpop.permute.xlu0 %1793
  %1795 = vrot.lane.b32.xlu0 %v1703, 72
  %v1796 = vpop.permute.xlu0 %1795
  %1797 = vrot.lane.b32.xlu0 %v1711, 72
  %v1798 = vpop.permute.xlu0 %1797
  %1799 = vrot.lane.b32.xlu0 %v1704, 72
  %v1800 = vpop.permute.xlu0 %1799
  %1801 = vrot.lane.b32.xlu0 %v1712, 72
  %v1802 = vpop.permute.xlu0 %1801
  %1803 = vrot.lane.b32.xlu0 %v1705, 72
  %v1804 = vpop.permute.xlu0 %1803
  %1805 = vrot.lane.b32.xlu0 %v1713, 72
  %v1806 = vpop.permute.xlu0 %1805
  %1807 = vrot.lane.b32.xlu0 %v1706, 72
  %v1808 = vpop.permute.xlu0 %1807
  %1809 = vrot.lane.b32.xlu0 %v1714, 72
  %v1810 = vpop.permute.xlu0 %1809
  %v1811 = vsel %vm141, %v1804, %v1808
  %v1812 = vsel %vm141, %v1806, %v1810
  %v1813 = vsel %vm141, %v1800, %v1804
  %v1814 = vsel %vm141, %v1802, %v1806
  %v1815 = vsel %vm141, %v1796, %v1800
  %v1816 = vsel %vm141, %v1798, %v1802
  %v1817 = vsel %vm141, %v1792, %v1796
  %v1818 = vsel %vm141, %v1794, %v1798
  %v1819 = vsel %vm141, %v1788, %v1792
  %v1820 = vsel %vm141, %v1790, %v1794
  %v1821 = vsel %vm141, %v1784, %v1788
  %v1822 = vsel %vm141, %v1786, %v1790
  %v1823 = vsel %vm141, %v1780, %v1784
  %v1824 = vsel %vm141, %v1782, %v1786
  %v1825 = vsel %vm141, %v1808, %v1780
  %v1826 = vsel %vm141, %v1810, %v1782
  %v1827 = vmul.f32 %v1825, %v150
  %v1828 = vmul.f32 %v1823, %v151
  %v1829 = vmul.f32 %v1821, %v152
  %v1830 = vmul.f32 %v1819, %v153
  %v1831 = vmul.f32 %v1817, %v154
  %v1832 = vmul.f32 %v1815, %v155
  %v1833 = vmul.f32 %v1813, %v156
  %v1834 = vmul.f32 %v1811, %v157
  %v1835 = vmul.f32 %v1826, %v150
  %v1836 = vmul.f32 %v1824, %v151
  %v1837 = vmul.f32 %v1822, %v152
  %v1838 = vmul.f32 %v1820, %v153
  %v1839 = vmul.f32 %v1818, %v154
  %v1840 = vmul.f32 %v1816, %v155
  %v1841 = vmul.f32 %v1814, %v156
  %v1842 = vmul.f32 %v1812, %v157
  %1843 = vrot.lane.b32.xlu0 %v1699, 71
  %v1844 = vpop.permute.xlu0 %1843
  %1845 = vrot.lane.b32.xlu0 %v1707, 71
  %v1846 = vpop.permute.xlu0 %1845
  %1847 = vrot.lane.b32.xlu0 %v1700, 71
  %v1848 = vpop.permute.xlu0 %1847
  %1849 = vrot.lane.b32.xlu0 %v1708, 71
  %v1850 = vpop.permute.xlu0 %1849
  %1851 = vrot.lane.b32.xlu0 %v1701, 71
  %v1852 = vpop.permute.xlu0 %1851
  %1853 = vrot.lane.b32.xlu0 %v1709, 71
  %v1854 = vpop.permute.xlu0 %1853
  %1855 = vrot.lane.b32.xlu0 %v1702, 71
  %v1856 = vpop.permute.xlu0 %1855
  %1857 = vrot.lane.b32.xlu0 %v1710, 71
  %v1858 = vpop.permute.xlu0 %1857
  %1859 = vrot.lane.b32.xlu0 %v1703, 71
  %v1860 = vpop.permute.xlu0 %1859
  %1861 = vrot.lane.b32.xlu0 %v1711, 71
  %v1862 = vpop.permute.xlu0 %1861
  %1863 = vrot.lane.b32.xlu0 %v1704, 71
  %v1864 = vpop.permute.xlu0 %1863
  %1865 = vrot.lane.b32.xlu0 %v1712, 71
  %v1866 = vpop.permute.xlu0 %1865
  %1867 = vrot.lane.b32.xlu0 %v1705, 71
  %v1868 = vpop.permute.xlu0 %1867
  %1869 = vrot.lane.b32.xlu0 %v1713, 71
  %v1870 = vpop.permute.xlu0 %1869
  %1871 = vrot.lane.b32.xlu0 %v1706, 71
  %v1872 = vpop.permute.xlu0 %1871
  %1873 = vrot.lane.b32.xlu0 %v1714, 71
  %v1874 = vpop.permute.xlu0 %1873
  %v1875 = vsel %vm182, %v1868, %v1872
  %v1876 = vsel %vm182, %v1870, %v1874
  %v1877 = vsel %vm182, %v1864, %v1868
  %v1878 = vsel %vm182, %v1866, %v1870
  %v1879 = vsel %vm182, %v1860, %v1864
  %v1880 = vsel %vm182, %v1862, %v1866
  %v1881 = vsel %vm182, %v1856, %v1860
  %v1882 = vsel %vm182, %v1858, %v1862
  %v1883 = vsel %vm182, %v1852, %v1856
  %v1884 = vsel %vm182, %v1854, %v1858
  %v1885 = vsel %vm182, %v1848, %v1852
  %v1886 = vsel %vm182, %v1850, %v1854
  %v1887 = vsel %vm182, %v1844, %v1848
  %v1888 = vsel %vm182, %v1846, %v1850
  %v1889 = vsel %vm182, %v1872, %v1844
  %v1890 = vsel %vm182, %v1874, %v1846
  %v1891 = vmul.f32 %v1889, %v191
  %v1892 = vmul.f32 %v1887, %v192
  %v1893 = vmul.f32 %v1885, %v193
  %v1894 = vmul.f32 %v1883, %v194
  %v1895 = vmul.f32 %v1881, %v195
  %v1896 = vmul.f32 %v1879, %v196
  %v1897 = vmul.f32 %v1877, %v197
  %v1898 = vmul.f32 %v1875, %v198
  %v1899 = vmul.f32 %v1890, %v191
  %v1900 = vmul.f32 %v1888, %v192
  %v1901 = vmul.f32 %v1886, %v193
  %v1902 = vmul.f32 %v1884, %v194
  %v1903 = vmul.f32 %v1882, %v195
  %v1904 = vmul.f32 %v1880, %v196
  %v1905 = vmul.f32 %v1878, %v197
  %v1906 = vmul.f32 %v1876, %v198
  %1907 = vrot.lane.b32.xlu0 %v1699, 65
  %v1908 = vpop.permute.xlu0 %1907
  %1909 = vrot.lane.b32.xlu0 %v1707, 65
  %v1910 = vpop.permute.xlu0 %1909
  %1911 = vrot.lane.b32.xlu0 %v1700, 65
  %v1912 = vpop.permute.xlu0 %1911
  %1913 = vrot.lane.b32.xlu0 %v1708, 65
  %v1914 = vpop.permute.xlu0 %1913
  %1915 = vrot.lane.b32.xlu0 %v1701, 65
  %v1916 = vpop.permute.xlu0 %1915
  %1917 = vrot.lane.b32.xlu0 %v1709, 65
  %v1918 = vpop.permute.xlu0 %1917
  %1919 = vrot.lane.b32.xlu0 %v1702, 65
  %v1920 = vpop.permute.xlu0 %1919
  %1921 = vrot.lane.b32.xlu0 %v1710, 65
  %v1922 = vpop.permute.xlu0 %1921
  %1923 = vrot.lane.b32.xlu0 %v1703, 65
  %v1924 = vpop.permute.xlu0 %1923
  %1925 = vrot.lane.b32.xlu0 %v1711, 65
  %v1926 = vpop.permute.xlu0 %1925
  %1927 = vrot.lane.b32.xlu0 %v1704, 65
  %v1928 = vpop.permute.xlu0 %1927
  %1929 = vrot.lane.b32.xlu0 %v1712, 65
  %v1930 = vpop.permute.xlu0 %1929
  %1931 = vrot.lane.b32.xlu0 %v1705, 65
  %v1932 = vpop.permute.xlu0 %1931
  %1933 = vrot.lane.b32.xlu0 %v1713, 65
  %v1934 = vpop.permute.xlu0 %1933
  %1935 = vrot.lane.b32.xlu0 %v1706, 65
  %v1936 = vpop.permute.xlu0 %1935
  %1937 = vrot.lane.b32.xlu0 %v1714, 65
  %v1938 = vpop.permute.xlu0 %1937
  %v1939 = vsel %vm223, %v1932, %v1936
  %v1940 = vsel %vm223, %v1934, %v1938
  %v1941 = vsel %vm223, %v1928, %v1932
  %v1942 = vsel %vm223, %v1930, %v1934
  %v1943 = vsel %vm223, %v1924, %v1928
  %v1944 = vsel %vm223, %v1926, %v1930
  %v1945 = vsel %vm223, %v1920, %v1924
  %v1946 = vsel %vm223, %v1922, %v1926
  %v1947 = vsel %vm223, %v1916, %v1920
  %v1948 = vsel %vm223, %v1918, %v1922
  %v1949 = vsel %vm223, %v1912, %v1916
  %v1950 = vsel %vm223, %v1914, %v1918
  %v1951 = vsel %vm223, %v1908, %v1912
  %v1952 = vsel %vm223, %v1910, %v1914
  %v1953 = vsel %vm223, %v1936, %v1908
  %v1954 = vsel %vm223, %v1938, %v1910
  %v1955 = vmul.f32 %v1953, %v232
  %v1956 = vmul.f32 %v1951, %v233
  %v1957 = vmul.f32 %v1949, %v234
  %v1958 = vmul.f32 %v1947, %v235
  %v1959 = vmul.f32 %v1945, %v236
  %v1960 = vmul.f32 %v1943, %v237
  %v1961 = vmul.f32 %v1941, %v238
  %v1962 = vmul.f32 %v1939, %v239
  %v1963 = vmul.f32 %v1954, %v232
  %v1964 = vmul.f32 %v1952, %v233
  %v1965 = vmul.f32 %v1950, %v234
  %v1966 = vmul.f32 %v1948, %v235
  %v1967 = vmul.f32 %v1946, %v236
  %v1968 = vmul.f32 %v1944, %v237
  %v1969 = vmul.f32 %v1942, %v238
  %v1970 = vmul.f32 %v1940, %v239
  %1971 = vrot.lane.b32.xlu0 %v1699, 64
  %v1972 = vpop.permute.xlu0 %1971
  %1973 = vrot.lane.b32.xlu0 %v1707, 64
  %v1974 = vpop.permute.xlu0 %1973
  %1975 = vrot.lane.b32.xlu0 %v1700, 64
  %v1976 = vpop.permute.xlu0 %1975
  %1977 = vrot.lane.b32.xlu0 %v1708, 64
  %v1978 = vpop.permute.xlu0 %1977
  %1979 = vrot.lane.b32.xlu0 %v1701, 64
  %v1980 = vpop.permute.xlu0 %1979
  %1981 = vrot.lane.b32.xlu0 %v1709, 64
  %v1982 = vpop.permute.xlu0 %1981
  %1983 = vrot.lane.b32.xlu0 %v1702, 64
  %v1984 = vpop.permute.xlu0 %1983
  %1985 = vrot.lane.b32.xlu0 %v1710, 64
  %v1986 = vpop.permute.xlu0 %1985
  %1987 = vrot.lane.b32.xlu0 %v1703, 64
  %v1988 = vpop.permute.xlu0 %1987
  %1989 = vrot.lane.b32.xlu0 %v1711, 64
  %v1990 = vpop.permute.xlu0 %1989
  %1991 = vrot.lane.b32.xlu0 %v1704, 64
  %v1992 = vpop.permute.xlu0 %1991
  %1993 = vrot.lane.b32.xlu0 %v1712, 64
  %v1994 = vpop.permute.xlu0 %1993
  %1995 = vrot.lane.b32.xlu0 %v1705, 64
  %v1996 = vpop.permute.xlu0 %1995
  %1997 = vrot.lane.b32.xlu0 %v1713, 64
  %v1998 = vpop.permute.xlu0 %1997
  %1999 = vrot.lane.b32.xlu0 %v1706, 64
  %v2000 = vpop.permute.xlu0 %1999
  %2001 = vrot.lane.b32.xlu0 %v1714, 64
  %v2002 = vpop.permute.xlu0 %2001
  %v2003 = vsel %vm264, %v1996, %v2000
  %v2004 = vsel %vm264, %v1998, %v2002
  %v2005 = vsel %vm264, %v1992, %v1996
  %v2006 = vsel %vm264, %v1994, %v1998
  %v2007 = vsel %vm264, %v1988, %v1992
  %v2008 = vsel %vm264, %v1990, %v1994
  %v2009 = vsel %vm264, %v1984, %v1988
  %v2010 = vsel %vm264, %v1986, %v1990
  %v2011 = vsel %vm264, %v1980, %v1984
  %v2012 = vsel %vm264, %v1982, %v1986
  %v2013 = vsel %vm264, %v1976, %v1980
  %v2014 = vsel %vm264, %v1978, %v1982
  %v2015 = vsel %vm264, %v1972, %v1976
  %v2016 = vsel %vm264, %v1974, %v1978
  %v2017 = vsel %vm264, %v2000, %v1972
  %v2018 = vsel %vm264, %v2002, %v1974
  %v2019 = vmul.f32 %v2017, %v273
  %v2020 = vmul.f32 %v2015, %v274
  %v2021 = vmul.f32 %v2013, %v275
  %v2022 = vmul.f32 %v2011, %v276
  %v2023 = vmul.f32 %v2009, %v277
  %v2024 = vmul.f32 %v2007, %v278
  %v2025 = vmul.f32 %v2005, %v279
  %v2026 = vmul.f32 %v2003, %v280
  %v2027 = vmul.f32 %v2018, %v273
  %v2028 = vmul.f32 %v2016, %v274
  %v2029 = vmul.f32 %v2014, %v275
  %v2030 = vmul.f32 %v2012, %v276
  %v2031 = vmul.f32 %v2010, %v277
  %v2032 = vmul.f32 %v2008, %v278
  %v2033 = vmul.f32 %v2006, %v279
  %v2034 = vmul.f32 %v2004, %v280
  %2035 = vrot.lane.b32.xlu0 %v1699, 63
  %v2036 = vpop.permute.xlu0 %2035
  %2037 = vrot.lane.b32.xlu0 %v1707, 63
  %v2038 = vpop.permute.xlu0 %2037
  %2039 = vrot.lane.b32.xlu0 %v1700, 63
  %v2040 = vpop.permute.xlu0 %2039
  %2041 = vrot.lane.b32.xlu0 %v1708, 63
  %v2042 = vpop.permute.xlu0 %2041
  %2043 = vrot.lane.b32.xlu0 %v1701, 63
  %v2044 = vpop.permute.xlu0 %2043
  %2045 = vrot.lane.b32.xlu0 %v1709, 63
  %v2046 = vpop.permute.xlu0 %2045
  %2047 = vrot.lane.b32.xlu0 %v1702, 63
  %v2048 = vpop.permute.xlu0 %2047
  %2049 = vrot.lane.b32.xlu0 %v1710, 63
  %v2050 = vpop.permute.xlu0 %2049
  %2051 = vrot.lane.b32.xlu0 %v1703, 63
  %v2052 = vpop.permute.xlu0 %2051
  %2053 = vrot.lane.b32.xlu0 %v1711, 63
  %v2054 = vpop.permute.xlu0 %2053
  %2055 = vrot.lane.b32.xlu0 %v1704, 63
  %v2056 = vpop.permute.xlu0 %2055
  %2057 = vrot.lane.b32.xlu0 %v1712, 63
  %v2058 = vpop.permute.xlu0 %2057
  %2059 = vrot.lane.b32.xlu0 %v1705, 63
  %v2060 = vpop.permute.xlu0 %2059
  %2061 = vrot.lane.b32.xlu0 %v1713, 63
  %v2062 = vpop.permute.xlu0 %2061
  %2063 = vrot.lane.b32.xlu0 %v1706, 63
  %v2064 = vpop.permute.xlu0 %2063
  %2065 = vrot.lane.b32.xlu0 %v1714, 63
  %v2066 = vpop.permute.xlu0 %2065
  %v2067 = vsel %vm305, %v2060, %v2064
  %v2068 = vsel %vm305, %v2062, %v2066
  %v2069 = vsel %vm305, %v2056, %v2060
  %v2070 = vsel %vm305, %v2058, %v2062
  %v2071 = vsel %vm305, %v2052, %v2056
  %v2072 = vsel %vm305, %v2054, %v2058
  %v2073 = vsel %vm305, %v2048, %v2052
  %v2074 = vsel %vm305, %v2050, %v2054
  %v2075 = vsel %vm305, %v2044, %v2048
  %v2076 = vsel %vm305, %v2046, %v2050
  %v2077 = vsel %vm305, %v2040, %v2044
  %v2078 = vsel %vm305, %v2042, %v2046
  %v2079 = vsel %vm305, %v2036, %v2040
  %v2080 = vsel %vm305, %v2038, %v2042
  %v2081 = vsel %vm305, %v2064, %v2036
  %v2082 = vsel %vm305, %v2066, %v2038
  %v2083 = vmul.f32 %v2081, %v314
  %v2084 = vmul.f32 %v2079, %v315
  %v2085 = vmul.f32 %v2077, %v316
  %v2086 = vmul.f32 %v2075, %v317
  %v2087 = vmul.f32 %v2073, %v318
  %v2088 = vmul.f32 %v2071, %v319
  %v2089 = vmul.f32 %v2069, %v320
  %v2090 = vmul.f32 %v2067, %v321
  %v2091 = vmul.f32 %v2082, %v314
  %v2092 = vmul.f32 %v2080, %v315
  %v2093 = vmul.f32 %v2078, %v316
  %v2094 = vmul.f32 %v2076, %v317
  %v2095 = vmul.f32 %v2074, %v318
  %v2096 = vmul.f32 %v2072, %v319
  %v2097 = vmul.f32 %v2070, %v320
  %v2098 = vmul.f32 %v2068, %v321
  %2099 = vrot.lane.b32.xlu0 %v1699, 57
  %v2100 = vpop.permute.xlu0 %2099
  %2101 = vrot.lane.b32.xlu0 %v1707, 57
  %v2102 = vpop.permute.xlu0 %2101
  %2103 = vrot.lane.b32.xlu0 %v1700, 57
  %v2104 = vpop.permute.xlu0 %2103
  %2105 = vrot.lane.b32.xlu0 %v1708, 57
  %v2106 = vpop.permute.xlu0 %2105
  %2107 = vrot.lane.b32.xlu0 %v1701, 57
  %v2108 = vpop.permute.xlu0 %2107
  %2109 = vrot.lane.b32.xlu0 %v1709, 57
  %v2110 = vpop.permute.xlu0 %2109
  %2111 = vrot.lane.b32.xlu0 %v1702, 57
  %v2112 = vpop.permute.xlu0 %2111
  %2113 = vrot.lane.b32.xlu0 %v1710, 57
  %v2114 = vpop.permute.xlu0 %2113
  %2115 = vrot.lane.b32.xlu0 %v1703, 57
  %v2116 = vpop.permute.xlu0 %2115
  %2117 = vrot.lane.b32.xlu0 %v1711, 57
  %v2118 = vpop.permute.xlu0 %2117
  %2119 = vrot.lane.b32.xlu0 %v1704, 57
  %v2120 = vpop.permute.xlu0 %2119
  %2121 = vrot.lane.b32.xlu0 %v1712, 57
  %v2122 = vpop.permute.xlu0 %2121
  %2123 = vrot.lane.b32.xlu0 %v1705, 57
  %v2124 = vpop.permute.xlu0 %2123
  %2125 = vrot.lane.b32.xlu0 %v1713, 57
  %v2126 = vpop.permute.xlu0 %2125
  %2127 = vrot.lane.b32.xlu0 %v1706, 57
  %v2128 = vpop.permute.xlu0 %2127
  %2129 = vrot.lane.b32.xlu0 %v1714, 57
  %v2130 = vpop.permute.xlu0 %2129
  %v2131 = vsel %vm346, %v2124, %v2128
  %v2132 = vsel %vm346, %v2126, %v2130
  %v2133 = vsel %vm346, %v2120, %v2124
  %v2134 = vsel %vm346, %v2122, %v2126
  %v2135 = vsel %vm346, %v2116, %v2120
  %v2136 = vsel %vm346, %v2118, %v2122
  %v2137 = vsel %vm346, %v2112, %v2116
  %v2138 = vsel %vm346, %v2114, %v2118
  %v2139 = vsel %vm346, %v2108, %v2112
  %v2140 = vsel %vm346, %v2110, %v2114
  %v2141 = vsel %vm346, %v2104, %v2108
  %v2142 = vsel %vm346, %v2106, %v2110
  %v2143 = vsel %vm346, %v2100, %v2104
  %v2144 = vsel %vm346, %v2102, %v2106
  %v2145 = vsel %vm346, %v2128, %v2100
  %v2146 = vsel %vm346, %v2130, %v2102
  %v2147 = vmul.f32 %v2145, %v355
  %v2148 = vmul.f32 %v2143, %v356
  %v2149 = vmul.f32 %v2141, %v357
  %v2150 = vmul.f32 %v2139, %v358
  %v2151 = vmul.f32 %v2137, %v359
  %v2152 = vmul.f32 %v2135, %v360
  %v2153 = vmul.f32 %v2133, %v361
  %v2154 = vmul.f32 %v2131, %v362
  %v2155 = vmul.f32 %v2146, %v355
  %v2156 = vmul.f32 %v2144, %v356
  %v2157 = vmul.f32 %v2142, %v357
  %v2158 = vmul.f32 %v2140, %v358
  %v2159 = vmul.f32 %v2138, %v359
  %v2160 = vmul.f32 %v2136, %v360
  %v2161 = vmul.f32 %v2134, %v361
  %v2162 = vmul.f32 %v2132, %v362
  %2163 = vrot.lane.b32.xlu0 %v1699, 56
  %v2164 = vpop.permute.xlu0 %2163
  %2165 = vrot.lane.b32.xlu0 %v1707, 56
  %v2166 = vpop.permute.xlu0 %2165
  %2167 = vrot.lane.b32.xlu0 %v1700, 56
  %v2168 = vpop.permute.xlu0 %2167
  %2169 = vrot.lane.b32.xlu0 %v1708, 56
  %v2170 = vpop.permute.xlu0 %2169
  %2171 = vrot.lane.b32.xlu0 %v1701, 56
  %v2172 = vpop.permute.xlu0 %2171
  %2173 = vrot.lane.b32.xlu0 %v1709, 56
  %v2174 = vpop.permute.xlu0 %2173
  %2175 = vrot.lane.b32.xlu0 %v1702, 56
  %v2176 = vpop.permute.xlu0 %2175
  %2177 = vrot.lane.b32.xlu0 %v1710, 56
  %v2178 = vpop.permute.xlu0 %2177
  %2179 = vrot.lane.b32.xlu0 %v1703, 56
  %v2180 = vpop.permute.xlu0 %2179
  %2181 = vrot.lane.b32.xlu0 %v1711, 56
  %v2182 = vpop.permute.xlu0 %2181
  %2183 = vrot.lane.b32.xlu0 %v1704, 56
  %v2184 = vpop.permute.xlu0 %2183
  %2185 = vrot.lane.b32.xlu0 %v1712, 56
  %v2186 = vpop.permute.xlu0 %2185
  %2187 = vrot.lane.b32.xlu0 %v1705, 56
  %v2188 = vpop.permute.xlu0 %2187
  %2189 = vrot.lane.b32.xlu0 %v1713, 56
  %v2190 = vpop.permute.xlu0 %2189
  %2191 = vrot.lane.b32.xlu0 %v1706, 56
  %v2192 = vpop.permute.xlu0 %2191
  %2193 = vrot.lane.b32.xlu0 %v1714, 56
  %v2194 = vpop.permute.xlu0 %2193
  %v2195 = vsel %vm387, %v2188, %v2192
  %v2196 = vsel %vm387, %v2190, %v2194
  %v2197 = vsel %vm387, %v2184, %v2188
  %v2198 = vsel %vm387, %v2186, %v2190
  %v2199 = vsel %vm387, %v2180, %v2184
  %v2200 = vsel %vm387, %v2182, %v2186
  %v2201 = vsel %vm387, %v2176, %v2180
  %v2202 = vsel %vm387, %v2178, %v2182
  %v2203 = vsel %vm387, %v2172, %v2176
  %v2204 = vsel %vm387, %v2174, %v2178
  %v2205 = vsel %vm387, %v2168, %v2172
  %v2206 = vsel %vm387, %v2170, %v2174
  %v2207 = vsel %vm387, %v2164, %v2168
  %v2208 = vsel %vm387, %v2166, %v2170
  %v2209 = vsel %vm387, %v2192, %v2164
  %v2210 = vsel %vm387, %v2194, %v2166
  %v2211 = vmul.f32 %v2209, %v396
  %v2212 = vmul.f32 %v2207, %v397
  %v2213 = vmul.f32 %v2205, %v398
  %v2214 = vmul.f32 %v2203, %v399
  %v2215 = vmul.f32 %v2201, %v400
  %v2216 = vmul.f32 %v2199, %v401
  %v2217 = vmul.f32 %v2197, %v402
  %v2218 = vmul.f32 %v2195, %v403
  %v2219 = vmul.f32 %v2210, %v396
  %v2220 = vmul.f32 %v2208, %v397
  %v2221 = vmul.f32 %v2206, %v398
  %v2222 = vmul.f32 %v2204, %v399
  %v2223 = vmul.f32 %v2202, %v400
  %v2224 = vmul.f32 %v2200, %v401
  %v2225 = vmul.f32 %v2198, %v402
  %v2226 = vmul.f32 %v2196, %v403
  %2227 = vrot.lane.b32.xlu0 %v1699, 55
  %v2228 = vpop.permute.xlu0 %2227
  %2229 = vrot.lane.b32.xlu0 %v1707, 55
  %v2230 = vpop.permute.xlu0 %2229
  %2231 = vrot.lane.b32.xlu0 %v1700, 55
  %v2232 = vpop.permute.xlu0 %2231
  %2233 = vrot.lane.b32.xlu0 %v1708, 55
  %v2234 = vpop.permute.xlu0 %2233
  %2235 = vrot.lane.b32.xlu0 %v1701, 55
  %v2236 = vpop.permute.xlu0 %2235
  %2237 = vrot.lane.b32.xlu0 %v1709, 55
  %v2238 = vpop.permute.xlu0 %2237
  %2239 = vrot.lane.b32.xlu0 %v1702, 55
  %v2240 = vpop.permute.xlu0 %2239
  %2241 = vrot.lane.b32.xlu0 %v1710, 55
  %v2242 = vpop.permute.xlu0 %2241
  %2243 = vrot.lane.b32.xlu0 %v1703, 55
  %v2244 = vpop.permute.xlu0 %2243
  %2245 = vrot.lane.b32.xlu0 %v1711, 55
  %v2246 = vpop.permute.xlu0 %2245
  %2247 = vrot.lane.b32.xlu0 %v1704, 55
  %v2248 = vpop.permute.xlu0 %2247
  %2249 = vrot.lane.b32.xlu0 %v1712, 55
  %v2250 = vpop.permute.xlu0 %2249
  %2251 = vrot.lane.b32.xlu0 %v1705, 55
  %v2252 = vpop.permute.xlu0 %2251
  %2253 = vrot.lane.b32.xlu0 %v1713, 55
  %v2254 = vpop.permute.xlu0 %2253
  %2255 = vrot.lane.b32.xlu0 %v1706, 55
  %v2256 = vpop.permute.xlu0 %2255
  %2257 = vrot.lane.b32.xlu0 %v1714, 55
  %v2258 = vpop.permute.xlu0 %2257
  %v2259 = vsel %vm428, %v2252, %v2256
  %v2260 = vsel %vm428, %v2254, %v2258
  %v2261 = vsel %vm428, %v2248, %v2252
  %v2262 = vsel %vm428, %v2250, %v2254
  %v2263 = vsel %vm428, %v2244, %v2248
  %v2264 = vsel %vm428, %v2246, %v2250
  %v2265 = vsel %vm428, %v2240, %v2244
  %v2266 = vsel %vm428, %v2242, %v2246
  %v2267 = vsel %vm428, %v2236, %v2240
  %v2268 = vsel %vm428, %v2238, %v2242
  %v2269 = vsel %vm428, %v2232, %v2236
  %v2270 = vsel %vm428, %v2234, %v2238
  %v2271 = vsel %vm428, %v2228, %v2232
  %v2272 = vsel %vm428, %v2230, %v2234
  %v2273 = vsel %vm428, %v2256, %v2228
  %v2274 = vsel %vm428, %v2258, %v2230
  %v2275 = vmul.f32 %v2273, %v437
  %v2276 = vmul.f32 %v2271, %v438
  %v2277 = vmul.f32 %v2269, %v439
  %v2278 = vmul.f32 %v2267, %v440
  %v2279 = vmul.f32 %v2265, %v441
  %v2280 = vmul.f32 %v2263, %v442
  %v2281 = vmul.f32 %v2261, %v443
  %v2282 = vmul.f32 %v2259, %v444
  %v2283 = vmul.f32 %v2274, %v437
  %v2284 = vmul.f32 %v2272, %v438
  %v2285 = vmul.f32 %v2270, %v439
  %v2286 = vmul.f32 %v2268, %v440
  %v2287 = vmul.f32 %v2266, %v441
  %v2288 = vmul.f32 %v2264, %v442
  %v2289 = vmul.f32 %v2262, %v443
  %v2290 = vmul.f32 %v2260, %v444
  %2291 = vrot.lane.b32.xlu0 %v1699, 9
  %v2292 = vpop.permute.xlu0 %2291
  %2293 = vrot.lane.b32.xlu0 %v1707, 9
  %v2294 = vpop.permute.xlu0 %2293
  %2295 = vrot.lane.b32.xlu0 %v1700, 9
  %v2296 = vpop.permute.xlu0 %2295
  %2297 = vrot.lane.b32.xlu0 %v1708, 9
  %v2298 = vpop.permute.xlu0 %2297
  %2299 = vrot.lane.b32.xlu0 %v1701, 9
  %v2300 = vpop.permute.xlu0 %2299
  %2301 = vrot.lane.b32.xlu0 %v1709, 9
  %v2302 = vpop.permute.xlu0 %2301
  %2303 = vrot.lane.b32.xlu0 %v1702, 9
  %v2304 = vpop.permute.xlu0 %2303
  %2305 = vrot.lane.b32.xlu0 %v1710, 9
  %v2306 = vpop.permute.xlu0 %2305
  %2307 = vrot.lane.b32.xlu0 %v1703, 9
  %v2308 = vpop.permute.xlu0 %2307
  %2309 = vrot.lane.b32.xlu0 %v1711, 9
  %v2310 = vpop.permute.xlu0 %2309
  %2311 = vrot.lane.b32.xlu0 %v1704, 9
  %v2312 = vpop.permute.xlu0 %2311
  %2313 = vrot.lane.b32.xlu0 %v1712, 9
  %v2314 = vpop.permute.xlu0 %2313
  %2315 = vrot.lane.b32.xlu0 %v1705, 9
  %v2316 = vpop.permute.xlu0 %2315
  %2317 = vrot.lane.b32.xlu0 %v1713, 9
  %v2318 = vpop.permute.xlu0 %2317
  %2319 = vrot.lane.b32.xlu0 %v1706, 9
  %v2320 = vpop.permute.xlu0 %2319
  %2321 = vrot.lane.b32.xlu0 %v1714, 9
  %v2322 = vpop.permute.xlu0 %2321
  %v2323 = vsel %vm469, %v2316, %v2320
  %v2324 = vsel %vm469, %v2318, %v2322
  %v2325 = vsel %vm469, %v2312, %v2316
  %v2326 = vsel %vm469, %v2314, %v2318
  %v2327 = vsel %vm469, %v2308, %v2312
  %v2328 = vsel %vm469, %v2310, %v2314
  %v2329 = vsel %vm469, %v2304, %v2308
  %v2330 = vsel %vm469, %v2306, %v2310
  %v2331 = vsel %vm469, %v2300, %v2304
  %v2332 = vsel %vm469, %v2302, %v2306
  %v2333 = vsel %vm469, %v2296, %v2300
  %v2334 = vsel %vm469, %v2298, %v2302
  %v2335 = vsel %vm469, %v2292, %v2296
  %v2336 = vsel %vm469, %v2294, %v2298
  %v2337 = vsel %vm469, %v2320, %v2292
  %v2338 = vsel %vm469, %v2322, %v2294
  %v2339 = vmul.f32 %v2337, %v478
  %v2340 = vmul.f32 %v2335, %v479
  %v2341 = vmul.f32 %v2333, %v480
  %v2342 = vmul.f32 %v2331, %v481
  %v2343 = vmul.f32 %v2329, %v482
  %v2344 = vmul.f32 %v2327, %v483
  %v2345 = vmul.f32 %v2325, %v484
  %v2346 = vmul.f32 %v2323, %v485
  %v2347 = vmul.f32 %v2338, %v478
  %v2348 = vmul.f32 %v2336, %v479
  %v2349 = vmul.f32 %v2334, %v480
  %v2350 = vmul.f32 %v2332, %v481
  %v2351 = vmul.f32 %v2330, %v482
  %v2352 = vmul.f32 %v2328, %v483
  %v2353 = vmul.f32 %v2326, %v484
  %v2354 = vmul.f32 %v2324, %v485
  %2355 = vrot.lane.b32.xlu0 %v1699, 8
  %v2356 = vpop.permute.xlu0 %2355
  %2357 = vrot.lane.b32.xlu0 %v1707, 8
  %v2358 = vpop.permute.xlu0 %2357
  %2359 = vrot.lane.b32.xlu0 %v1700, 8
  %v2360 = vpop.permute.xlu0 %2359
  %2361 = vrot.lane.b32.xlu0 %v1708, 8
  %v2362 = vpop.permute.xlu0 %2361
  %2363 = vrot.lane.b32.xlu0 %v1701, 8
  %v2364 = vpop.permute.xlu0 %2363
  %2365 = vrot.lane.b32.xlu0 %v1709, 8
  %v2366 = vpop.permute.xlu0 %2365
  %2367 = vrot.lane.b32.xlu0 %v1702, 8
  %v2368 = vpop.permute.xlu0 %2367
  %2369 = vrot.lane.b32.xlu0 %v1710, 8
  %v2370 = vpop.permute.xlu0 %2369
  %2371 = vrot.lane.b32.xlu0 %v1703, 8
  %v2372 = vpop.permute.xlu0 %2371
  %2373 = vrot.lane.b32.xlu0 %v1711, 8
  %v2374 = vpop.permute.xlu0 %2373
  %2375 = vrot.lane.b32.xlu0 %v1704, 8
  %v2376 = vpop.permute.xlu0 %2375
  %2377 = vrot.lane.b32.xlu0 %v1712, 8
  %v2378 = vpop.permute.xlu0 %2377
  %2379 = vrot.lane.b32.xlu0 %v1705, 8
  %v2380 = vpop.permute.xlu0 %2379
  %2381 = vrot.lane.b32.xlu0 %v1713, 8
  %v2382 = vpop.permute.xlu0 %2381
  %2383 = vrot.lane.b32.xlu0 %v1706, 8
  %v2384 = vpop.permute.xlu0 %2383
  %2385 = vrot.lane.b32.xlu0 %v1714, 8
  %v2386 = vpop.permute.xlu0 %2385
  %v2387 = vsel %vm510, %v2380, %v2384
  %v2388 = vsel %vm510, %v2382, %v2386
  %v2389 = vsel %vm510, %v2376, %v2380
  %v2390 = vsel %vm510, %v2378, %v2382
  %v2391 = vsel %vm510, %v2372, %v2376
  %v2392 = vsel %vm510, %v2374, %v2378
  %v2393 = vsel %vm510, %v2368, %v2372
  %v2394 = vsel %vm510, %v2370, %v2374
  %v2395 = vsel %vm510, %v2364, %v2368
  %v2396 = vsel %vm510, %v2366, %v2370
  %v2397 = vsel %vm510, %v2360, %v2364
  %v2398 = vsel %vm510, %v2362, %v2366
  %v2399 = vsel %vm510, %v2356, %v2360
  %v2400 = vsel %vm510, %v2358, %v2362
  %v2401 = vsel %vm510, %v2384, %v2356
  %v2402 = vsel %vm510, %v2386, %v2358
  %v2403 = vmul.f32 %v2401, %v519
  %v2404 = vmul.f32 %v2399, %v520
  %v2405 = vmul.f32 %v2397, %v521
  %v2406 = vmul.f32 %v2395, %v522
  %v2407 = vmul.f32 %v2393, %v523
  %v2408 = vmul.f32 %v2391, %v524
  %v2409 = vmul.f32 %v2389, %v525
  %v2410 = vmul.f32 %v2387, %v526
  %v2411 = vmul.f32 %v2402, %v519
  %v2412 = vmul.f32 %v2400, %v520
  %v2413 = vmul.f32 %v2398, %v521
  %v2414 = vmul.f32 %v2396, %v522
  %v2415 = vmul.f32 %v2394, %v523
  %v2416 = vmul.f32 %v2392, %v524
  %v2417 = vmul.f32 %v2390, %v525
  %v2418 = vmul.f32 %v2388, %v526
  %2419 = vrot.lane.b32.xlu0 %v1699, 7
  %v2420 = vpop.permute.xlu0 %2419
  %2421 = vrot.lane.b32.xlu0 %v1707, 7
  %v2422 = vpop.permute.xlu0 %2421
  %2423 = vrot.lane.b32.xlu0 %v1700, 7
  %v2424 = vpop.permute.xlu0 %2423
  %2425 = vrot.lane.b32.xlu0 %v1708, 7
  %v2426 = vpop.permute.xlu0 %2425
  %2427 = vrot.lane.b32.xlu0 %v1701, 7
  %v2428 = vpop.permute.xlu0 %2427
  %2429 = vrot.lane.b32.xlu0 %v1709, 7
  %v2430 = vpop.permute.xlu0 %2429
  %2431 = vrot.lane.b32.xlu0 %v1702, 7
  %v2432 = vpop.permute.xlu0 %2431
  %2433 = vrot.lane.b32.xlu0 %v1710, 7
  %v2434 = vpop.permute.xlu0 %2433
  %2435 = vrot.lane.b32.xlu0 %v1703, 7
  %v2436 = vpop.permute.xlu0 %2435
  %2437 = vrot.lane.b32.xlu0 %v1711, 7
  %v2438 = vpop.permute.xlu0 %2437
  %2439 = vrot.lane.b32.xlu0 %v1704, 7
  %v2440 = vpop.permute.xlu0 %2439
  %2441 = vrot.lane.b32.xlu0 %v1712, 7
  %v2442 = vpop.permute.xlu0 %2441
  %2443 = vrot.lane.b32.xlu0 %v1705, 7
  %v2444 = vpop.permute.xlu0 %2443
  %2445 = vrot.lane.b32.xlu0 %v1713, 7
  %v2446 = vpop.permute.xlu0 %2445
  %2447 = vrot.lane.b32.xlu0 %v1706, 7
  %v2448 = vpop.permute.xlu0 %2447
  %2449 = vrot.lane.b32.xlu0 %v1714, 7
  %v2450 = vpop.permute.xlu0 %2449
  %v2451 = vsel %vm551, %v2444, %v2448
  %v2452 = vsel %vm551, %v2446, %v2450
  %v2453 = vsel %vm551, %v2440, %v2444
  %v2454 = vsel %vm551, %v2442, %v2446
  %v2455 = vsel %vm551, %v2436, %v2440
  %v2456 = vsel %vm551, %v2438, %v2442
  %v2457 = vsel %vm551, %v2432, %v2436
  %v2458 = vsel %vm551, %v2434, %v2438
  %v2459 = vsel %vm551, %v2428, %v2432
  %v2460 = vsel %vm551, %v2430, %v2434
  %v2461 = vsel %vm551, %v2424, %v2428
  %v2462 = vsel %vm551, %v2426, %v2430
  %v2463 = vsel %vm551, %v2420, %v2424
  %v2464 = vsel %vm551, %v2422, %v2426
  %v2465 = vsel %vm551, %v2448, %v2420
  %v2466 = vsel %vm551, %v2450, %v2422
  %v2467 = vmul.f32 %v2465, %v560
  %v2468 = vmul.f32 %v2463, %v561
  %v2469 = vmul.f32 %v2461, %v562
  %v2470 = vmul.f32 %v2459, %v563
  %v2471 = vmul.f32 %v2457, %v564
  %v2472 = vmul.f32 %v2455, %v565
  %v2473 = vmul.f32 %v2453, %v566
  %v2474 = vmul.f32 %v2451, %v567
  %v2475 = vmul.f32 %v2466, %v560
  %v2476 = vmul.f32 %v2464, %v561
  %v2477 = vmul.f32 %v2462, %v562
  %v2478 = vmul.f32 %v2460, %v563
  %v2479 = vmul.f32 %v2458, %v564
  %v2480 = vmul.f32 %v2456, %v565
  %v2481 = vmul.f32 %v2454, %v566
  %v2482 = vmul.f32 %v2452, %v567
  %2483 = vrot.lane.b32.xlu0 %v1699, 1
  %v2484 = vpop.permute.xlu0 %2483
  %2485 = vrot.lane.b32.xlu0 %v1707, 1
  %v2486 = vpop.permute.xlu0 %2485
  %2487 = vrot.lane.b32.xlu0 %v1700, 1
  %v2488 = vpop.permute.xlu0 %2487
  %2489 = vrot.lane.b32.xlu0 %v1708, 1
  %v2490 = vpop.permute.xlu0 %2489
  %2491 = vrot.lane.b32.xlu0 %v1701, 1
  %v2492 = vpop.permute.xlu0 %2491
  %2493 = vrot.lane.b32.xlu0 %v1709, 1
  %v2494 = vpop.permute.xlu0 %2493
  %2495 = vrot.lane.b32.xlu0 %v1702, 1
  %v2496 = vpop.permute.xlu0 %2495
  %2497 = vrot.lane.b32.xlu0 %v1710, 1
  %v2498 = vpop.permute.xlu0 %2497
  %2499 = vrot.lane.b32.xlu0 %v1703, 1
  %v2500 = vpop.permute.xlu0 %2499
  %2501 = vrot.lane.b32.xlu0 %v1711, 1
  %v2502 = vpop.permute.xlu0 %2501
  %2503 = vrot.lane.b32.xlu0 %v1704, 1
  %v2504 = vpop.permute.xlu0 %2503
  %2505 = vrot.lane.b32.xlu0 %v1712, 1
  %v2506 = vpop.permute.xlu0 %2505
  %2507 = vrot.lane.b32.xlu0 %v1705, 1
  %v2508 = vpop.permute.xlu0 %2507
  %2509 = vrot.lane.b32.xlu0 %v1713, 1
  %v2510 = vpop.permute.xlu0 %2509
  %2511 = vrot.lane.b32.xlu0 %v1706, 1
  %v2512 = vpop.permute.xlu0 %2511
  %2513 = vrot.lane.b32.xlu0 %v1714, 1
  %v2514 = vpop.permute.xlu0 %2513
  %v2515 = vsel %vm592, %v2508, %v2512
  %v2516 = vsel %vm592, %v2510, %v2514
  %v2517 = vsel %vm592, %v2504, %v2508
  %v2518 = vsel %vm592, %v2506, %v2510
  %v2519 = vsel %vm592, %v2500, %v2504
  %v2520 = vsel %vm592, %v2502, %v2506
  %v2521 = vsel %vm592, %v2496, %v2500
  %v2522 = vsel %vm592, %v2498, %v2502
  %v2523 = vsel %vm592, %v2492, %v2496
  %v2524 = vsel %vm592, %v2494, %v2498
  %v2525 = vsel %vm592, %v2488, %v2492
  %v2526 = vsel %vm592, %v2490, %v2494
  %v2527 = vsel %vm592, %v2484, %v2488
  %v2528 = vsel %vm592, %v2486, %v2490
  %v2529 = vsel %vm592, %v2512, %v2484
  %v2530 = vsel %vm592, %v2514, %v2486
  %v2531 = vmul.f32 %v2529, %v601
  %v2532 = vmul.f32 %v2527, %v602
  %v2533 = vmul.f32 %v2525, %v603
  %v2534 = vmul.f32 %v2523, %v604
  %v2535 = vmul.f32 %v2521, %v605
  %v2536 = vmul.f32 %v2519, %v606
  %v2537 = vmul.f32 %v2517, %v607
  %v2538 = vmul.f32 %v2515, %v608
  %v2539 = vmul.f32 %v2530, %v601
  %v2540 = vmul.f32 %v2528, %v602
  %v2541 = vmul.f32 %v2526, %v603
  %v2542 = vmul.f32 %v2524, %v604
  %v2543 = vmul.f32 %v2522, %v605
  %v2544 = vmul.f32 %v2520, %v606
  %v2545 = vmul.f32 %v2518, %v607
  %v2546 = vmul.f32 %v2516, %v608
  %2547 = vrot.lane.b32.xlu0 %v1699, 127
  %v2548 = vpop.permute.xlu0 %2547
  %2549 = vrot.lane.b32.xlu0 %v1707, 127
  %v2550 = vpop.permute.xlu0 %2549
  %2551 = vrot.lane.b32.xlu0 %v1700, 127
  %v2552 = vpop.permute.xlu0 %2551
  %2553 = vrot.lane.b32.xlu0 %v1708, 127
  %v2554 = vpop.permute.xlu0 %2553
  %2555 = vrot.lane.b32.xlu0 %v1701, 127
  %v2556 = vpop.permute.xlu0 %2555
  %2557 = vrot.lane.b32.xlu0 %v1709, 127
  %v2558 = vpop.permute.xlu0 %2557
  %2559 = vrot.lane.b32.xlu0 %v1702, 127
  %v2560 = vpop.permute.xlu0 %2559
  %2561 = vrot.lane.b32.xlu0 %v1710, 127
  %v2562 = vpop.permute.xlu0 %2561
  %2563 = vrot.lane.b32.xlu0 %v1703, 127
  %v2564 = vpop.permute.xlu0 %2563
  %2565 = vrot.lane.b32.xlu0 %v1711, 127
  %v2566 = vpop.permute.xlu0 %2565
  %2567 = vrot.lane.b32.xlu0 %v1704, 127
  %v2568 = vpop.permute.xlu0 %2567
  %2569 = vrot.lane.b32.xlu0 %v1712, 127
  %v2570 = vpop.permute.xlu0 %2569
  %2571 = vrot.lane.b32.xlu0 %v1705, 127
  %v2572 = vpop.permute.xlu0 %2571
  %2573 = vrot.lane.b32.xlu0 %v1713, 127
  %v2574 = vpop.permute.xlu0 %2573
  %2575 = vrot.lane.b32.xlu0 %v1706, 127
  %v2576 = vpop.permute.xlu0 %2575
  %2577 = vrot.lane.b32.xlu0 %v1714, 127
  %v2578 = vpop.permute.xlu0 %2577
  %v2579 = vsel %vm633, %v2572, %v2576
  %v2580 = vsel %vm633, %v2574, %v2578
  %v2581 = vsel %vm633, %v2568, %v2572
  %v2582 = vsel %vm633, %v2570, %v2574
  %v2583 = vsel %vm633, %v2564, %v2568
  %v2584 = vsel %vm633, %v2566, %v2570
  %v2585 = vsel %vm633, %v2560, %v2564
  %v2586 = vsel %vm633, %v2562, %v2566
  %v2587 = vsel %vm633, %v2556, %v2560
  %v2588 = vsel %vm633, %v2558, %v2562
  %v2589 = vsel %vm633, %v2552, %v2556
  %v2590 = vsel %vm633, %v2554, %v2558
  %v2591 = vsel %vm633, %v2548, %v2552
  %v2592 = vsel %vm633, %v2550, %v2554
  %v2593 = vsel %vm633, %v2576, %v2548
  %v2594 = vsel %vm633, %v2578, %v2550
  %v2595 = vmul.f32 %v2591, %v642
  %v2596 = vmul.f32 %v2589, %v643
  %v2597 = vmul.f32 %v2587, %v644
  %v2598 = vmul.f32 %v2585, %v645
  %v2599 = vmul.f32 %v2583, %v646
  %v2600 = vmul.f32 %v2581, %v647
  %v2601 = vmul.f32 %v2579, %v648
  %v2602 = vmul.f32 %v2593, %v649
  %v2603 = vmul.f32 %v2592, %v642
  %v2604 = vmul.f32 %v2590, %v643
  %v2605 = vmul.f32 %v2588, %v644
  %v2606 = vmul.f32 %v2586, %v645
  %v2607 = vmul.f32 %v2584, %v646
  %v2608 = vmul.f32 %v2582, %v647
  %v2609 = vmul.f32 %v2580, %v648
  %v2610 = vmul.f32 %v2594, %v649
  %2611 = vrot.lane.b32.xlu0 %v1699, 121
  %v2612 = vpop.permute.xlu0 %2611
  %2613 = vrot.lane.b32.xlu0 %v1707, 121
  %v2614 = vpop.permute.xlu0 %2613
  %2615 = vrot.lane.b32.xlu0 %v1700, 121
  %v2616 = vpop.permute.xlu0 %2615
  %2617 = vrot.lane.b32.xlu0 %v1708, 121
  %v2618 = vpop.permute.xlu0 %2617
  %2619 = vrot.lane.b32.xlu0 %v1701, 121
  %v2620 = vpop.permute.xlu0 %2619
  %2621 = vrot.lane.b32.xlu0 %v1709, 121
  %v2622 = vpop.permute.xlu0 %2621
  %2623 = vrot.lane.b32.xlu0 %v1702, 121
  %v2624 = vpop.permute.xlu0 %2623
  %2625 = vrot.lane.b32.xlu0 %v1710, 121
  %v2626 = vpop.permute.xlu0 %2625
  %2627 = vrot.lane.b32.xlu0 %v1703, 121
  %v2628 = vpop.permute.xlu0 %2627
  %2629 = vrot.lane.b32.xlu0 %v1711, 121
  %v2630 = vpop.permute.xlu0 %2629
  %2631 = vrot.lane.b32.xlu0 %v1704, 121
  %v2632 = vpop.permute.xlu0 %2631
  %2633 = vrot.lane.b32.xlu0 %v1712, 121
  %v2634 = vpop.permute.xlu0 %2633
  %2635 = vrot.lane.b32.xlu0 %v1705, 121
  %v2636 = vpop.permute.xlu0 %2635
  %2637 = vrot.lane.b32.xlu0 %v1713, 121
  %v2638 = vpop.permute.xlu0 %2637
  %2639 = vrot.lane.b32.xlu0 %v1706, 121
  %v2640 = vpop.permute.xlu0 %2639
  %2641 = vrot.lane.b32.xlu0 %v1714, 121
  %v2642 = vpop.permute.xlu0 %2641
  %v2643 = vsel %vm674, %v2636, %v2640
  %v2644 = vsel %vm674, %v2638, %v2642
  %v2645 = vsel %vm674, %v2632, %v2636
  %v2646 = vsel %vm674, %v2634, %v2638
  %v2647 = vsel %vm674, %v2628, %v2632
  %v2648 = vsel %vm674, %v2630, %v2634
  %v2649 = vsel %vm674, %v2624, %v2628
  %v2650 = vsel %vm674, %v2626, %v2630
  %v2651 = vsel %vm674, %v2620, %v2624
  %v2652 = vsel %vm674, %v2622, %v2626
  %v2653 = vsel %vm674, %v2616, %v2620
  %v2654 = vsel %vm674, %v2618, %v2622
  %v2655 = vsel %vm674, %v2612, %v2616
  %v2656 = vsel %vm674, %v2614, %v2618
  %v2657 = vsel %vm674, %v2640, %v2612
  %v2658 = vsel %vm674, %v2642, %v2614
  %v2659 = vmul.f32 %v2655, %v683
  %v2660 = vmul.f32 %v2653, %v684
  %v2661 = vmul.f32 %v2651, %v685
  %v2662 = vmul.f32 %v2649, %v686
  %v2663 = vmul.f32 %v2647, %v687
  %v2664 = vmul.f32 %v2645, %v688
  %v2665 = vmul.f32 %v2643, %v689
  %v2666 = vmul.f32 %v2657, %v690
  %v2667 = vmul.f32 %v2656, %v683
  %v2668 = vmul.f32 %v2654, %v684
  %v2669 = vmul.f32 %v2652, %v685
  %v2670 = vmul.f32 %v2650, %v686
  %v2671 = vmul.f32 %v2648, %v687
  %v2672 = vmul.f32 %v2646, %v688
  %v2673 = vmul.f32 %v2644, %v689
  %v2674 = vmul.f32 %v2658, %v690
  %2675 = vrot.lane.b32.xlu0 %v1699, 120
  %v2676 = vpop.permute.xlu0 %2675
  %2677 = vrot.lane.b32.xlu0 %v1707, 120
  %v2678 = vpop.permute.xlu0 %2677
  %2679 = vrot.lane.b32.xlu0 %v1700, 120
  %v2680 = vpop.permute.xlu0 %2679
  %2681 = vrot.lane.b32.xlu0 %v1708, 120
  %v2682 = vpop.permute.xlu0 %2681
  %2683 = vrot.lane.b32.xlu0 %v1701, 120
  %v2684 = vpop.permute.xlu0 %2683
  %2685 = vrot.lane.b32.xlu0 %v1709, 120
  %v2686 = vpop.permute.xlu0 %2685
  %2687 = vrot.lane.b32.xlu0 %v1702, 120
  %v2688 = vpop.permute.xlu0 %2687
  %2689 = vrot.lane.b32.xlu0 %v1710, 120
  %v2690 = vpop.permute.xlu0 %2689
  %2691 = vrot.lane.b32.xlu0 %v1703, 120
  %v2692 = vpop.permute.xlu0 %2691
  %2693 = vrot.lane.b32.xlu0 %v1711, 120
  %v2694 = vpop.permute.xlu0 %2693
  %2695 = vrot.lane.b32.xlu0 %v1704, 120
  %v2696 = vpop.permute.xlu0 %2695
  %2697 = vrot.lane.b32.xlu0 %v1712, 120
  %v2698 = vpop.permute.xlu0 %2697
  %2699 = vrot.lane.b32.xlu0 %v1705, 120
  %v2700 = vpop.permute.xlu0 %2699
  %2701 = vrot.lane.b32.xlu0 %v1713, 120
  %v2702 = vpop.permute.xlu0 %2701
  %2703 = vrot.lane.b32.xlu0 %v1706, 120
  %v2704 = vpop.permute.xlu0 %2703
  %2705 = vrot.lane.b32.xlu0 %v1714, 120
  %v2706 = vpop.permute.xlu0 %2705
  %v2707 = vsel %vm715, %v2700, %v2704
  %v2708 = vsel %vm715, %v2702, %v2706
  %v2709 = vsel %vm715, %v2696, %v2700
  %v2710 = vsel %vm715, %v2698, %v2702
  %v2711 = vsel %vm715, %v2692, %v2696
  %v2712 = vsel %vm715, %v2694, %v2698
  %v2713 = vsel %vm715, %v2688, %v2692
  %v2714 = vsel %vm715, %v2690, %v2694
  %v2715 = vsel %vm715, %v2684, %v2688
  %v2716 = vsel %vm715, %v2686, %v2690
  %v2717 = vsel %vm715, %v2680, %v2684
  %v2718 = vsel %vm715, %v2682, %v2686
  %v2719 = vsel %vm715, %v2676, %v2680
  %v2720 = vsel %vm715, %v2678, %v2682
  %v2721 = vsel %vm715, %v2704, %v2676
  %v2722 = vsel %vm715, %v2706, %v2678
  %v2723 = vmul.f32 %v2719, %v724
  %v2724 = vmul.f32 %v2717, %v725
  %v2725 = vmul.f32 %v2715, %v726
  %v2726 = vmul.f32 %v2713, %v727
  %v2727 = vmul.f32 %v2711, %v728
  %v2728 = vmul.f32 %v2709, %v729
  %v2729 = vmul.f32 %v2707, %v730
  %v2730 = vmul.f32 %v2721, %v731
  %v2731 = vmul.f32 %v2720, %v724
  %v2732 = vmul.f32 %v2718, %v725
  %v2733 = vmul.f32 %v2716, %v726
  %v2734 = vmul.f32 %v2714, %v727
  %v2735 = vmul.f32 %v2712, %v728
  %v2736 = vmul.f32 %v2710, %v729
  %v2737 = vmul.f32 %v2708, %v730
  %v2738 = vmul.f32 %v2722, %v731
  %2739 = vrot.lane.b32.xlu0 %v1699, 119
  %v2740 = vpop.permute.xlu0 %2739
  %2741 = vrot.lane.b32.xlu0 %v1707, 119
  %v2742 = vpop.permute.xlu0 %2741
  %2743 = vrot.lane.b32.xlu0 %v1700, 119
  %v2744 = vpop.permute.xlu0 %2743
  %2745 = vrot.lane.b32.xlu0 %v1708, 119
  %v2746 = vpop.permute.xlu0 %2745
  %2747 = vrot.lane.b32.xlu0 %v1701, 119
  %v2748 = vpop.permute.xlu0 %2747
  %2749 = vrot.lane.b32.xlu0 %v1709, 119
  %v2750 = vpop.permute.xlu0 %2749
  %2751 = vrot.lane.b32.xlu0 %v1702, 119
  %v2752 = vpop.permute.xlu0 %2751
  %2753 = vrot.lane.b32.xlu0 %v1710, 119
  %v2754 = vpop.permute.xlu0 %2753
  %2755 = vrot.lane.b32.xlu0 %v1703, 119
  %v2756 = vpop.permute.xlu0 %2755
  %2757 = vrot.lane.b32.xlu0 %v1711, 119
  %v2758 = vpop.permute.xlu0 %2757
  %2759 = vrot.lane.b32.xlu0 %v1704, 119
  %v2760 = vpop.permute.xlu0 %2759
  %2761 = vrot.lane.b32.xlu0 %v1712, 119
  %v2762 = vpop.permute.xlu0 %2761
  %2763 = vrot.lane.b32.xlu0 %v1705, 119
  %v2764 = vpop.permute.xlu0 %2763
  %2765 = vrot.lane.b32.xlu0 %v1713, 119
  %v2766 = vpop.permute.xlu0 %2765
  %2767 = vrot.lane.b32.xlu0 %v1706, 119
  %v2768 = vpop.permute.xlu0 %2767
  %2769 = vrot.lane.b32.xlu0 %v1714, 119
  %v2770 = vpop.permute.xlu0 %2769
  %v2771 = vsel %vm756, %v2764, %v2768
  %v2772 = vsel %vm756, %v2766, %v2770
  %v2773 = vsel %vm756, %v2760, %v2764
  %v2774 = vsel %vm756, %v2762, %v2766
  %v2775 = vsel %vm756, %v2756, %v2760
  %v2776 = vsel %vm756, %v2758, %v2762
  %v2777 = vsel %vm756, %v2752, %v2756
  %v2778 = vsel %vm756, %v2754, %v2758
  %v2779 = vsel %vm756, %v2748, %v2752
  %v2780 = vsel %vm756, %v2750, %v2754
  %v2781 = vsel %vm756, %v2744, %v2748
  %v2782 = vsel %vm756, %v2746, %v2750
  %v2783 = vsel %vm756, %v2740, %v2744
  %v2784 = vsel %vm756, %v2742, %v2746
  %v2785 = vsel %vm756, %v2768, %v2740
  %v2786 = vsel %vm756, %v2770, %v2742
  %v2787 = vmul.f32 %v2783, %v765
  %v2788 = vmul.f32 %v2781, %v766
  %v2789 = vmul.f32 %v2779, %v767
  %v2790 = vmul.f32 %v2777, %v768
  %v2791 = vmul.f32 %v2775, %v769
  %v2792 = vmul.f32 %v2773, %v770
  %v2793 = vmul.f32 %v2771, %v771
  %v2794 = vmul.f32 %v2785, %v772
  %v2795 = vmul.f32 %v2784, %v765
  %v2796 = vmul.f32 %v2782, %v766
  %v2797 = vmul.f32 %v2780, %v767
  %v2798 = vmul.f32 %v2778, %v768
  %v2799 = vmul.f32 %v2776, %v769
  %v2800 = vmul.f32 %v2774, %v770
  %v2801 = vmul.f32 %v2772, %v771
  %v2802 = vmul.f32 %v2786, %v772
  %v2803 = vmul.f32 %v1759, %v781
  %v2804 = vmul.f32 %v1757, %v782
  %v2805 = vmul.f32 %v1755, %v783
  %v2806 = vmul.f32 %v1753, %v784
  %v2807 = vmul.f32 %v1751, %v785
  %v2808 = vmul.f32 %v1749, %v786
  %v2809 = vmul.f32 %v1747, %v787
  %v2810 = vmul.f32 %v1761, %v788
  %v2811 = vmul.f32 %v1760, %v781
  %v2812 = vmul.f32 %v1758, %v782
  %v2813 = vmul.f32 %v1756, %v783
  %v2814 = vmul.f32 %v1754, %v784
  %v2815 = vmul.f32 %v1752, %v785
  %v2816 = vmul.f32 %v1750, %v786
  %v2817 = vmul.f32 %v1748, %v787
  %v2818 = vmul.f32 %v1762, %v788
  %v2819 = vmul.f32 %v1823, %v797
  %v2820 = vmul.f32 %v1821, %v798
  %v2821 = vmul.f32 %v1819, %v799
  %v2822 = vmul.f32 %v1817, %v800
  %v2823 = vmul.f32 %v1815, %v801
  %v2824 = vmul.f32 %v1813, %v802
  %v2825 = vmul.f32 %v1811, %v803
  %v2826 = vmul.f32 %v1825, %v804
  %v2827 = vmul.f32 %v1824, %v797
  %v2828 = vmul.f32 %v1822, %v798
  %v2829 = vmul.f32 %v1820, %v799
  %v2830 = vmul.f32 %v1818, %v800
  %v2831 = vmul.f32 %v1816, %v801
  %v2832 = vmul.f32 %v1814, %v802
  %v2833 = vmul.f32 %v1812, %v803
  %v2834 = vmul.f32 %v1826, %v804
  %v2835 = vmul.f32 %v1887, %v813
  %v2836 = vmul.f32 %v1885, %v814
  %v2837 = vmul.f32 %v1883, %v815
  %v2838 = vmul.f32 %v1881, %v816
  %v2839 = vmul.f32 %v1879, %v817
  %v2840 = vmul.f32 %v1877, %v818
  %v2841 = vmul.f32 %v1875, %v819
  %v2842 = vmul.f32 %v1889, %v820
  %v2843 = vmul.f32 %v1888, %v813
  %v2844 = vmul.f32 %v1886, %v814
  %v2845 = vmul.f32 %v1884, %v815
  %v2846 = vmul.f32 %v1882, %v816
  %v2847 = vmul.f32 %v1880, %v817
  %v2848 = vmul.f32 %v1878, %v818
  %v2849 = vmul.f32 %v1876, %v819
  %v2850 = vmul.f32 %v1890, %v820
  %v2851 = vmul.f32 %v1951, %v829
  %v2852 = vmul.f32 %v1949, %v830
  %v2853 = vmul.f32 %v1947, %v831
  %v2854 = vmul.f32 %v1945, %v832
  %v2855 = vmul.f32 %v1943, %v833
  %v2856 = vmul.f32 %v1941, %v834
  %v2857 = vmul.f32 %v1939, %v835
  %v2858 = vmul.f32 %v1953, %v836
  %v2859 = vmul.f32 %v1952, %v829
  %v2860 = vmul.f32 %v1950, %v830
  %v2861 = vmul.f32 %v1948, %v831
  %v2862 = vmul.f32 %v1946, %v832
  %v2863 = vmul.f32 %v1944, %v833
  %v2864 = vmul.f32 %v1942, %v834
  %v2865 = vmul.f32 %v1940, %v835
  %v2866 = vmul.f32 %v1954, %v836
  %v2867 = vmul.f32 %v2015, %v845
  %v2868 = vmul.f32 %v2013, %v846
  %v2869 = vmul.f32 %v2011, %v847
  %v2870 = vmul.f32 %v2009, %v848
  %v2871 = vmul.f32 %v2007, %v849
  %v2872 = vmul.f32 %v2005, %v850
  %v2873 = vmul.f32 %v2003, %v851
  %v2874 = vmul.f32 %v2017, %v852
  %v2875 = vmul.f32 %v2016, %v845
  %v2876 = vmul.f32 %v2014, %v846
  %v2877 = vmul.f32 %v2012, %v847
  %v2878 = vmul.f32 %v2010, %v848
  %v2879 = vmul.f32 %v2008, %v849
  %v2880 = vmul.f32 %v2006, %v850
  %v2881 = vmul.f32 %v2004, %v851
  %v2882 = vmul.f32 %v2018, %v852
  %v2883 = vmul.f32 %v2079, %v861
  %v2884 = vmul.f32 %v2077, %v862
  %v2885 = vmul.f32 %v2075, %v863
  %v2886 = vmul.f32 %v2073, %v864
  %v2887 = vmul.f32 %v2071, %v865
  %v2888 = vmul.f32 %v2069, %v866
  %v2889 = vmul.f32 %v2067, %v867
  %v2890 = vmul.f32 %v2081, %v868
  %v2891 = vmul.f32 %v2080, %v861
  %v2892 = vmul.f32 %v2078, %v862
  %v2893 = vmul.f32 %v2076, %v863
  %v2894 = vmul.f32 %v2074, %v864
  %v2895 = vmul.f32 %v2072, %v865
  %v2896 = vmul.f32 %v2070, %v866
  %v2897 = vmul.f32 %v2068, %v867
  %v2898 = vmul.f32 %v2082, %v868
  %v2899 = vmul.f32 %v2143, %v877
  %v2900 = vmul.f32 %v2141, %v878
  %v2901 = vmul.f32 %v2139, %v879
  %v2902 = vmul.f32 %v2137, %v880
  %v2903 = vmul.f32 %v2135, %v881
  %v2904 = vmul.f32 %v2133, %v882
  %v2905 = vmul.f32 %v2131, %v883
  %v2906 = vmul.f32 %v2145, %v884
  %v2907 = vmul.f32 %v2144, %v877
  %v2908 = vmul.f32 %v2142, %v878
  %v2909 = vmul.f32 %v2140, %v879
  %v2910 = vmul.f32 %v2138, %v880
  %v2911 = vmul.f32 %v2136, %v881
  %v2912 = vmul.f32 %v2134, %v882
  %v2913 = vmul.f32 %v2132, %v883
  %v2914 = vmul.f32 %v2146, %v884
  %v2915 = vmul.f32 %v2207, %v893
  %v2916 = vmul.f32 %v2205, %v894
  %v2917 = vmul.f32 %v2203, %v895
  %v2918 = vmul.f32 %v2201, %v896
  %v2919 = vmul.f32 %v2199, %v897
  %v2920 = vmul.f32 %v2197, %v898
  %v2921 = vmul.f32 %v2195, %v899
  %v2922 = vmul.f32 %v2209, %v900
  %v2923 = vmul.f32 %v2208, %v893
  %v2924 = vmul.f32 %v2206, %v894
  %v2925 = vmul.f32 %v2204, %v895
  %v2926 = vmul.f32 %v2202, %v896
  %v2927 = vmul.f32 %v2200, %v897
  %v2928 = vmul.f32 %v2198, %v898
  %v2929 = vmul.f32 %v2196, %v899
  %v2930 = vmul.f32 %v2210, %v900
  %v2931 = vmul.f32 %v2271, %v909
  %v2932 = vmul.f32 %v2269, %v910
  %v2933 = vmul.f32 %v2267, %v911
  %v2934 = vmul.f32 %v2265, %v912
  %v2935 = vmul.f32 %v2263, %v913
  %v2936 = vmul.f32 %v2261, %v914
  %v2937 = vmul.f32 %v2259, %v915
  %v2938 = vmul.f32 %v2273, %v916
  %v2939 = vmul.f32 %v2272, %v909
  %v2940 = vmul.f32 %v2270, %v910
  %v2941 = vmul.f32 %v2268, %v911
  %v2942 = vmul.f32 %v2266, %v912
  %v2943 = vmul.f32 %v2264, %v913
  %v2944 = vmul.f32 %v2262, %v914
  %v2945 = vmul.f32 %v2260, %v915
  %v2946 = vmul.f32 %v2274, %v916
  %v2947 = vpack.c.bf16 %v1771, %v1763
  %v2948 = vpack.c.bf16 %v1772, %v1764
  %v2949 = vpack.c.bf16 %v1773, %v1765
  %v2950 = vpack.c.bf16 %v1774, %v1766
  %v2951 = vpack.c.bf16 %v1775, %v1767
  %v2952 = vpack.c.bf16 %v1776, %v1768
  %v2953 = vpack.c.bf16 %v1777, %v1769
  %v2954 = vpack.c.bf16 %v1778, %v1770
  %v2955 = vpack.c.bf16 %v1835, %v1827
  %v2956 = vpack.c.bf16 %v1836, %v1828
  %v2957 = vpack.c.bf16 %v1837, %v1829
  %v2958 = vpack.c.bf16 %v1838, %v1830
  %v2959 = vpack.c.bf16 %v1839, %v1831
  %v2960 = vpack.c.bf16 %v1840, %v1832
  %v2961 = vpack.c.bf16 %v1841, %v1833
  %v2962 = vpack.c.bf16 %v1842, %v1834
  %v2963 = vpack.c.bf16 %v1899, %v1891
  %v2964 = vpack.c.bf16 %v1900, %v1892
  %v2965 = vpack.c.bf16 %v1901, %v1893
  %v2966 = vpack.c.bf16 %v1902, %v1894
  %v2967 = vpack.c.bf16 %v1903, %v1895
  %v2968 = vpack.c.bf16 %v1904, %v1896
  %v2969 = vpack.c.bf16 %v1905, %v1897
  %v2970 = vpack.c.bf16 %v1906, %v1898
  %v2971 = vpack.c.bf16 %v1963, %v1955
  %v2972 = vpack.c.bf16 %v1964, %v1956
  %v2973 = vpack.c.bf16 %v1965, %v1957
  %v2974 = vpack.c.bf16 %v1966, %v1958
  %v2975 = vpack.c.bf16 %v1967, %v1959
  %v2976 = vpack.c.bf16 %v1968, %v1960
  %v2977 = vpack.c.bf16 %v1969, %v1961
  %v2978 = vpack.c.bf16 %v1970, %v1962
  %v2979 = vpack.c.bf16 %v2027, %v2019
  %v2980 = vpack.c.bf16 %v2028, %v2020
  %v2981 = vpack.c.bf16 %v2029, %v2021
  %v2982 = vpack.c.bf16 %v2030, %v2022
  %v2983 = vpack.c.bf16 %v2031, %v2023
  %v2984 = vpack.c.bf16 %v2032, %v2024
  %v2985 = vpack.c.bf16 %v2033, %v2025
  %v2986 = vpack.c.bf16 %v2034, %v2026
  %v2987 = vpack.c.bf16 %v2091, %v2083
  %v2988 = vpack.c.bf16 %v2092, %v2084
  %v2989 = vpack.c.bf16 %v2093, %v2085
  %v2990 = vpack.c.bf16 %v2094, %v2086
  %v2991 = vpack.c.bf16 %v2095, %v2087
  %v2992 = vpack.c.bf16 %v2096, %v2088
  %v2993 = vpack.c.bf16 %v2097, %v2089
  %v2994 = vpack.c.bf16 %v2098, %v2090
  %v2995 = vpack.c.bf16 %v2155, %v2147
  %v2996 = vpack.c.bf16 %v2156, %v2148
  %v2997 = vpack.c.bf16 %v2157, %v2149
  %v2998 = vpack.c.bf16 %v2158, %v2150
  %v2999 = vpack.c.bf16 %v2159, %v2151
  %v3000 = vpack.c.bf16 %v2160, %v2152
  %v3001 = vpack.c.bf16 %v2161, %v2153
  %v3002 = vpack.c.bf16 %v2162, %v2154
  %v3003 = vpack.c.bf16 %v2219, %v2211
  %v3004 = vpack.c.bf16 %v2220, %v2212
  %v3005 = vpack.c.bf16 %v2221, %v2213
  %v3006 = vpack.c.bf16 %v2222, %v2214
  %v3007 = vpack.c.bf16 %v2223, %v2215
  %v3008 = vpack.c.bf16 %v2224, %v2216
  %v3009 = vpack.c.bf16 %v2225, %v2217
  %v3010 = vpack.c.bf16 %v2226, %v2218
  %v3011 = vpack.c.bf16 %v2283, %v2275
  %v3012 = vpack.c.bf16 %v2284, %v2276
  %v3013 = vpack.c.bf16 %v2285, %v2277
  %v3014 = vpack.c.bf16 %v2286, %v2278
  %v3015 = vpack.c.bf16 %v2287, %v2279
  %v3016 = vpack.c.bf16 %v2288, %v2280
  %v3017 = vpack.c.bf16 %v2289, %v2281
  %v3018 = vpack.c.bf16 %v2290, %v2282
  %v3019 = vpack.c.bf16 %v2347, %v2339
  %v3020 = vpack.c.bf16 %v2348, %v2340
  %v3021 = vpack.c.bf16 %v2349, %v2341
  %v3022 = vpack.c.bf16 %v2350, %v2342
  %v3023 = vpack.c.bf16 %v2351, %v2343
  %v3024 = vpack.c.bf16 %v2352, %v2344
  %v3025 = vpack.c.bf16 %v2353, %v2345
  %v3026 = vpack.c.bf16 %v2354, %v2346
  %v3027 = vpack.c.bf16 %v2411, %v2403
  %v3028 = vpack.c.bf16 %v2412, %v2404
  %v3029 = vpack.c.bf16 %v2413, %v2405
  %v3030 = vpack.c.bf16 %v2414, %v2406
  %v3031 = vpack.c.bf16 %v2415, %v2407
  %v3032 = vpack.c.bf16 %v2416, %v2408
  %v3033 = vpack.c.bf16 %v2417, %v2409
  %v3034 = vpack.c.bf16 %v2418, %v2410
  %v3035 = vpack.c.bf16 %v2475, %v2467
  %v3036 = vpack.c.bf16 %v2476, %v2468
  %v3037 = vpack.c.bf16 %v2477, %v2469
  %v3038 = vpack.c.bf16 %v2478, %v2470
  %v3039 = vpack.c.bf16 %v2479, %v2471
  %v3040 = vpack.c.bf16 %v2480, %v2472
  %v3041 = vpack.c.bf16 %v2481, %v2473
  %v3042 = vpack.c.bf16 %v2482, %v2474
  %v3043 = vpack.c.bf16 %v2539, %v2531
  %v3044 = vpack.c.bf16 %v2540, %v2532
  %v3045 = vpack.c.bf16 %v2541, %v2533
  %v3046 = vpack.c.bf16 %v2542, %v2534
  %v3047 = vpack.c.bf16 %v2543, %v2535
  %v3048 = vpack.c.bf16 %v2544, %v2536
  %v3049 = vpack.c.bf16 %v2545, %v2537
  %v3050 = vpack.c.bf16 %v2546, %v2538
  %v3051 = vpack.c.bf16 %v1707, %v1699
  %v3052 = vpack.c.bf16 %v1708, %v1700
  %v3053 = vpack.c.bf16 %v1709, %v1701
  %v3054 = vpack.c.bf16 %v1710, %v1702
  %v3055 = vpack.c.bf16 %v1711, %v1703
  %v3056 = vpack.c.bf16 %v1712, %v1704
  %v3057 = vpack.c.bf16 %v1713, %v1705
  %v3058 = vpack.c.bf16 %v1714, %v1706
  %v3059 = vpack.c.bf16 %v2603, %v2595
  %v3060 = vpack.c.bf16 %v2604, %v2596
  %v3061 = vpack.c.bf16 %v2605, %v2597
  %v3062 = vpack.c.bf16 %v2606, %v2598
  %v3063 = vpack.c.bf16 %v2607, %v2599
  %v3064 = vpack.c.bf16 %v2608, %v2600
  %v3065 = vpack.c.bf16 %v2609, %v2601
  %v3066 = vpack.c.bf16 %v2610, %v2602
  %v3067 = vpack.c.bf16 %v2667, %v2659
  %v3068 = vpack.c.bf16 %v2668, %v2660
  %v3069 = vpack.c.bf16 %v2669, %v2661
  %v3070 = vpack.c.bf16 %v2670, %v2662
  %v3071 = vpack.c.bf16 %v2671, %v2663
  %v3072 = vpack.c.bf16 %v2672, %v2664
  %v3073 = vpack.c.bf16 %v2673, %v2665
  %v3074 = vpack.c.bf16 %v2674, %v2666
  %v3075 = vpack.c.bf16 %v2731, %v2723
  %v3076 = vpack.c.bf16 %v2732, %v2724
  %v3077 = vpack.c.bf16 %v2733, %v2725
  %v3078 = vpack.c.bf16 %v2734, %v2726
  %v3079 = vpack.c.bf16 %v2735, %v2727
  %v3080 = vpack.c.bf16 %v2736, %v2728
  %v3081 = vpack.c.bf16 %v2737, %v2729
  %v3082 = vpack.c.bf16 %v2738, %v2730
  %v3083 = vpack.c.bf16 %v2795, %v2787
  %v3084 = vpack.c.bf16 %v2796, %v2788
  %v3085 = vpack.c.bf16 %v2797, %v2789
  %v3086 = vpack.c.bf16 %v2798, %v2790
  %v3087 = vpack.c.bf16 %v2799, %v2791
  %v3088 = vpack.c.bf16 %v2800, %v2792
  %v3089 = vpack.c.bf16 %v2801, %v2793
  %v3090 = vpack.c.bf16 %v2802, %v2794
  %v3091 = vpack.c.bf16 %v2811, %v2803
  %v3092 = vpack.c.bf16 %v2812, %v2804
  %v3093 = vpack.c.bf16 %v2813, %v2805
  %v3094 = vpack.c.bf16 %v2814, %v2806
  %v3095 = vpack.c.bf16 %v2815, %v2807
  %v3096 = vpack.c.bf16 %v2816, %v2808
  %v3097 = vpack.c.bf16 %v2817, %v2809
  %v3098 = vpack.c.bf16 %v2818, %v2810
  %v3099 = vpack.c.bf16 %v2827, %v2819
  %v3100 = vpack.c.bf16 %v2828, %v2820
  %v3101 = vpack.c.bf16 %v2829, %v2821
  %v3102 = vpack.c.bf16 %v2830, %v2822
  %v3103 = vpack.c.bf16 %v2831, %v2823
  %v3104 = vpack.c.bf16 %v2832, %v2824
  %v3105 = vpack.c.bf16 %v2833, %v2825
  %v3106 = vpack.c.bf16 %v2834, %v2826
  %v3107 = vpack.c.bf16 %v2843, %v2835
  %v3108 = vpack.c.bf16 %v2844, %v2836
  %v3109 = vpack.c.bf16 %v2845, %v2837
  %v3110 = vpack.c.bf16 %v2846, %v2838
  %v3111 = vpack.c.bf16 %v2847, %v2839
  %v3112 = vpack.c.bf16 %v2848, %v2840
  %v3113 = vpack.c.bf16 %v2849, %v2841
  %v3114 = vpack.c.bf16 %v2850, %v2842
  %v3115 = vpack.c.bf16 %v2859, %v2851
  %v3116 = vpack.c.bf16 %v2860, %v2852
  %v3117 = vpack.c.bf16 %v2861, %v2853
  %v3118 = vpack.c.bf16 %v2862, %v2854
  %v3119 = vpack.c.bf16 %v2863, %v2855
  %v3120 = vpack.c.bf16 %v2864, %v2856
  %v3121 = vpack.c.bf16 %v2865, %v2857
  %v3122 = vpack.c.bf16 %v2866, %v2858
  %v3123 = vpack.c.bf16 %v2875, %v2867
  %v3124 = vpack.c.bf16 %v2876, %v2868
  %v3125 = vpack.c.bf16 %v2877, %v2869
  %v3126 = vpack.c.bf16 %v2878, %v2870
  %v3127 = vpack.c.bf16 %v2879, %v2871
  %v3128 = vpack.c.bf16 %v2880, %v2872
  %v3129 = vpack.c.bf16 %v2881, %v2873
  %v3130 = vpack.c.bf16 %v2882, %v2874
  %v3131 = vpack.c.bf16 %v2891, %v2883
  %v3132 = vpack.c.bf16 %v2892, %v2884
  %v3133 = vpack.c.bf16 %v2893, %v2885
  %v3134 = vpack.c.bf16 %v2894, %v2886
  %v3135 = vpack.c.bf16 %v2895, %v2887
  %v3136 = vpack.c.bf16 %v2896, %v2888
  %v3137 = vpack.c.bf16 %v2897, %v2889
  %v3138 = vpack.c.bf16 %v2898, %v2890
  %v3139 = vpack.c.bf16 %v2907, %v2899
  %v3140 = vpack.c.bf16 %v2908, %v2900
  %v3141 = vpack.c.bf16 %v2909, %v2901
  %v3142 = vpack.c.bf16 %v2910, %v2902
  %v3143 = vpack.c.bf16 %v2911, %v2903
  %v3144 = vpack.c.bf16 %v2912, %v2904
  %v3145 = vpack.c.bf16 %v2913, %v2905
  %v3146 = vpack.c.bf16 %v2914, %v2906
  %v3147 = vpack.c.bf16 %v2923, %v2915
  %v3148 = vpack.c.bf16 %v2924, %v2916
  %v3149 = vpack.c.bf16 %v2925, %v2917
  %v3150 = vpack.c.bf16 %v2926, %v2918
  %v3151 = vpack.c.bf16 %v2927, %v2919
  %v3152 = vpack.c.bf16 %v2928, %v2920
  %v3153 = vpack.c.bf16 %v2929, %v2921
  %v3154 = vpack.c.bf16 %v2930, %v2922
  %v3155 = vpack.c.bf16 %v2939, %v2931
  %v3156 = vpack.c.bf16 %v2940, %v2932
  %v3157 = vpack.c.bf16 %v2941, %v2933
  %v3158 = vpack.c.bf16 %v2942, %v2934
  %v3159 = vpack.c.bf16 %v2943, %v2935
  %v3160 = vpack.c.bf16 %v2944, %v2936
  %v3161 = vpack.c.bf16 %v2945, %v2937
  %v3162 = vpack.c.bf16 %v2946, %v2938
  %v3163 = vld [vmem:[%s5] sm:$0xff]
  %v3164 = vld [vmem:[%s5 + $0x8] sm:$0xff]
  %v3165 = vld [vmem:[%s5 + $0x10] sm:$0xff]
  %v3166 = vld [vmem:[%s5 + $0x18] sm:$0xff]
  %v3171 = vunpack.c.l.b16 %v3163
  %v3172 = vunpack.c.h.b16 %v3163
  %v3173 = vunpack.c.l.b16 %v3164
  %v3174 = vunpack.c.h.b16 %v3164
  %v3175 = vunpack.c.l.b16 %v3165
  %v3176 = vunpack.c.h.b16 %v3165
  %v3177 = vunpack.c.l.b16 %v3166
  %v3178 = vunpack.c.h.b16 %v3166
  %v3179 = vpack.c.b16 %v3175, %v3171
  %v3180 = vpack.c.b16 %v3176, %v3172
  %v3181 = vpack.c.b16 %v3177, %v3173
  %v3182 = vpack.c.b16 %v3178, %v3174
  %vm3186 = vcmask 392192
  %v3188 = vsel %vm3186, %v3182, 0
  %3190 = vmatpush.bf16.msra.mxu0 %v3003
  %3191 = vmatpush.bf16.msra.mxu0 %v2995
  %3192 = vmatpush.bf16.msra.mxu0 %v2987
  %3193 = vmatpush.bf16.msra.mxu0 %v2979
  %3194 = vmatpush.bf16.msra.mxu0 %v2971
  %3195 = vmatpush.bf16.msra.mxu0 %v2963
  %3196 = vmatpush.bf16.msra.mxu0 %v2955
  %3197 = vmatpush.bf16.msra.mxu0 %v2947
  %3198 = vmatmul.bf16.gmra.mxu0 %v3179
  %v3199 = vpop.f32.mrf.mxu0
  %v3200 = vadd.f32 0.0, %v3199
  %v3201 = vpop.f32.mrf.mxu0
  %v3202 = vadd.f32 0.0, %v3201
  %3203 = vdwg.mxu0
  %3204 = vmatpush.bf16.msra.mxu0 %v3067
  %3205 = vmatpush.bf16.msra.mxu0 %v3059
  %3206 = vmatpush.bf16.msra.mxu0 %v3051
  %3207 = vmatpush.bf16.msra.mxu0 %v3043
  %3208 = vmatpush.bf16.msra.mxu0 %v3035
  %3209 = vmatpush.bf16.msra.mxu0 %v3027
  %3210 = vmatpush.bf16.msra.mxu0 %v3019
  %3211 = vmatpush.bf16.msra.mxu0 %v3011
  %3212 = vmatmul.bf16.gmra.mxu0 %v3180
  %v3213 = vpop.f32.mrf.mxu0
  %v3214 = vadd.f32 %v3200, %v3213
  %v3215 = vpop.f32.mrf.mxu0
  %v3216 = vadd.f32 %v3202, %v3215
  %3217 = vdwg.mxu0
  %3218 = vmatpush.bf16.msra.mxu0 %v3131
  %3219 = vmatpush.bf16.msra.mxu0 %v3123
  %3220 = vmatpush.bf16.msra.mxu0 %v3115
  %3221 = vmatpush.bf16.msra.mxu0 %v3107
  %3222 = vmatpush.bf16.msra.mxu0 %v3099
  %3223 = vmatpush.bf16.msra.mxu0 %v3091
  %3224 = vmatpush.bf16.msra.mxu0 %v3083
  %3225 = vmatpush.bf16.msra.mxu0 %v3075
  %3226 = vmatmul.bf16.gmra.mxu0 %v3181
  %v3227 = vpop.f32.mrf.mxu0
  %v3228 = vadd.f32 %v3214, %v3227
  %v3229 = vpop.f32.mrf.mxu0
  %v3230 = vadd.f32 %v3216, %v3229
  %3231 = vdwg.mxu0
  %3232 = vmatpush.bf16.msra.mxu0 0
  %3233 = vmatpush.bf16.msra.mxu0 0
  %3234 = vmatpush.bf16.msra.mxu0 0
  %3235 = vmatpush.bf16.msra.mxu0 0
  %3236 = vmatpush.bf16.msra.mxu0 0
  %3237 = vmatpush.bf16.msra.mxu0 %v3155
  %3238 = vmatpush.bf16.msra.mxu0 %v3147
  %3239 = vmatpush.bf16.msra.mxu0 %v3139
  %3240 = vmatmul.bf16.gmra.mxu0 %v3188
  %v3241 = vpop.f32.mrf.mxu0
  %v3242 = vadd.f32 %v3228, %v3241
  %v3243 = vpop.f32.mrf.mxu0
  %v3244 = vadd.f32 %v3230, %v3243
  %3245 = vdwg.mxu0
  %3246 = vmatpush.bf16.msra.mxu0 %v3004
  %3247 = vmatpush.bf16.msra.mxu0 %v2996
  %3248 = vmatpush.bf16.msra.mxu0 %v2988
  %3249 = vmatpush.bf16.msra.mxu0 %v2980
  %3250 = vmatpush.bf16.msra.mxu0 %v2972
  %3251 = vmatpush.bf16.msra.mxu0 %v2964
  %3252 = vmatpush.bf16.msra.mxu0 %v2956
  %3253 = vmatpush.bf16.msra.mxu0 %v2948
  %3254 = vmatmul.bf16.gmra.mxu0 %v3179
  %v3255 = vpop.f32.mrf.mxu0
  %v3256 = vadd.f32 0.0, %v3255
  %v3257 = vpop.f32.mrf.mxu0
  %v3258 = vadd.f32 0.0, %v3257
  %3259 = vdwg.mxu0
  %3260 = vmatpush.bf16.msra.mxu0 %v3068
  %3261 = vmatpush.bf16.msra.mxu0 %v3060
  %3262 = vmatpush.bf16.msra.mxu0 %v3052
  %3263 = vmatpush.bf16.msra.mxu0 %v3044
  %3264 = vmatpush.bf16.msra.mxu0 %v3036
  %3265 = vmatpush.bf16.msra.mxu0 %v3028
  %3266 = vmatpush.bf16.msra.mxu0 %v3020
  %3267 = vmatpush.bf16.msra.mxu0 %v3012
  %3268 = vmatmul.bf16.gmra.mxu0 %v3180
  %v3269 = vpop.f32.mrf.mxu0
  %v3270 = vadd.f32 %v3256, %v3269
  %v3271 = vpop.f32.mrf.mxu0
  %v3272 = vadd.f32 %v3258, %v3271
  %3273 = vdwg.mxu0
  %3274 = vmatpush.bf16.msra.mxu0 %v3132
  %3275 = vmatpush.bf16.msra.mxu0 %v3124
  %3276 = vmatpush.bf16.msra.mxu0 %v3116
  %3277 = vmatpush.bf16.msra.mxu0 %v3108
  %3278 = vmatpush.bf16.msra.mxu0 %v3100
  %3279 = vmatpush.bf16.msra.mxu0 %v3092
  %3280 = vmatpush.bf16.msra.mxu0 %v3084
  %3281 = vmatpush.bf16.msra.mxu0 %v3076
  %3282 = vmatmul.bf16.gmra.mxu0 %v3181
  %v3283 = vpop.f32.mrf.mxu0
  %v3284 = vadd.f32 %v3270, %v3283
  %v3285 = vpop.f32.mrf.mxu0
  %v3286 = vadd.f32 %v3272, %v3285
  %3287 = vdwg.mxu0
  %3288 = vmatpush.bf16.msra.mxu0 0
  %3289 = vmatpush.bf16.msra.mxu0 0
  %3290 = vmatpush.bf16.msra.mxu0 0
  %3291 = vmatpush.bf16.msra.mxu0 0
  %3292 = vmatpush.bf16.msra.mxu0 0
  %3293 = vmatpush.bf16.msra.mxu0 %v3156
  %3294 = vmatpush.bf16.msra.mxu0 %v3148
  %3295 = vmatpush.bf16.msra.mxu0 %v3140
  %3296 = vmatmul.bf16.gmra.mxu0 %v3188
  %v3297 = vpop.f32.mrf.mxu0
  %v3298 = vadd.f32 %v3284, %v3297
  %v3299 = vpop.f32.mrf.mxu0
  %v3300 = vadd.f32 %v3286, %v3299
  %3301 = vdwg.mxu0
  %3302 = vmatpush.bf16.msra.mxu0 %v3005
  %3303 = vmatpush.bf16.msra.mxu0 %v2997
  %3304 = vmatpush.bf16.msra.mxu0 %v2989
  %3305 = vmatpush.bf16.msra.mxu0 %v2981
  %3306 = vmatpush.bf16.msra.mxu0 %v2973
  %3307 = vmatpush.bf16.msra.mxu0 %v2965
  %3308 = vmatpush.bf16.msra.mxu0 %v2957
  %3309 = vmatpush.bf16.msra.mxu0 %v2949
  %3310 = vmatmul.bf16.gmra.mxu0 %v3179
  %v3311 = vpop.f32.mrf.mxu0
  %v3312 = vadd.f32 0.0, %v3311
  %v3313 = vpop.f32.mrf.mxu0
  %v3314 = vadd.f32 0.0, %v3313
  %3315 = vdwg.mxu0
  %3316 = vmatpush.bf16.msra.mxu0 %v3069
  %3317 = vmatpush.bf16.msra.mxu0 %v3061
  %3318 = vmatpush.bf16.msra.mxu0 %v3053
  %3319 = vmatpush.bf16.msra.mxu0 %v3045
  %3320 = vmatpush.bf16.msra.mxu0 %v3037
  %3321 = vmatpush.bf16.msra.mxu0 %v3029
  %3322 = vmatpush.bf16.msra.mxu0 %v3021
  %3323 = vmatpush.bf16.msra.mxu0 %v3013
  %3324 = vmatmul.bf16.gmra.mxu0 %v3180
  %v3325 = vpop.f32.mrf.mxu0
  %v3326 = vadd.f32 %v3312, %v3325
  %v3327 = vpop.f32.mrf.mxu0
  %v3328 = vadd.f32 %v3314, %v3327
  %3329 = vdwg.mxu0
  %3330 = vmatpush.bf16.msra.mxu0 %v3133
  %3331 = vmatpush.bf16.msra.mxu0 %v3125
  %3332 = vmatpush.bf16.msra.mxu0 %v3117
  %3333 = vmatpush.bf16.msra.mxu0 %v3109
  %3334 = vmatpush.bf16.msra.mxu0 %v3101
  %3335 = vmatpush.bf16.msra.mxu0 %v3093
  %3336 = vmatpush.bf16.msra.mxu0 %v3085
  %3337 = vmatpush.bf16.msra.mxu0 %v3077
  %3338 = vmatmul.bf16.gmra.mxu0 %v3181
  %v3339 = vpop.f32.mrf.mxu0
  %v3340 = vadd.f32 %v3326, %v3339
  %v3341 = vpop.f32.mrf.mxu0
  %v3342 = vadd.f32 %v3328, %v3341
  %3343 = vdwg.mxu0
  %3344 = vmatpush.bf16.msra.mxu0 0
  %3345 = vmatpush.bf16.msra.mxu0 0
  %3346 = vmatpush.bf16.msra.mxu0 0
  %3347 = vmatpush.bf16.msra.mxu0 0
  %3348 = vmatpush.bf16.msra.mxu0 0
  %3349 = vmatpush.bf16.msra.mxu0 %v3157
  %3350 = vmatpush.bf16.msra.mxu0 %v3149
  %3351 = vmatpush.bf16.msra.mxu0 %v3141
  %3352 = vmatmul.bf16.gmra.mxu0 %v3188
  %v3353 = vpop.f32.mrf.mxu0
  %v3354 = vadd.f32 %v3340, %v3353
  %v3355 = vpop.f32.mrf.mxu0
  %v3356 = vadd.f32 %v3342, %v3355
  %3357 = vdwg.mxu0
  %3358 = vmatpush.bf16.msra.mxu0 %v3006
  %3359 = vmatpush.bf16.msra.mxu0 %v2998
  %3360 = vmatpush.bf16.msra.mxu0 %v2990
  %3361 = vmatpush.bf16.msra.mxu0 %v2982
  %3362 = vmatpush.bf16.msra.mxu0 %v2974
  %3363 = vmatpush.bf16.msra.mxu0 %v2966
  %3364 = vmatpush.bf16.msra.mxu0 %v2958
  %3365 = vmatpush.bf16.msra.mxu0 %v2950
  %3366 = vmatmul.bf16.gmra.mxu0 %v3179
  %v3367 = vpop.f32.mrf.mxu0
  %v3368 = vadd.f32 0.0, %v3367
  %v3369 = vpop.f32.mrf.mxu0
  %v3370 = vadd.f32 0.0, %v3369
  %3371 = vdwg.mxu0
  %3372 = vmatpush.bf16.msra.mxu0 %v3070
  %3373 = vmatpush.bf16.msra.mxu0 %v3062
  %3374 = vmatpush.bf16.msra.mxu0 %v3054
  %3375 = vmatpush.bf16.msra.mxu0 %v3046
  %3376 = vmatpush.bf16.msra.mxu0 %v3038
  %3377 = vmatpush.bf16.msra.mxu0 %v3030
  %3378 = vmatpush.bf16.msra.mxu0 %v3022
  %3379 = vmatpush.bf16.msra.mxu0 %v3014
  %3380 = vmatmul.bf16.gmra.mxu0 %v3180
  %v3381 = vpop.f32.mrf.mxu0
  %v3382 = vadd.f32 %v3368, %v3381
  %v3383 = vpop.f32.mrf.mxu0
  %v3384 = vadd.f32 %v3370, %v3383
  %3385 = vdwg.mxu0
  %3386 = vmatpush.bf16.msra.mxu0 %v3134
  %3387 = vmatpush.bf16.msra.mxu0 %v3126
  %3388 = vmatpush.bf16.msra.mxu0 %v3118
  %3389 = vmatpush.bf16.msra.mxu0 %v3110
  %3390 = vmatpush.bf16.msra.mxu0 %v3102
  %3391 = vmatpush.bf16.msra.mxu0 %v3094
  %3392 = vmatpush.bf16.msra.mxu0 %v3086
  %3393 = vmatpush.bf16.msra.mxu0 %v3078
  %3394 = vmatmul.bf16.gmra.mxu0 %v3181
  %v3395 = vpop.f32.mrf.mxu0
  %v3396 = vadd.f32 %v3382, %v3395
  %v3397 = vpop.f32.mrf.mxu0
  %v3398 = vadd.f32 %v3384, %v3397
  %3399 = vdwg.mxu0
  %3400 = vmatpush.bf16.msra.mxu0 0
  %3401 = vmatpush.bf16.msra.mxu0 0
  %3402 = vmatpush.bf16.msra.mxu0 0
  %3403 = vmatpush.bf16.msra.mxu0 0
  %3404 = vmatpush.bf16.msra.mxu0 0
  %3405 = vmatpush.bf16.msra.mxu0 %v3158
  %3406 = vmatpush.bf16.msra.mxu0 %v3150
  %3407 = vmatpush.bf16.msra.mxu0 %v3142
  %3408 = vmatmul.bf16.gmra.mxu0 %v3188
  %v3409 = vpop.f32.mrf.mxu0
  %v3410 = vadd.f32 %v3396, %v3409
  %v3411 = vpop.f32.mrf.mxu0
  %v3412 = vadd.f32 %v3398, %v3411
  %3413 = vdwg.mxu0
  %3414 = vmatpush.bf16.msra.mxu0 %v3007
  %3415 = vmatpush.bf16.msra.mxu0 %v2999
  %3416 = vmatpush.bf16.msra.mxu0 %v2991
  %3417 = vmatpush.bf16.msra.mxu0 %v2983
  %3418 = vmatpush.bf16.msra.mxu0 %v2975
  %3419 = vmatpush.bf16.msra.mxu0 %v2967
  %3420 = vmatpush.bf16.msra.mxu0 %v2959
  %3421 = vmatpush.bf16.msra.mxu0 %v2951
  %3422 = vmatmul.bf16.gmra.mxu0 %v3179
  %v3423 = vpop.f32.mrf.mxu0
  %v3424 = vadd.f32 0.0, %v3423
  %v3425 = vpop.f32.mrf.mxu0
  %v3426 = vadd.f32 0.0, %v3425
  %3427 = vdwg.mxu0
  %3428 = vmatpush.bf16.msra.mxu0 %v3071
  %3429 = vmatpush.bf16.msra.mxu0 %v3063
  %3430 = vmatpush.bf16.msra.mxu0 %v3055
  %3431 = vmatpush.bf16.msra.mxu0 %v3047
  %3432 = vmatpush.bf16.msra.mxu0 %v3039
  %3433 = vmatpush.bf16.msra.mxu0 %v3031
  %3434 = vmatpush.bf16.msra.mxu0 %v3023
  %3435 = vmatpush.bf16.msra.mxu0 %v3015
  %3436 = vmatmul.bf16.gmra.mxu0 %v3180
  %v3437 = vpop.f32.mrf.mxu0
  %v3438 = vadd.f32 %v3424, %v3437
  %v3439 = vpop.f32.mrf.mxu0
  %v3440 = vadd.f32 %v3426, %v3439
  %3441 = vdwg.mxu0
  %3442 = vmatpush.bf16.msra.mxu0 %v3135
  %3443 = vmatpush.bf16.msra.mxu0 %v3127
  %3444 = vmatpush.bf16.msra.mxu0 %v3119
  %3445 = vmatpush.bf16.msra.mxu0 %v3111
  %3446 = vmatpush.bf16.msra.mxu0 %v3103
  %3447 = vmatpush.bf16.msra.mxu0 %v3095
  %3448 = vmatpush.bf16.msra.mxu0 %v3087
  %3449 = vmatpush.bf16.msra.mxu0 %v3079
  %3450 = vmatmul.bf16.gmra.mxu0 %v3181
  %v3451 = vpop.f32.mrf.mxu0
  %v3452 = vadd.f32 %v3438, %v3451
  %v3453 = vpop.f32.mrf.mxu0
  %v3454 = vadd.f32 %v3440, %v3453
  %3455 = vdwg.mxu0
  %3456 = vmatpush.bf16.msra.mxu0 0
  %3457 = vmatpush.bf16.msra.mxu0 0
  %3458 = vmatpush.bf16.msra.mxu0 0
  %3459 = vmatpush.bf16.msra.mxu0 0
  %3460 = vmatpush.bf16.msra.mxu0 0
  %3461 = vmatpush.bf16.msra.mxu0 %v3159
  %3462 = vmatpush.bf16.msra.mxu0 %v3151
  %3463 = vmatpush.bf16.msra.mxu0 %v3143
  %3464 = vmatmul.bf16.gmra.mxu0 %v3188
  %v3465 = vpop.f32.mrf.mxu0
  %v3466 = vadd.f32 %v3452, %v3465
  %v3467 = vpop.f32.mrf.mxu0
  %v3468 = vadd.f32 %v3454, %v3467
  %3469 = vdwg.mxu0
  %3470 = vmatpush.bf16.msra.mxu0 %v3008
  %3471 = vmatpush.bf16.msra.mxu0 %v3000
  %3472 = vmatpush.bf16.msra.mxu0 %v2992
  %3473 = vmatpush.bf16.msra.mxu0 %v2984
  %3474 = vmatpush.bf16.msra.mxu0 %v2976
  %3475 = vmatpush.bf16.msra.mxu0 %v2968
  %3476 = vmatpush.bf16.msra.mxu0 %v2960
  %3477 = vmatpush.bf16.msra.mxu0 %v2952
  %3478 = vmatmul.bf16.gmra.mxu0 %v3179
  %v3479 = vpop.f32.mrf.mxu0
  %v3480 = vadd.f32 0.0, %v3479
  %v3481 = vpop.f32.mrf.mxu0
  %v3482 = vadd.f32 0.0, %v3481
  %3483 = vdwg.mxu0
  %3484 = vmatpush.bf16.msra.mxu0 %v3072
  %3485 = vmatpush.bf16.msra.mxu0 %v3064
  %3486 = vmatpush.bf16.msra.mxu0 %v3056
  %3487 = vmatpush.bf16.msra.mxu0 %v3048
  %3488 = vmatpush.bf16.msra.mxu0 %v3040
  %3489 = vmatpush.bf16.msra.mxu0 %v3032
  %3490 = vmatpush.bf16.msra.mxu0 %v3024
  %3491 = vmatpush.bf16.msra.mxu0 %v3016
  %3492 = vmatmul.bf16.gmra.mxu0 %v3180
  %v3493 = vpop.f32.mrf.mxu0
  %v3494 = vadd.f32 %v3480, %v3493
  %v3495 = vpop.f32.mrf.mxu0
  %v3496 = vadd.f32 %v3482, %v3495
  %3497 = vdwg.mxu0
  %3498 = vmatpush.bf16.msra.mxu0 %v3136
  %3499 = vmatpush.bf16.msra.mxu0 %v3128
  %3500 = vmatpush.bf16.msra.mxu0 %v3120
  %3501 = vmatpush.bf16.msra.mxu0 %v3112
  %3502 = vmatpush.bf16.msra.mxu0 %v3104
  %3503 = vmatpush.bf16.msra.mxu0 %v3096
  %3504 = vmatpush.bf16.msra.mxu0 %v3088
  %3505 = vmatpush.bf16.msra.mxu0 %v3080
  %3506 = vmatmul.bf16.gmra.mxu0 %v3181
  %v3507 = vpop.f32.mrf.mxu0
  %v3508 = vadd.f32 %v3494, %v3507
  %v3509 = vpop.f32.mrf.mxu0
  %v3510 = vadd.f32 %v3496, %v3509
  %3511 = vdwg.mxu0
  %3512 = vmatpush.bf16.msra.mxu0 0
  %3513 = vmatpush.bf16.msra.mxu0 0
  %3514 = vmatpush.bf16.msra.mxu0 0
  %3515 = vmatpush.bf16.msra.mxu0 0
  %3516 = vmatpush.bf16.msra.mxu0 0
  %3517 = vmatpush.bf16.msra.mxu0 %v3160
  %3518 = vmatpush.bf16.msra.mxu0 %v3152
  %3519 = vmatpush.bf16.msra.mxu0 %v3144
  %3520 = vmatmul.bf16.gmra.mxu0 %v3188
  %v3521 = vpop.f32.mrf.mxu0
  %v3522 = vadd.f32 %v3508, %v3521
  %v3523 = vpop.f32.mrf.mxu0
  %v3524 = vadd.f32 %v3510, %v3523
  %3525 = vdwg.mxu0
  %3526 = vmatpush.bf16.msra.mxu0 %v3009
  %3527 = vmatpush.bf16.msra.mxu0 %v3001
  %3528 = vmatpush.bf16.msra.mxu0 %v2993
  %3529 = vmatpush.bf16.msra.mxu0 %v2985
  %3530 = vmatpush.bf16.msra.mxu0 %v2977
  %3531 = vmatpush.bf16.msra.mxu0 %v2969
  %3532 = vmatpush.bf16.msra.mxu0 %v2961
  %3533 = vmatpush.bf16.msra.mxu0 %v2953
  %3534 = vmatmul.bf16.gmra.mxu0 %v3179
  %v3535 = vpop.f32.mrf.mxu0
  %v3536 = vadd.f32 0.0, %v3535
  %v3537 = vpop.f32.mrf.mxu0
  %v3538 = vadd.f32 0.0, %v3537
  %3539 = vdwg.mxu0
  %3540 = vmatpush.bf16.msra.mxu0 %v3073
  %3541 = vmatpush.bf16.msra.mxu0 %v3065
  %3542 = vmatpush.bf16.msra.mxu0 %v3057
  %3543 = vmatpush.bf16.msra.mxu0 %v3049
  %3544 = vmatpush.bf16.msra.mxu0 %v3041
  %3545 = vmatpush.bf16.msra.mxu0 %v3033
  %3546 = vmatpush.bf16.msra.mxu0 %v3025
  %3547 = vmatpush.bf16.msra.mxu0 %v3017
  %3548 = vmatmul.bf16.gmra.mxu0 %v3180
  %v3549 = vpop.f32.mrf.mxu0
  %v3550 = vadd.f32 %v3536, %v3549
  %v3551 = vpop.f32.mrf.mxu0
  %v3552 = vadd.f32 %v3538, %v3551
  %3553 = vdwg.mxu0
  %3554 = vmatpush.bf16.msra.mxu0 %v3137
  %3555 = vmatpush.bf16.msra.mxu0 %v3129
  %3556 = vmatpush.bf16.msra.mxu0 %v3121
  %3557 = vmatpush.bf16.msra.mxu0 %v3113
  %3558 = vmatpush.bf16.msra.mxu0 %v3105
  %3559 = vmatpush.bf16.msra.mxu0 %v3097
  %3560 = vmatpush.bf16.msra.mxu0 %v3089
  %3561 = vmatpush.bf16.msra.mxu0 %v3081
  %3562 = vmatmul.bf16.gmra.mxu0 %v3181
  %v3563 = vpop.f32.mrf.mxu0
  %v3564 = vadd.f32 %v3550, %v3563
  %v3565 = vpop.f32.mrf.mxu0
  %v3566 = vadd.f32 %v3552, %v3565
  %3567 = vdwg.mxu0
  %3568 = vmatpush.bf16.msra.mxu0 0
  %3569 = vmatpush.bf16.msra.mxu0 0
  %3570 = vmatpush.bf16.msra.mxu0 0
  %3571 = vmatpush.bf16.msra.mxu0 0
  %3572 = vmatpush.bf16.msra.mxu0 0
  %3573 = vmatpush.bf16.msra.mxu0 %v3161
  %3574 = vmatpush.bf16.msra.mxu0 %v3153
  %3575 = vmatpush.bf16.msra.mxu0 %v3145
  %3576 = vmatmul.bf16.gmra.mxu0 %v3188
  %v3577 = vpop.f32.mrf.mxu0
  %v3578 = vadd.f32 %v3564, %v3577
  %v3579 = vpop.f32.mrf.mxu0
  %v3580 = vadd.f32 %v3566, %v3579
  %3581 = vdwg.mxu0
  %3582 = vmatpush.bf16.msra.mxu0 %v3010
  %3583 = vmatpush.bf16.msra.mxu0 %v3002
  %3584 = vmatpush.bf16.msra.mxu0 %v2994
  %3585 = vmatpush.bf16.msra.mxu0 %v2986
  %3586 = vmatpush.bf16.msra.mxu0 %v2978
  %3587 = vmatpush.bf16.msra.mxu0 %v2970
  %3588 = vmatpush.bf16.msra.mxu0 %v2962
  %3589 = vmatpush.bf16.msra.mxu0 %v2954
  %3590 = vmatmul.bf16.gmra.mxu0 %v3179
  %v3591 = vpop.f32.mrf.mxu0
  %v3592 = vadd.f32 0.0, %v3591
  %v3593 = vpop.f32.mrf.mxu0
  %v3594 = vadd.f32 0.0, %v3593
  %3595 = vdwg.mxu0
  %3596 = vmatpush.bf16.msra.mxu0 %v3074
  %3597 = vmatpush.bf16.msra.mxu0 %v3066
  %3598 = vmatpush.bf16.msra.mxu0 %v3058
  %3599 = vmatpush.bf16.msra.mxu0 %v3050
  %3600 = vmatpush.bf16.msra.mxu0 %v3042
  %3601 = vmatpush.bf16.msra.mxu0 %v3034
  %3602 = vmatpush.bf16.msra.mxu0 %v3026
  %3603 = vmatpush.bf16.msra.mxu0 %v3018
  %3604 = vmatmul.bf16.gmra.mxu0 %v3180
  %v3605 = vpop.f32.mrf.mxu0
  %v3606 = vadd.f32 %v3592, %v3605
  %v3607 = vpop.f32.mrf.mxu0
  %v3608 = vadd.f32 %v3594, %v3607
  %3609 = vdwg.mxu0
  %3610 = vmatpush.bf16.msra.mxu0 %v3138
  %3611 = vmatpush.bf16.msra.mxu0 %v3130
  %3612 = vmatpush.bf16.msra.mxu0 %v3122
  %3613 = vmatpush.bf16.msra.mxu0 %v3114
  %3614 = vmatpush.bf16.msra.mxu0 %v3106
  %3615 = vmatpush.bf16.msra.mxu0 %v3098
  %3616 = vmatpush.bf16.msra.mxu0 %v3090
  %3617 = vmatpush.bf16.msra.mxu0 %v3082
  %3618 = vmatmul.bf16.gmra.mxu0 %v3181
  %v3619 = vpop.f32.mrf.mxu0
  %v3620 = vadd.f32 %v3606, %v3619
  %v3621 = vpop.f32.mrf.mxu0
  %v3622 = vadd.f32 %v3608, %v3621
  %3623 = vdwg.mxu0
  %3624 = vmatpush.bf16.msra.mxu0 0
  %3625 = vmatpush.bf16.msra.mxu0 0
  %3626 = vmatpush.bf16.msra.mxu0 0
  %3627 = vmatpush.bf16.msra.mxu0 0
  %3628 = vmatpush.bf16.msra.mxu0 0
  %3629 = vmatpush.bf16.msra.mxu0 %v3162
  %3630 = vmatpush.bf16.msra.mxu0 %v3154
  %3631 = vmatpush.bf16.msra.mxu0 %v3146
  %3632 = vmatmul.bf16.gmra.mxu0 %v3188
  %v3633 = vpop.f32.mrf.mxu0
  %v3634 = vadd.f32 %v3620, %v3633
  %v3635 = vpop.f32.mrf.mxu0
  %v3636 = vadd.f32 %v3622, %v3635
  %3637 = vdwg.mxu0
  %v3638 = vld [vmem:[%s6] sm:$0xff]
  %v3639 = vld [vmem:[%s6 + $0x8] sm:$0xff]
  %v3640 = vld [vmem:[%s7] sm:$0xff]
  %v3641 = vld [vmem:[%s7 + $0x8] sm:$0xff]
  %v3642 = vadd.f32 %v3242, %v3298
  %v3643 = vadd.f32 %v3642, %v3354
  %v3644 = vadd.f32 %v3643, %v3410
  %v3645 = vadd.f32 %v3644, %v3466
  %v3646 = vadd.f32 %v3645, %v3522
  %v3647 = vadd.f32 %v3646, %v3578
  %v3648 = vadd.f32 %v3647, %v3634
  %3649 = vadd.xlane.f32.xlu0 %v3648
  %v3650 = vpop.xlane.xlu0 %3649
  %v3651 = vadd.f32 %v3244, %v3300
  %v3652 = vadd.f32 %v3651, %v3356
  %v3653 = vadd.f32 %v3652, %v3412
  %v3654 = vadd.f32 %v3653, %v3468
  %v3655 = vadd.f32 %v3654, %v3524
  %v3656 = vadd.f32 %v3655, %v3580
  %v3657 = vadd.f32 %v3656, %v3636
  %3658 = vadd.xlane.f32.xlu0 %v3657
  %v3659 = vpop.xlane.xlu0 %3658
  %v3660 = vmul.f32 %v3650, 0.0009765625
  %v3661 = vmul.f32 %v3659, 0.0009765625
  %v3662 = vsub.f32 %v3242, %v3660
  %v3663 = vsub.f32 %v3298, %v3660
  %v3664 = vsub.f32 %v3354, %v3660
  %v3665 = vsub.f32 %v3410, %v3660
  %v3666 = vsub.f32 %v3466, %v3660
  %v3667 = vsub.f32 %v3522, %v3660
  %v3668 = vsub.f32 %v3578, %v3660
  %v3669 = vsub.f32 %v3634, %v3660
  %v3670 = vsub.f32 %v3244, %v3661
  %v3671 = vsub.f32 %v3300, %v3661
  %v3672 = vsub.f32 %v3356, %v3661
  %v3673 = vsub.f32 %v3412, %v3661
  %v3674 = vsub.f32 %v3468, %v3661
  %v3675 = vsub.f32 %v3524, %v3661
  %v3676 = vsub.f32 %v3580, %v3661
  %v3677 = vsub.f32 %v3636, %v3661
  %v3678 = vmul.f32 %v3662, %v3662
  %v3679 = vmul.f32 %v3663, %v3663
  %v3680 = vmul.f32 %v3664, %v3664
  %v3681 = vmul.f32 %v3665, %v3665
  %v3682 = vmul.f32 %v3666, %v3666
  %v3683 = vmul.f32 %v3667, %v3667
  %v3684 = vmul.f32 %v3668, %v3668
  %v3685 = vmul.f32 %v3669, %v3669
  %v3686 = vmul.f32 %v3670, %v3670
  %v3687 = vmul.f32 %v3671, %v3671
  %v3688 = vmul.f32 %v3672, %v3672
  %v3689 = vmul.f32 %v3673, %v3673
  %v3690 = vmul.f32 %v3674, %v3674
  %v3691 = vmul.f32 %v3675, %v3675
  %v3692 = vmul.f32 %v3676, %v3676
  %v3693 = vmul.f32 %v3677, %v3677
  %v3694 = vadd.f32 %v3678, %v3679
  %v3695 = vadd.f32 %v3694, %v3680
  %v3696 = vadd.f32 %v3695, %v3681
  %v3697 = vadd.f32 %v3696, %v3682
  %v3698 = vadd.f32 %v3697, %v3683
  %v3699 = vadd.f32 %v3698, %v3684
  %v3700 = vadd.f32 %v3699, %v3685
  %3701 = vadd.xlane.f32.xlu0 %v3700
  %v3702 = vpop.xlane.xlu0 %3701
  %v3703 = vadd.f32 %v3686, %v3687
  %v3704 = vadd.f32 %v3703, %v3688
  %v3705 = vadd.f32 %v3704, %v3689
  %v3706 = vadd.f32 %v3705, %v3690
  %v3707 = vadd.f32 %v3706, %v3691
  %v3708 = vadd.f32 %v3707, %v3692
  %v3709 = vadd.f32 %v3708, %v3693
  %3710 = vadd.xlane.f32.xlu0 %v3709
  %v3711 = vpop.xlane.xlu0 %3710
  %v3712 = vmul.f32 %v3702, 0.0009765625
  %v3713 = vmul.f32 %v3711, 0.0009765625
  %v3714 = vadd.f32 %v3712, 1e-05
  %v3715 = vadd.f32 %v3713, 1e-05
  %v3716 = vrsqrt.pop %v3714
  %v3717 = vmul.f32 %v3716, %v3714
  %v3718 = vmul.f32 %v3717, %v3716
  %v3719 = vmul.f32 0.5, %v3718
  %v3720 = vsub.f32 1.5, %v3719
  %v3721 = vmul.f32 %v3716, %v3720
  %vm3722 = vweird.f32 %v3714
  %vm3723 = vweird.f32 %v3716
  %vm3724 = vmor %vm3722, %vm3723
  %v3725 = vsel %vm3724, %v3716, %v3721
  %v3726 = vrsqrt.pop %v3715
  %v3727 = vmul.f32 %v3726, %v3715
  %v3728 = vmul.f32 %v3727, %v3726
  %v3729 = vmul.f32 0.5, %v3728
  %v3730 = vsub.f32 1.5, %v3729
  %v3731 = vmul.f32 %v3726, %v3730
  %vm3732 = vweird.f32 %v3715
  %vm3733 = vweird.f32 %v3726
  %vm3734 = vmor %vm3732, %vm3733
  %v3735 = vsel %vm3734, %v3726, %v3731
  %v3736 = vmul.f32 %v3725, %v3638
  %v3737 = vmul.f32 %v3735, %v3639
  %3739 = vset.pattern.permute.xlu0 0
  %3740 = vperm.xlu0 %3739, %v3736
  %v3741 = vpop.permute.xlu0 %3740
  %3744 = vset.pattern.permute.xlu0 0
  %3745 = vperm.xlu0 %3744, %v3737
  %v3746 = vpop.permute.xlu0 %3745
  %v3748 = vmul.f32 %v3662, %v3741
  %v3749 = vmul.f32 %v3663, %v3741
  %v3750 = vmul.f32 %v3664, %v3741
  %v3751 = vmul.f32 %v3665, %v3741
  %v3752 = vmul.f32 %v3666, %v3741
  %v3753 = vmul.f32 %v3667, %v3741
  %v3754 = vmul.f32 %v3668, %v3741
  %v3755 = vmul.f32 %v3669, %v3741
  %v3756 = vmul.f32 %v3670, %v3746
  %v3757 = vmul.f32 %v3671, %v3746
  %v3758 = vmul.f32 %v3672, %v3746
  %v3759 = vmul.f32 %v3673, %v3746
  %v3760 = vmul.f32 %v3674, %v3746
  %v3761 = vmul.f32 %v3675, %v3746
  %v3762 = vmul.f32 %v3676, %v3746
  %v3763 = vmul.f32 %v3677, %v3746
  %3765 = vset.pattern.permute.xlu0 0
  %3766 = vperm.xlu0 %3765, %v3640
  %v3767 = vpop.permute.xlu0 %3766
  %3770 = vset.pattern.permute.xlu0 0
  %3771 = vperm.xlu0 %3770, %v3641
  %v3772 = vpop.permute.xlu0 %3771
  %v3774 = vadd.f32 %v3748, %v3767
  %v3775 = vadd.f32 %v3749, %v3767
  %v3776 = vadd.f32 %v3750, %v3767
  %v3777 = vadd.f32 %v3751, %v3767
  %v3778 = vadd.f32 %v3752, %v3767
  %v3779 = vadd.f32 %v3753, %v3767
  %v3780 = vadd.f32 %v3754, %v3767
  %v3781 = vadd.f32 %v3755, %v3767
  %v3782 = vadd.f32 %v3756, %v3772
  %v3783 = vadd.f32 %v3757, %v3772
  %v3784 = vadd.f32 %v3758, %v3772
  %v3785 = vadd.f32 %v3759, %v3772
  %v3786 = vadd.f32 %v3760, %v3772
  %v3787 = vadd.f32 %v3761, %v3772
  %v3788 = vadd.f32 %v3762, %v3772
  %v3789 = vadd.f32 %v3763, %v3772
  %v3790 = vld [vmem:[%s10] sm:$0xff]
  %v3791 = vld [vmem:[%s10 + $0x8] sm:$0xff]
  %v3792 = vld [vmem:[%s10 + $0x10] sm:$0xff]
  %v3793 = vld [vmem:[%s10 + $0x18] sm:$0xff]
  %v3794 = vld [vmem:[%s10 + $0x20] sm:$0xff]
  %v3795 = vld [vmem:[%s10 + $0x28] sm:$0xff]
  %v3796 = vld [vmem:[%s10 + $0x30] sm:$0xff]
  %v3797 = vld [vmem:[%s10 + $0x38] sm:$0xff]
  %v3798 = vld [vmem:[%s10 + $0x40] sm:$0xff]
  %v3799 = vld [vmem:[%s10 + $0x48] sm:$0xff]
  %v3800 = vld [vmem:[%s10 + $0x50] sm:$0xff]
  %v3801 = vld [vmem:[%s10 + $0x58] sm:$0xff]
  %v3802 = vld [vmem:[%s10 + $0x60] sm:$0xff]
  %v3803 = vld [vmem:[%s10 + $0x68] sm:$0xff]
  %v3804 = vld [vmem:[%s10 + $0x70] sm:$0xff]
  %v3805 = vld [vmem:[%s10 + $0x78] sm:$0xff]
  %v3806 = vld [vmem:[%s10 + $0x80] sm:$0xff]
  %v3807 = vld [vmem:[%s10 + $0x88] sm:$0xff]
  %v3808 = vld [vmem:[%s10 + $0x90] sm:$0xff]
  %v3809 = vld [vmem:[%s10 + $0x98] sm:$0xff]
  %v3810 = vld [vmem:[%s10 + $0xa0] sm:$0xff]
  %v3811 = vld [vmem:[%s10 + $0xa8] sm:$0xff]
  %v3812 = vld [vmem:[%s10 + $0xb0] sm:$0xff]
  %v3813 = vld [vmem:[%s10 + $0xb8] sm:$0xff]
  %v3814 = vld [vmem:[%s10 + $0xc0] sm:$0xff]
  %v3815 = vld [vmem:[%s10 + $0xc8] sm:$0xff]
  %v3816 = vld [vmem:[%s10 + $0xd0] sm:$0xff]
  %v3817 = vld [vmem:[%s10 + $0xd8] sm:$0xff]
  %v3818 = vld [vmem:[%s10 + $0xe0] sm:$0xff]
  %v3819 = vld [vmem:[%s10 + $0xe8] sm:$0xff]
  %v3820 = vld [vmem:[%s10 + $0xf0] sm:$0xff]
  %v3821 = vld [vmem:[%s10 + $0xf8] sm:$0xff]
  %v3822 = vld [vmem:[%s10 + $0x100] sm:$0xff]
  %v3823 = vld [vmem:[%s10 + $0x108] sm:$0xff]
  %v3824 = vld [vmem:[%s10 + $0x110] sm:$0xff]
  %v3825 = vld [vmem:[%s10 + $0x118] sm:$0xff]
  %v3826 = vld [vmem:[%s10 + $0x120] sm:$0xff]
  %v3827 = vld [vmem:[%s10 + $0x128] sm:$0xff]
  %v3828 = vld [vmem:[%s10 + $0x130] sm:$0xff]
  %v3829 = vld [vmem:[%s10 + $0x138] sm:$0xff]
  %v3830 = vld [vmem:[%s10 + $0x140] sm:$0xff]
  %v3831 = vld [vmem:[%s10 + $0x148] sm:$0xff]
  %v3832 = vld [vmem:[%s10 + $0x150] sm:$0xff]
  %v3833 = vld [vmem:[%s10 + $0x158] sm:$0xff]
  %v3834 = vld [vmem:[%s10 + $0x160] sm:$0xff]
  %v3835 = vld [vmem:[%s10 + $0x168] sm:$0xff]
  %v3836 = vld [vmem:[%s10 + $0x170] sm:$0xff]
  %v3837 = vld [vmem:[%s10 + $0x178] sm:$0xff]
  %v3838 = vld [vmem:[%s10 + $0x180] sm:$0xff]
  %v3839 = vld [vmem:[%s10 + $0x188] sm:$0xff]
  %v3840 = vld [vmem:[%s10 + $0x190] sm:$0xff]
  %v3841 = vld [vmem:[%s10 + $0x198] sm:$0xff]
  %v3842 = vld [vmem:[%s10 + $0x1a0] sm:$0xff]
  %v3843 = vld [vmem:[%s10 + $0x1a8] sm:$0xff]
  %v3844 = vld [vmem:[%s10 + $0x1b0] sm:$0xff]
  %v3845 = vld [vmem:[%s10 + $0x1b8] sm:$0xff]
  %v3846 = vld [vmem:[%s10 + $0x1c0] sm:$0xff]
  %v3847 = vld [vmem:[%s10 + $0x1c8] sm:$0xff]
  %v3848 = vld [vmem:[%s10 + $0x1d0] sm:$0xff]
  %v3849 = vld [vmem:[%s10 + $0x1d8] sm:$0xff]
  %v3850 = vld [vmem:[%s10 + $0x1e0] sm:$0xff]
  %v3851 = vld [vmem:[%s10 + $0x1e8] sm:$0xff]
  %v3852 = vld [vmem:[%s10 + $0x1f0] sm:$0xff]
  %v3853 = vld [vmem:[%s10 + $0x1f8] sm:$0xff]
  %v3854 = vld [vmem:[%s10 + $0x200] sm:$0xff]
  %v3855 = vld [vmem:[%s10 + $0x208] sm:$0xff]
  %v3856 = vld [vmem:[%s10 + $0x210] sm:$0xff]
  %v3857 = vld [vmem:[%s10 + $0x218] sm:$0xff]
  %v3858 = vld [vmem:[%s10 + $0x220] sm:$0xff]
  %v3859 = vld [vmem:[%s10 + $0x228] sm:$0xff]
  %v3860 = vld [vmem:[%s10 + $0x230] sm:$0xff]
  %v3861 = vld [vmem:[%s10 + $0x238] sm:$0xff]
  %v3862 = vld [vmem:[%s10 + $0x240] sm:$0xff]
  %v3863 = vld [vmem:[%s10 + $0x248] sm:$0xff]
  %v3864 = vld [vmem:[%s10 + $0x250] sm:$0xff]
  %v3865 = vld [vmem:[%s10 + $0x258] sm:$0xff]
  %v3866 = vld [vmem:[%s10 + $0x260] sm:$0xff]
  %v3867 = vld [vmem:[%s10 + $0x268] sm:$0xff]
  %v3868 = vld [vmem:[%s10 + $0x270] sm:$0xff]
  %v3869 = vld [vmem:[%s10 + $0x278] sm:$0xff]
  %v3870 = vld [vmem:[%s10 + $0x280] sm:$0xff]
  %v3871 = vld [vmem:[%s10 + $0x288] sm:$0xff]
  %v3872 = vld [vmem:[%s10 + $0x290] sm:$0xff]
  %v3873 = vld [vmem:[%s10 + $0x298] sm:$0xff]
  %v3874 = vld [vmem:[%s10 + $0x2a0] sm:$0xff]
  %v3875 = vld [vmem:[%s10 + $0x2a8] sm:$0xff]
  %v3876 = vld [vmem:[%s10 + $0x2b0] sm:$0xff]
  %v3877 = vld [vmem:[%s10 + $0x2b8] sm:$0xff]
  %v3878 = vld [vmem:[%s10 + $0x2c0] sm:$0xff]
  %v3879 = vld [vmem:[%s10 + $0x2c8] sm:$0xff]
  %v3880 = vld [vmem:[%s10 + $0x2d0] sm:$0xff]
  %v3881 = vld [vmem:[%s10 + $0x2d8] sm:$0xff]
  %v3882 = vld [vmem:[%s10 + $0x2e0] sm:$0xff]
  %v3883 = vld [vmem:[%s10 + $0x2e8] sm:$0xff]
  %v3884 = vld [vmem:[%s10 + $0x2f0] sm:$0xff]
  %v3885 = vld [vmem:[%s10 + $0x2f8] sm:$0xff]
  %v3886 = vld [vmem:[%s10 + $0x300] sm:$0xff]
  %v3887 = vld [vmem:[%s10 + $0x308] sm:$0xff]
  %v3888 = vld [vmem:[%s10 + $0x310] sm:$0xff]
  %v3889 = vld [vmem:[%s10 + $0x318] sm:$0xff]
  %v3890 = vld [vmem:[%s10 + $0x320] sm:$0xff]
  %v3891 = vld [vmem:[%s10 + $0x328] sm:$0xff]
  %v3892 = vld [vmem:[%s10 + $0x330] sm:$0xff]
  %v3893 = vld [vmem:[%s10 + $0x338] sm:$0xff]
  %v3894 = vld [vmem:[%s10 + $0x340] sm:$0xff]
  %v3895 = vld [vmem:[%s10 + $0x348] sm:$0xff]
  %v3896 = vld [vmem:[%s10 + $0x350] sm:$0xff]
  %v3897 = vld [vmem:[%s10 + $0x358] sm:$0xff]
  %v3898 = vld [vmem:[%s10 + $0x360] sm:$0xff]
  %v3899 = vld [vmem:[%s10 + $0x368] sm:$0xff]
  %v3900 = vld [vmem:[%s10 + $0x370] sm:$0xff]
  %v3901 = vld [vmem:[%s10 + $0x378] sm:$0xff]
  %v3902 = vld [vmem:[%s10 + $0x380] sm:$0xff]
  %v3903 = vld [vmem:[%s10 + $0x388] sm:$0xff]
  %v3904 = vld [vmem:[%s10 + $0x390] sm:$0xff]
  %v3905 = vld [vmem:[%s10 + $0x398] sm:$0xff]
  %v3906 = vld [vmem:[%s10 + $0x3a0] sm:$0xff]
  %v3907 = vld [vmem:[%s10 + $0x3a8] sm:$0xff]
  %v3908 = vld [vmem:[%s10 + $0x3b0] sm:$0xff]
  %v3909 = vld [vmem:[%s10 + $0x3b8] sm:$0xff]
  %v3910 = vld [vmem:[%s10 + $0x3c0] sm:$0xff]
  %v3911 = vld [vmem:[%s10 + $0x3c8] sm:$0xff]
  %v3912 = vld [vmem:[%s10 + $0x3d0] sm:$0xff]
  %v3913 = vld [vmem:[%s10 + $0x3d8] sm:$0xff]
  %v3914 = vld [vmem:[%s10 + $0x3e0] sm:$0xff]
  %v3915 = vld [vmem:[%s10 + $0x3e8] sm:$0xff]
  %v3916 = vld [vmem:[%s10 + $0x3f0] sm:$0xff]
  %v3917 = vld [vmem:[%s10 + $0x3f8] sm:$0xff]
  %3918 = vmatpush.msra.mxu0 %v3805
  %3919 = vmatpush.msra.mxu0 %v3804
  %3920 = vmatpush.msra.mxu0 %v3803
  %3921 = vmatpush.msra.mxu0 %v3802
  %3922 = vmatpush.msra.mxu0 %v3801
  %3923 = vmatpush.msra.mxu0 %v3800
  %3924 = vmatpush.msra.mxu0 %v3799
  %3925 = vmatpush.msra.mxu0 %v3798
  %3926 = vmatpush.msra.mxu0 %v3797
  %3927 = vmatpush.msra.mxu0 %v3796
  %3928 = vmatpush.msra.mxu0 %v3795
  %3929 = vmatpush.msra.mxu0 %v3794
  %3930 = vmatpush.msra.mxu0 %v3793
  %3931 = vmatpush.msra.mxu0 %v3792
  %3932 = vmatpush.msra.mxu0 %v3791
  %3933 = vmatpush.msra.mxu0 %v3790
  %3934 = vmatmul.f32.gmra.mxu0 %v3774
  %v3935 = vpop.f32.mrf.mxu0
  %v3936 = vadd.f32 0.0, %v3935
  %3937 = vmatmul.f32.gmra.mxu0 %v3782
  %v3938 = vpop.f32.mrf.mxu0
  %v3939 = vadd.f32 0.0, %v3938
  %3940 = vdwg.mxu0
  %3941 = vmatpush.msra.mxu0 %v3821
  %3942 = vmatpush.msra.mxu0 %v3820
  %3943 = vmatpush.msra.mxu0 %v3819
  %3944 = vmatpush.msra.mxu0 %v3818
  %3945 = vmatpush.msra.mxu0 %v3817
  %3946 = vmatpush.msra.mxu0 %v3816
  %3947 = vmatpush.msra.mxu0 %v3815
  %3948 = vmatpush.msra.mxu0 %v3814
  %3949 = vmatpush.msra.mxu0 %v3813
  %3950 = vmatpush.msra.mxu0 %v3812
  %3951 = vmatpush.msra.mxu0 %v3811
  %3952 = vmatpush.msra.mxu0 %v3810
  %3953 = vmatpush.msra.mxu0 %v3809
  %3954 = vmatpush.msra.mxu0 %v3808
  %3955 = vmatpush.msra.mxu0 %v3807
  %3956 = vmatpush.msra.mxu0 %v3806
  %3957 = vmatmul.f32.gmra.mxu0 %v3775
  %v3958 = vpop.f32.mrf.mxu0
  %v3959 = vadd.f32 %v3936, %v3958
  %3960 = vmatmul.f32.gmra.mxu0 %v3783
  %v3961 = vpop.f32.mrf.mxu0
  %v3962 = vadd.f32 %v3939, %v3961
  %3963 = vdwg.mxu0
  %3964 = vmatpush.msra.mxu0 %v3837
  %3965 = vmatpush.msra.mxu0 %v3836
  %3966 = vmatpush.msra.mxu0 %v3835
  %3967 = vmatpush.msra.mxu0 %v3834
  %3968 = vmatpush.msra.mxu0 %v3833
  %3969 = vmatpush.msra.mxu0 %v3832
  %3970 = vmatpush.msra.mxu0 %v3831
  %3971 = vmatpush.msra.mxu0 %v3830
  %3972 = vmatpush.msra.mxu0 %v3829
  %3973 = vmatpush.msra.mxu0 %v3828
  %3974 = vmatpush.msra.mxu0 %v3827
  %3975 = vmatpush.msra.mxu0 %v3826
  %3976 = vmatpush.msra.mxu0 %v3825
  %3977 = vmatpush.msra.mxu0 %v3824
  %3978 = vmatpush.msra.mxu0 %v3823
  %3979 = vmatpush.msra.mxu0 %v3822
  %3980 = vmatmul.f32.gmra.mxu0 %v3776
  %v3981 = vpop.f32.mrf.mxu0
  %v3982 = vadd.f32 %v3959, %v3981
  %3983 = vmatmul.f32.gmra.mxu0 %v3784
  %v3984 = vpop.f32.mrf.mxu0
  %v3985 = vadd.f32 %v3962, %v3984
  %3986 = vdwg.mxu0
  %3987 = vmatpush.msra.mxu0 %v3853
  %3988 = vmatpush.msra.mxu0 %v3852
  %3989 = vmatpush.msra.mxu0 %v3851
  %3990 = vmatpush.msra.mxu0 %v3850
  %3991 = vmatpush.msra.mxu0 %v3849
  %3992 = vmatpush.msra.mxu0 %v3848
  %3993 = vmatpush.msra.mxu0 %v3847
  %3994 = vmatpush.msra.mxu0 %v3846
  %3995 = vmatpush.msra.mxu0 %v3845
  %3996 = vmatpush.msra.mxu0 %v3844
  %3997 = vmatpush.msra.mxu0 %v3843
  %3998 = vmatpush.msra.mxu0 %v3842
  %3999 = vmatpush.msra.mxu0 %v3841
  %4000 = vmatpush.msra.mxu0 %v3840
  %4001 = vmatpush.msra.mxu0 %v3839
  %4002 = vmatpush.msra.mxu0 %v3838
  %4003 = vmatmul.f32.gmra.mxu0 %v3777
  %v4004 = vpop.f32.mrf.mxu0
  %v4005 = vadd.f32 %v3982, %v4004
  %4006 = vmatmul.f32.gmra.mxu0 %v3785
  %v4007 = vpop.f32.mrf.mxu0
  %v4008 = vadd.f32 %v3985, %v4007
  %4009 = vdwg.mxu0
  %4010 = vmatpush.msra.mxu0 %v3869
  %4011 = vmatpush.msra.mxu0 %v3868
  %4012 = vmatpush.msra.mxu0 %v3867
  %4013 = vmatpush.msra.mxu0 %v3866
  %4014 = vmatpush.msra.mxu0 %v3865
  %4015 = vmatpush.msra.mxu0 %v3864
  %4016 = vmatpush.msra.mxu0 %v3863
  %4017 = vmatpush.msra.mxu0 %v3862
  %4018 = vmatpush.msra.mxu0 %v3861
  %4019 = vmatpush.msra.mxu0 %v3860
  %4020 = vmatpush.msra.mxu0 %v3859
  %4021 = vmatpush.msra.mxu0 %v3858
  %4022 = vmatpush.msra.mxu0 %v3857
  %4023 = vmatpush.msra.mxu0 %v3856
  %4024 = vmatpush.msra.mxu0 %v3855
  %4025 = vmatpush.msra.mxu0 %v3854
  %4026 = vmatmul.f32.gmra.mxu0 %v3778
  %v4027 = vpop.f32.mrf.mxu0
  %v4028 = vadd.f32 %v4005, %v4027
  %4029 = vmatmul.f32.gmra.mxu0 %v3786
  %v4030 = vpop.f32.mrf.mxu0
  %v4031 = vadd.f32 %v4008, %v4030
  %4032 = vdwg.mxu0
  %4033 = vmatpush.msra.mxu0 %v3885
  %4034 = vmatpush.msra.mxu0 %v3884
  %4035 = vmatpush.msra.mxu0 %v3883
  %4036 = vmatpush.msra.mxu0 %v3882
  %4037 = vmatpush.msra.mxu0 %v3881
  %4038 = vmatpush.msra.mxu0 %v3880
  %4039 = vmatpush.msra.mxu0 %v3879
  %4040 = vmatpush.msra.mxu0 %v3878
  %4041 = vmatpush.msra.mxu0 %v3877
  %4042 = vmatpush.msra.mxu0 %v3876
  %4043 = vmatpush.msra.mxu0 %v3875
  %4044 = vmatpush.msra.mxu0 %v3874
  %4045 = vmatpush.msra.mxu0 %v3873
  %4046 = vmatpush.msra.mxu0 %v3872
  %4047 = vmatpush.msra.mxu0 %v3871
  %4048 = vmatpush.msra.mxu0 %v3870
  %4049 = vmatmul.f32.gmra.mxu0 %v3779
  %v4050 = vpop.f32.mrf.mxu0
  %v4051 = vadd.f32 %v4028, %v4050
  %4052 = vmatmul.f32.gmra.mxu0 %v3787
  %v4053 = vpop.f32.mrf.mxu0
  %v4054 = vadd.f32 %v4031, %v4053
  %4055 = vdwg.mxu0
  %4056 = vmatpush.msra.mxu0 %v3901
  %4057 = vmatpush.msra.mxu0 %v3900
  %4058 = vmatpush.msra.mxu0 %v3899
  %4059 = vmatpush.msra.mxu0 %v3898
  %4060 = vmatpush.msra.mxu0 %v3897
  %4061 = vmatpush.msra.mxu0 %v3896
  %4062 = vmatpush.msra.mxu0 %v3895
  %4063 = vmatpush.msra.mxu0 %v3894
  %4064 = vmatpush.msra.mxu0 %v3893
  %4065 = vmatpush.msra.mxu0 %v3892
  %4066 = vmatpush.msra.mxu0 %v3891
  %4067 = vmatpush.msra.mxu0 %v3890
  %4068 = vmatpush.msra.mxu0 %v3889
  %4069 = vmatpush.msra.mxu0 %v3888
  %4070 = vmatpush.msra.mxu0 %v3887
  %4071 = vmatpush.msra.mxu0 %v3886
  %4072 = vmatmul.f32.gmra.mxu0 %v3780
  %v4073 = vpop.f32.mrf.mxu0
  %v4074 = vadd.f32 %v4051, %v4073
  %4075 = vmatmul.f32.gmra.mxu0 %v3788
  %v4076 = vpop.f32.mrf.mxu0
  %v4077 = vadd.f32 %v4054, %v4076
  %4078 = vdwg.mxu0
  %4079 = vmatpush.msra.mxu0 %v3917
  %4080 = vmatpush.msra.mxu0 %v3916
  %4081 = vmatpush.msra.mxu0 %v3915
  %4082 = vmatpush.msra.mxu0 %v3914
  %4083 = vmatpush.msra.mxu0 %v3913
  %4084 = vmatpush.msra.mxu0 %v3912
  %4085 = vmatpush.msra.mxu0 %v3911
  %4086 = vmatpush.msra.mxu0 %v3910
  %4087 = vmatpush.msra.mxu0 %v3909
  %4088 = vmatpush.msra.mxu0 %v3908
  %4089 = vmatpush.msra.mxu0 %v3907
  %4090 = vmatpush.msra.mxu0 %v3906
  %4091 = vmatpush.msra.mxu0 %v3905
  %4092 = vmatpush.msra.mxu0 %v3904
  %4093 = vmatpush.msra.mxu0 %v3903
  %4094 = vmatpush.msra.mxu0 %v3902
  %4095 = vmatmul.f32.gmra.mxu0 %v3781
  %v4096 = vpop.f32.mrf.mxu0
  %v4097 = vadd.f32 %v4074, %v4096
  %4098 = vmatmul.f32.gmra.mxu0 %v3789
  %v4099 = vpop.f32.mrf.mxu0
  %v4100 = vadd.f32 %v4077, %v4099
  %4101 = vdwg.mxu0
  %v4102 = vld [vmem:[%s8] sm:$0xf]
  %vm4103 = vcmask 130048
  %v4105 = vsel %vm4103, %v4102, 0
  %4107 = vmatpush.msra.mxu0 0.0
  %4108 = vmatpush.msra.mxu0 0.0
  %4109 = vmatpush.msra.mxu0 0.0
  %4110 = vmatpush.msra.mxu0 0.0
  %4111 = vmatpush.msra.mxu0 0.0
  %4112 = vmatpush.msra.mxu0 0.0
  %4113 = vmatpush.msra.mxu0 0.0
  %4114 = vmatpush.msra.mxu0 0.0
  %4115 = vmatpush.msra.mxu0 0.0
  %4116 = vmatpush.msra.mxu0 0.0
  %4117 = vmatpush.msra.mxu0 0.0
  %4118 = vmatpush.msra.mxu0 0.0
  %4119 = vmatpush.msra.mxu0 0.0
  %4120 = vmatpush.msra.mxu0 0.0
  %4121 = vmatpush.msra.mxu0 %v4100
  %4122 = vmatpush.msra.mxu0 %v4097
  %4123 = vmatmul.f32.gmra.mxu0 %v4105
  %v4124 = vpop.f32.mrf.mxu0
  %v4125 = vadd.f32 0.0, %v4124
  %4126 = vdwg.mxu0
  %v4127 = vmax.f32 %v4125, 0.0
  %v4128 = vld [vmem:[%s9] sm:$0xff]
  %v4129 = vld [vmem:[%s9 + $0x8] sm:$0xff]
  %vm4130 = vcmask 31744
  %v4132 = vsel %vm4130, %v4128, 0
  %v4135 = vsel %vm4130, %v4129, 0
  %v4138 = vsel %vm1066, %v4127, 0
  %4140 = vmatpush.msra.mxu0 0.0
  %4141 = vmatpush.msra.mxu0 0.0
  %4142 = vmatpush.msra.mxu0 0.0
  %4143 = vmatpush.msra.mxu0 0.0
  %4144 = vmatpush.msra.mxu0 0.0
  %4145 = vmatpush.msra.mxu0 0.0
  %4146 = vmatpush.msra.mxu0 0.0
  %4147 = vmatpush.msra.mxu0 0.0
  %4148 = vmatpush.msra.mxu0 0.0
  %4149 = vmatpush.msra.mxu0 0.0
  %4150 = vmatpush.msra.mxu0 0.0
  %4151 = vmatpush.msra.mxu0 0.0
  %4152 = vmatpush.msra.mxu0 0.0
  %4153 = vmatpush.msra.mxu0 0.0
  %4154 = vmatpush.msra.mxu0 0.0
  %4155 = vmatpush.msra.mxu0 %v4138
  %4156 = vmatmul.f32.gmra.mxu0 %v4132
  %v4157 = vpop.f32.mrf.mxu0
  %v4158 = vadd.f32 0.0, %v4157
  %4159 = vmatmul.f32.gmra.mxu0 %v4135
  %v4160 = vpop.f32.mrf.mxu0
  %v4161 = vadd.f32 0.0, %v4160
  %4162 = vdwg.mxu0
  %v4163 = vsub.f32 0.0, %v4158
  %v4164 = vsub.f32 0.0, %v4161
  %v4165 = vmul.f32 %v4163, 1.442695
  %v4166 = vpow.pop %v4165
  %v4167 = vmul.f32 %v4164, 1.442695
  %v4168 = vpow.pop %v4167
  %v4169 = vadd.f32 %v4166, 1.0
  %v4170 = vadd.f32 %v4168, 1.0
  %v4171 = vrcp.pop %v4169
  %v4172 = vmul.f32 %v4169, %v4171
  %v4173 = vsub.f32 1.0, %v4172
  %v4174 = vmul.f32 %v4171, %v4173
  %v4175 = vadd.f32 %v4171, %v4174
  %vm4176 = vweird.f32 %v4169
  %vm4177 = vweird.f32 %v4171
  %vm4178 = vmor %vm4176, %vm4177
  %v4179 = vsel %vm4178, %v4171, %v4175
  %v4180 = vand.u32 2147483647, %v4169
  %vm4181 = vcmp.eq.f32.partialorder %v4180, 8.507059e+37
  %v4182 = vand.u32 %v4169, 2147483648
  %v4183 = vor.u32 1.1754944e-38, %v4182
  %v4184 = vsel %vm4181, %v4183, %v4179
  %v4185 = vmul.f32 1.0, %v4184
  %v4186 = vrcp.pop %v4170
  %v4187 = vmul.f32 %v4170, %v4186
  %v4188 = vsub.f32 1.0, %v4187
  %v4189 = vmul.f32 %v4186, %v4188
  %v4190 = vadd.f32 %v4186, %v4189
  %vm4191 = vweird.f32 %v4170
  %vm4192 = vweird.f32 %v4186
  %vm4193 = vmor %vm4191, %vm4192
  %v4194 = vsel %vm4193, %v4186, %v4190
  %v4195 = vand.u32 2147483647, %v4170
  %vm4196 = vcmp.eq.f32.partialorder %v4195, 8.507059e+37
  %v4197 = vand.u32 %v4170, 2147483648
  %v4198 = vor.u32 1.1754944e-38, %v4197
  %v4199 = vsel %vm4196, %v4198, %v4194
  %v4200 = vmul.f32 1.0, %v4199
  %v4201 = vld [vmem:[%s11] sm:$0xff]
  %v4202 = vld [vmem:[%s11 + $0x8] sm:$0xff]
  %4205 = vst [vmem:[#allocation1] ss:$4 sm:$0xff] %v4201
  %s4206 = scalar_lea.vmem [#allocation1], 32
  %4207 = vst [vmem:[%s4206] ss:$4 sm:$0xff] %v4202
  %v4208 = vld.sshfl [vmem:[#allocation1] sm:$0xff pattern:$0x73625140]
  %v4209 = vld.sshfl [vmem:[#allocation1 + $0x8] sm:$0xff pattern:$0x73625140]
  %v4210 = vld.sshfl [vmem:[#allocation1 + $0x10] sm:$0xff pattern:$0x73625140]
  %v4211 = vld.sshfl [vmem:[#allocation1 + $0x18] sm:$0xff pattern:$0x73625140]
  %v4212 = vld.sshfl [vmem:[#allocation1 + $0x20] sm:$0xff pattern:$0x73625140]
  %v4213 = vld.sshfl [vmem:[#allocation1 + $0x28] sm:$0xff pattern:$0x73625140]
  %v4214 = vld.sshfl [vmem:[#allocation1 + $0x30] sm:$0xff pattern:$0x73625140]
  %v4215 = vld.sshfl [vmem:[#allocation1 + $0x38] sm:$0xff pattern:$0x73625140]
  %vm4216 = vcmask 15360
  %v4218 = vsel %vm4216, %v4185, 0
  %v4221 = vsel %vm4216, %v4200, 0
  %vm4223 = vcmask 1041408
  %v4224 = vsel %vm4223, %v4208, 0
  %v4226 = vsel %vm4223, %v4209, 0
  %v4228 = vsel %vm4223, %v4210, 0
  %v4230 = vsel %vm4223, %v4211, 0
  %v4232 = vsel %vm4223, %v4212, 0
  %v4234 = vsel %vm4223, %v4213, 0
  %v4236 = vsel %vm4223, %v4214, 0
  %v4238 = vsel %vm4223, %v4215, 0
  %4240 = vmatpush.msra.mxu0 0.0
  %4241 = vmatpush.msra.mxu0 0.0
  %4242 = vmatpush.msra.mxu0 0.0
  %4243 = vmatpush.msra.mxu0 0.0
  %4244 = vmatpush.msra.mxu0 0.0
  %4245 = vmatpush.msra.mxu0 0.0
  %4246 = vmatpush.msra.mxu0 0.0
  %4247 = vmatpush.msra.mxu0 0.0
  %4248 = vmatpush.msra.mxu0 0.0
  %4249 = vmatpush.msra.mxu0 0.0
  %4250 = vmatpush.msra.mxu0 0.0
  %4251 = vmatpush.msra.mxu0 0.0
  %4252 = vmatpush.msra.mxu0 0.0
  %4253 = vmatpush.msra.mxu0 0.0
  %4254 = vmatpush.msra.mxu0 0.0
  %4255 = vmatpush.msra.mxu0 %v4224
  %4256 = vmatmul.f32.gmra.mxu0 %v4218
  %v4257 = vpop.f32.mrf.mxu0
  %v4258 = vadd.f32 0.0, %v4257
  %4259 = vmatmul.f32.gmra.mxu0 %v4221
  %v4260 = vpop.f32.mrf.mxu0
  %v4261 = vadd.f32 0.0, %v4260
  %4262 = vdwg.mxu0
  %4263 = vmatpush.msra.mxu0 0.0
  %4264 = vmatpush.msra.mxu0 0.0
  %4265 = vmatpush.msra.mxu0 0.0
  %4266 = vmatpush.msra.mxu0 0.0
  %4267 = vmatpush.msra.mxu0 0.0
  %4268 = vmatpush.msra.mxu0 0.0
  %4269 = vmatpush.msra.mxu0 0.0
  %4270 = vmatpush.msra.mxu0 0.0
  %4271 = vmatpush.msra.mxu0 0.0
  %4272 = vmatpush.msra.mxu0 0.0
  %4273 = vmatpush.msra.mxu0 0.0
  %4274 = vmatpush.msra.mxu0 0.0
  %4275 = vmatpush.msra.mxu0 0.0
  %4276 = vmatpush.msra.mxu0 0.0
  %4277 = vmatpush.msra.mxu0 0.0
  %4278 = vmatpush.msra.mxu0 %v4226
  %4279 = vmatmul.f32.gmra.mxu0 %v4218
  %v4280 = vpop.f32.mrf.mxu0
  %v4281 = vadd.f32 0.0, %v4280
  %4282 = vmatmul.f32.gmra.mxu0 %v4221
  %v4283 = vpop.f32.mrf.mxu0
  %v4284 = vadd.f32 0.0, %v4283
  %4285 = vdwg.mxu0
  %4286 = vmatpush.msra.mxu0 0.0
  %4287 = vmatpush.msra.mxu0 0.0
  %4288 = vmatpush.msra.mxu0 0.0
  %4289 = vmatpush.msra.mxu0 0.0
  %4290 = vmatpush.msra.mxu0 0.0
  %4291 = vmatpush.msra.mxu0 0.0
  %4292 = vmatpush.msra.mxu0 0.0
  %4293 = vmatpush.msra.mxu0 0.0
  %4294 = vmatpush.msra.mxu0 0.0
  %4295 = vmatpush.msra.mxu0 0.0
  %4296 = vmatpush.msra.mxu0 0.0
  %4297 = vmatpush.msra.mxu0 0.0
  %4298 = vmatpush.msra.mxu0 0.0
  %4299 = vmatpush.msra.mxu0 0.0
  %4300 = vmatpush.msra.mxu0 0.0
  %4301 = vmatpush.msra.mxu0 %v4228
  %4302 = vmatmul.f32.gmra.mxu0 %v4218
  %v4303 = vpop.f32.mrf.mxu0
  %v4304 = vadd.f32 0.0, %v4303
  %4305 = vmatmul.f32.gmra.mxu0 %v4221
  %v4306 = vpop.f32.mrf.mxu0
  %v4307 = vadd.f32 0.0, %v4306
  %4308 = vdwg.mxu0
  %4309 = vmatpush.msra.mxu0 0.0
  %4310 = vmatpush.msra.mxu0 0.0
  %4311 = vmatpush.msra.mxu0 0.0
  %4312 = vmatpush.msra.mxu0 0.0
  %4313 = vmatpush.msra.mxu0 0.0
  %4314 = vmatpush.msra.mxu0 0.0
  %4315 = vmatpush.msra.mxu0 0.0
  %4316 = vmatpush.msra.mxu0 0.0
  %4317 = vmatpush.msra.mxu0 0.0
  %4318 = vmatpush.msra.mxu0 0.0
  %4319 = vmatpush.msra.mxu0 0.0
  %4320 = vmatpush.msra.mxu0 0.0
  %4321 = vmatpush.msra.mxu0 0.0
  %4322 = vmatpush.msra.mxu0 0.0
  %4323 = vmatpush.msra.mxu0 0.0
  %4324 = vmatpush.msra.mxu0 %v4230
  %4325 = vmatmul.f32.gmra.mxu0 %v4218
  %v4326 = vpop.f32.mrf.mxu0
  %v4327 = vadd.f32 0.0, %v4326
  %4328 = vmatmul.f32.gmra.mxu0 %v4221
  %v4329 = vpop.f32.mrf.mxu0
  %v4330 = vadd.f32 0.0, %v4329
  %4331 = vdwg.mxu0
  %4332 = vmatpush.msra.mxu0 0.0
  %4333 = vmatpush.msra.mxu0 0.0
  %4334 = vmatpush.msra.mxu0 0.0
  %4335 = vmatpush.msra.mxu0 0.0
  %4336 = vmatpush.msra.mxu0 0.0
  %4337 = vmatpush.msra.mxu0 0.0
  %4338 = vmatpush.msra.mxu0 0.0
  %4339 = vmatpush.msra.mxu0 0.0
  %4340 = vmatpush.msra.mxu0 0.0
  %4341 = vmatpush.msra.mxu0 0.0
  %4342 = vmatpush.msra.mxu0 0.0
  %4343 = vmatpush.msra.mxu0 0.0
  %4344 = vmatpush.msra.mxu0 0.0
  %4345 = vmatpush.msra.mxu0 0.0
  %4346 = vmatpush.msra.mxu0 0.0
  %4347 = vmatpush.msra.mxu0 %v4232
  %4348 = vmatmul.f32.gmra.mxu0 %v4218
  %v4349 = vpop.f32.mrf.mxu0
  %v4350 = vadd.f32 0.0, %v4349
  %4351 = vmatmul.f32.gmra.mxu0 %v4221
  %v4352 = vpop.f32.mrf.mxu0
  %v4353 = vadd.f32 0.0, %v4352
  %4354 = vdwg.mxu0
  %4355 = vmatpush.msra.mxu0 0.0
  %4356 = vmatpush.msra.mxu0 0.0
  %4357 = vmatpush.msra.mxu0 0.0
  %4358 = vmatpush.msra.mxu0 0.0
  %4359 = vmatpush.msra.mxu0 0.0
  %4360 = vmatpush.msra.mxu0 0.0
  %4361 = vmatpush.msra.mxu0 0.0
  %4362 = vmatpush.msra.mxu0 0.0
  %4363 = vmatpush.msra.mxu0 0.0
  %4364 = vmatpush.msra.mxu0 0.0
  %4365 = vmatpush.msra.mxu0 0.0
  %4366 = vmatpush.msra.mxu0 0.0
  %4367 = vmatpush.msra.mxu0 0.0
  %4368 = vmatpush.msra.mxu0 0.0
  %4369 = vmatpush.msra.mxu0 0.0
  %4370 = vmatpush.msra.mxu0 %v4234
  %4371 = vmatmul.f32.gmra.mxu0 %v4218
  %v4372 = vpop.f32.mrf.mxu0
  %v4373 = vadd.f32 0.0, %v4372
  %4374 = vmatmul.f32.gmra.mxu0 %v4221
  %v4375 = vpop.f32.mrf.mxu0
  %v4376 = vadd.f32 0.0, %v4375
  %4377 = vdwg.mxu0
  %4378 = vmatpush.msra.mxu0 0.0
  %4379 = vmatpush.msra.mxu0 0.0
  %4380 = vmatpush.msra.mxu0 0.0
  %4381 = vmatpush.msra.mxu0 0.0
  %4382 = vmatpush.msra.mxu0 0.0
  %4383 = vmatpush.msra.mxu0 0.0
  %4384 = vmatpush.msra.mxu0 0.0
  %4385 = vmatpush.msra.mxu0 0.0
  %4386 = vmatpush.msra.mxu0 0.0
  %4387 = vmatpush.msra.mxu0 0.0
  %4388 = vmatpush.msra.mxu0 0.0
  %4389 = vmatpush.msra.mxu0 0.0
  %4390 = vmatpush.msra.mxu0 0.0
  %4391 = vmatpush.msra.mxu0 0.0
  %4392 = vmatpush.msra.mxu0 0.0
  %4393 = vmatpush.msra.mxu0 %v4236
  %4394 = vmatmul.f32.gmra.mxu0 %v4218
  %v4395 = vpop.f32.mrf.mxu0
  %v4396 = vadd.f32 0.0, %v4395
  %4397 = vmatmul.f32.gmra.mxu0 %v4221
  %v4398 = vpop.f32.mrf.mxu0
  %v4399 = vadd.f32 0.0, %v4398
  %4400 = vdwg.mxu0
  %4401 = vmatpush.msra.mxu0 0.0
  %4402 = vmatpush.msra.mxu0 0.0
  %4403 = vmatpush.msra.mxu0 0.0
  %4404 = vmatpush.msra.mxu0 0.0
  %4405 = vmatpush.msra.mxu0 0.0
  %4406 = vmatpush.msra.mxu0 0.0
  %4407 = vmatpush.msra.mxu0 0.0
  %4408 = vmatpush.msra.mxu0 0.0
  %4409 = vmatpush.msra.mxu0 0.0
  %4410 = vmatpush.msra.mxu0 0.0
  %4411 = vmatpush.msra.mxu0 0.0
  %4412 = vmatpush.msra.mxu0 0.0
  %4413 = vmatpush.msra.mxu0 0.0
  %4414 = vmatpush.msra.mxu0 0.0
  %4415 = vmatpush.msra.mxu0 0.0
  %4416 = vmatpush.msra.mxu0 %v4238
  %4417 = vmatmul.f32.gmra.mxu0 %v4218
  %v4418 = vpop.f32.mrf.mxu0
  %v4419 = vadd.f32 0.0, %v4418
  %4420 = vmatmul.f32.gmra.mxu0 %v4221
  %v4421 = vpop.f32.mrf.mxu0
  %v4422 = vadd.f32 0.0, %v4421
  %4423 = vdwg.mxu0
  %v4424 = vmul.f32 %v3774, %v4258
  %v4425 = vmul.f32 %v3775, %v4281
  %v4426 = vmul.f32 %v3776, %v4304
  %v4427 = vmul.f32 %v3777, %v4327
  %v4428 = vmul.f32 %v3778, %v4350
  %v4429 = vmul.f32 %v3779, %v4373
  %v4430 = vmul.f32 %v3780, %v4396
  %v4431 = vmul.f32 %v3781, %v4419
  %v4432 = vmul.f32 %v3782, %v4261
  %v4433 = vmul.f32 %v3783, %v4284
  %v4434 = vmul.f32 %v3784, %v4307
  %v4435 = vmul.f32 %v3785, %v4330
  %v4436 = vmul.f32 %v3786, %v4353
  %v4437 = vmul.f32 %v3787, %v4376
  %v4438 = vmul.f32 %v3788, %v4399
  %v4439 = vmul.f32 %v3789, %v4422
  %v4440 = vadd.f32 %v4424, %v1683
  %v4441 = vadd.f32 %v4425, %v1684
  %v4442 = vadd.f32 %v4426, %v1685
  %v4443 = vadd.f32 %v4427, %v1686
  %v4444 = vadd.f32 %v4428, %v1687
  %v4445 = vadd.f32 %v4429, %v1688
  %v4446 = vadd.f32 %v4430, %v1689
  %v4447 = vadd.f32 %v4431, %v1690
  %v4448 = vadd.f32 %v4432, %v1691
  %v4449 = vadd.f32 %v4433, %v1692
  %v4450 = vadd.f32 %v4434, %v1693
  %v4451 = vadd.f32 %v4435, %v1694
  %v4452 = vadd.f32 %v4436, %v1695
  %v4453 = vadd.f32 %v4437, %v1696
  %v4454 = vadd.f32 %v4438, %v1697
  %v4455 = vadd.f32 %v4439, %v1698
  %v4456 = vmax.f32 %v4440, 0.0
  %v4457 = vmax.f32 %v4441, 0.0
  %v4458 = vmax.f32 %v4442, 0.0
  %v4459 = vmax.f32 %v4443, 0.0
  %v4460 = vmax.f32 %v4444, 0.0
  %v4461 = vmax.f32 %v4445, 0.0
  %v4462 = vmax.f32 %v4446, 0.0
  %v4463 = vmax.f32 %v4447, 0.0
  %v4464 = vmax.f32 %v4448, 0.0
  %v4465 = vmax.f32 %v4449, 0.0
  %v4466 = vmax.f32 %v4450, 0.0
  %v4467 = vmax.f32 %v4451, 0.0
  %v4468 = vmax.f32 %v4452, 0.0
  %v4469 = vmax.f32 %v4453, 0.0
  %v4470 = vmax.f32 %v4454, 0.0
  %v4471 = vmax.f32 %v4455, 0.0
  %4472 = vst [vmem:[%s12] sm:$0xff] %v4456
  %4473 = vst [vmem:[%s12 + $0x8] sm:$0xff] %v4457
  %4474 = vst [vmem:[%s12 + $0x10] sm:$0xff] %v4458
  %4475 = vst [vmem:[%s12 + $0x18] sm:$0xff] %v4459
  %4476 = vst [vmem:[%s12 + $0x20] sm:$0xff] %v4460
  %4477 = vst [vmem:[%s12 + $0x28] sm:$0xff] %v4461
  %4478 = vst [vmem:[%s12 + $0x30] sm:$0xff] %v4462
  %4479 = vst [vmem:[%s12 + $0x38] sm:$0xff] %v4463
  %4480 = vst [vmem:[%s12 + $0x40] sm:$0xff] %v4464
  %4481 = vst [vmem:[%s12 + $0x48] sm:$0xff] %v4465
  %4482 = vst [vmem:[%s12 + $0x50] sm:$0xff] %v4466
  %4483 = vst [vmem:[%s12 + $0x58] sm:$0xff] %v4467
  %4484 = vst [vmem:[%s12 + $0x60] sm:$0xff] %v4468
  %4485 = vst [vmem:[%s12 + $0x68] sm:$0xff] %v4469
  %4486 = vst [vmem:[%s12 + $0x70] sm:$0xff] %v4470
  %4487 = vst [vmem:[%s12 + $0x78] sm:$0xff] %v4471
  // Predicated region
  $region50: #{cifar_se_basic_block.1} parent=0 // pred_check
    _
  $region51: #{cifar_se_basic_block.1} parent=0 // pred_check_branch
    %4489 = sbr.rel (0) target = $region53
  $region52: #{cifar_se_basic_block.1} parent=0 // pred_region
    _
  $region53: #{cifar_se_basic_block.1} parent=0 // pred_fallthru
    _
  // Predicated region
  $region54: #{cifar_se_basic_block.1} parent=0 // pred_check
    _
  $region55: #{cifar_se_basic_block.1} parent=0 // pred_check_branch
    %4491 = sbr.rel (0) target = $region57
  $region56: #{cifar_se_basic_block.1} parent=0 // pred_region
    _
  $region57: #{cifar_se_basic_block.1} parent=0 // pred_fallthru
    _

</llo_original>
